<compile_context>
chip_gen: v7x
topology: tpu7x:2x2x1
jax: 0.10.0
libtpu: 0.0.40
codegen_flags: <defaults>
</compile_context>

<pallas_src>
import functools

import numpy as np
import jax
import jax.numpy as jnp
from jax.experimental import pallas as pl


def _relu_conv_fused_kernel(x_ref, w_ref, s_ref, o_ref, *, n_taps):
    """Fused ReLU + stride-2 VALID conv expressed purely as MXU matmuls.

    x_ref : [Cin, H*W]          f32  (free NCHW reshape; channels on sublanes)
    w_ref : [Cout, kh*kw*Cin]   bf16 (tap-major K; re-laid-out once at init)
    s_ref : [kh*kw, H*W, M]     bf16 (static 0/1 im2col selectors, M = Ho*Wo)
    o_ref : [Cout, M]           f32  (already NCHW-ordered; wrapper reshape only)
    """
    # ReLU (f32, v5e-safe) + bf16 cast exactly once on the dense activation.
    xa = jnp.maximum(x_ref[...], 0.0).astype(jnp.bfloat16)      # [Cin, H*W]

    # im2col via the MXU: for tap t, xa @ S_t picks the M contributing pixels
    # per channel.  Each result entry is a single bf16 value (or 0), so the
    # cast back to bf16 is exact.
    blocks = []
    for t in range(n_taps):
        p_t = jnp.dot(xa, s_ref[t], preferred_element_type=jnp.float32)  # [Cin, M]
        blocks.append(p_t.astype(jnp.bfloat16))
    # Sublane concat at Cin-multiples (8/16-aligned) -> [kh*kw*Cin, M].
    patch = jnp.concatenate(blocks, axis=0)

    # Single K = kh*kw*Cin matmul, f32 accumulation; result is already [Cout, M].
    o_ref[...] = jnp.dot(w_ref[...], patch, preferred_element_type=jnp.float32)


def prepare_conv_weight(weight_oihw):
    """One-time weight re-layout: OIHW -> [Cout, kh*kw*Cin] bf16 (tap-major K)."""
    cout, cin, kh, kw = weight_oihw.shape
    w = jnp.transpose(weight_oihw, (0, 2, 3, 1))        # [Cout, kh, kw, Cin]
    return w.reshape(cout, kh * kw * cin).astype(jnp.bfloat16)


def prepare_im2col_selectors(h, w_in, kh, kw, stride, dtype=jnp.bfloat16):
    """Static 0/1 selectors: S[t, p, m] = 1 iff input pixel p feeds output m at tap t."""
    n_oh = (h - kh) // stride + 1
    n_ow = (w_in - kw) // stride + 1
    hw, m = h * w_in, n_oh * n_ow
    sel = np.zeros((kh * kw, hw, m), np.float32)
    for i in range(kh):
        for j in range(kw):
            t = i * kw + j
            for oh in range(n_oh):
                for ow in range(n_ow):
                    p = (i + stride * oh) * w_in + (j + stride * ow)
                    sel[t, p, oh * n_ow + ow] = 1.0
    return jnp.asarray(sel, dtype=dtype)


@functools.partial(jax.jit, static_argnames=("kh", "kw", "stride"))
def relu_conv2d(x_nchw, w_ck, s_taps, *, kh=3, kw=3, stride=2):
    """relu(x) -> Conv2d(Cin, Cout, (kh,kw), stride, bias=False); NCHW in/out."""
    n, cin, h, w_in = x_nchw.shape
    assert n == 1, "kernel specialized to the module's batch=1 (fold batch into M otherwise)"
    cout, k = w_ck.shape
    assert k == kh * kw * cin
    n_taps, hw_s, m_s = s_taps.shape
    n_oh = (h - kh) // stride + 1
    n_ow = (w_in - kw) // stride + 1
    m = n_oh * n_ow
    hw = h * w_in
    assert n_taps == kh * kw and hw_s == hw and m_s == m

    # Free reshape only (no transpose): NCHW[0] is already [Cin, H*W] row-major.
    x2d = x_nchw.reshape(cin, hw)

    kernel = functools.partial(_relu_conv_fused_kernel, n_taps=kh * kw)
    flops = 2 * cout * k * m + 2 * cin * hw * m * (kh * kw)
    bytes_accessed = x2d.size * 4 + w_ck.size * 2 + s_taps.size * 2 + cout * m * 4

    out_t = pl.pallas_call(
        kernel,
        out_shape=jax.ShapeDtypeStruct((cout, m), jnp.float32),
        in_specs=[
            pl.BlockSpec((cin, hw), lambda: (0, 0)),
            pl.BlockSpec((cout, k), lambda: (0, 0)),
            pl.BlockSpec((kh * kw, hw, m), lambda: (0, 0, 0)),
        ],
        out_specs=pl.BlockSpec((cout, m), lambda: (0, 0)),
        cost_estimate=pl.CostEstimate(flops=flops, transcendentals=0,
                                      bytes_accessed=bytes_accessed),
    )(x2d, w_ck, s_taps)

    # Free reshape only (no transpose): [Cout, M] row-major == NCHW [1,Cout,Ho,Wo].
    return out_t.reshape(1, cout, n_oh, n_ow)


if __name__ == "__main__":
    key = jax.random.PRNGKey(0)
    kx, kwt = jax.random.split(key)

    # Shapes implied by the module: input [1, 192, 12, 12], weight [192, 192, 3, 3].
    x = jax.random.normal(kx, (1, 192, 12, 12), dtype=jnp.float32)
    fan_in = 192 * 3 * 3
    bound = (1.0 / fan_in) ** 0.5
    w = jax.random.uniform(kwt, (192, 192, 3, 3), dtype=jnp.float32,
                           minval=-bound, maxval=bound)

    # One-time re-layouts (hoisted out of the per-call path).
    w_ck = prepare_conv_weight(w)
    s_taps = prepare_im2col_selectors(h=12, w_in=12, kh=3, kw=3, stride=2)

    out = relu_conv2d(x, w_ck, s_taps, kh=3, kw=3, stride=2)
    out = jax.block_until_ready(out)
    assert out.shape == (1, 192, 5, 5), out.shape

    # Reference: plain-JAX f32 conv of relu(x).  Kernel feeds bf16 operands to
    # the MXU (f32 accumulation), so use a bf16-appropriate tolerance.
    ref = jax.lax.conv_general_dilated(
        jnp.maximum(x, 0.0), w, window_strides=(2, 2), padding="VALID",
        dimension_numbers=("NCHW", "OIHW", "NCHW"),
    )
    ref = jax.block_until_ready(ref)
    if not jnp.allclose(out, ref, atol=2e-2, rtol=2e-2):
        raise AssertionError("Pallas result mismatch vs reference conv")

    print("KERNEL_OK")
</pallas_src>

<mosaic_0001>
module attributes {stable_mosaic.version = 11 : i64} {
  func.func @_relu_conv_fused_kernel(%arg0: memref<192x144xf32, #tpu.memory_space<vmem>>, %arg1: memref<192x1728xbf16, #tpu.memory_space<vmem>>, %arg2: memref<9x144x25xbf16, #tpu.memory_space<vmem>>, %arg3: memref<192x25xf32, #tpu.memory_space<vmem>>) attributes {dimension_semantics = [], scalar_prefetch = 0 : i64, scratch_operands = 0 : i64, tpu.core_type = #tpu.core_type<tc>} {
    %c0 = arith.constant 0 : index
    %c0_0 = arith.constant 0 : index
    %0 = vector.load %arg0[%c0, %c0_0] : memref<192x144xf32, #tpu.memory_space<vmem>>, vector<192x144xf32>
    %cst = arith.constant 0.000000e+00 : f32
    %1 = vector.broadcast %cst : f32 to vector<192x144xf32>
    %2 = arith.maximumf %0, %1 : vector<192x144xf32>
    %3 = arith.truncf %2 : vector<192x144xf32> to vector<192x144xbf16>
    %c0_1 = arith.constant 0 : index
    %c0_2 = arith.constant 0 : index
    %c0_3 = arith.constant 0 : index
    %4 = vector.load %arg2[%c0_1, %c0_2, %c0_3] : memref<9x144x25xbf16, #tpu.memory_space<vmem>>, vector<1x144x25xbf16>
    %5 = vector.shape_cast %4 : vector<1x144x25xbf16> to vector<144x25xbf16>
    %cst_4 = arith.constant dense<0.000000e+00> : vector<192x25xf32>
    %6 = tpu.matmul %3, %5, %cst_4 {dimension_numbers = #tpu.dot_dimension_numbers<[1], [0], [0], [1], [0, 0, 1, 1], [], []>} : vector<192x144xbf16>, vector<144x25xbf16>, vector<192x25xf32> -> vector<192x25xf32>
    %7 = arith.truncf %6 : vector<192x25xf32> to vector<192x25xbf16>
    %c1 = arith.constant 1 : index
    %c0_5 = arith.constant 0 : index
    %c0_6 = arith.constant 0 : index
    %8 = vector.load %arg2[%c1, %c0_5, %c0_6] : memref<9x144x25xbf16, #tpu.memory_space<vmem>>, vector<1x144x25xbf16>
    %9 = vector.shape_cast %8 : vector<1x144x25xbf16> to vector<144x25xbf16>
    %cst_7 = arith.constant dense<0.000000e+00> : vector<192x25xf32>
    %10 = tpu.matmul %3, %9, %cst_7 {dimension_numbers = #tpu.dot_dimension_numbers<[1], [0], [0], [1], [0, 0, 1, 1], [], []>} : vector<192x144xbf16>, vector<144x25xbf16>, vector<192x25xf32> -> vector<192x25xf32>
    %11 = arith.truncf %10 : vector<192x25xf32> to vector<192x25xbf16>
    %c2 = arith.constant 2 : index
    %c0_8 = arith.constant 0 : index
    %c0_9 = arith.constant 0 : index
    %12 = vector.load %arg2[%c2, %c0_8, %c0_9] : memref<9x144x25xbf16, #tpu.memory_space<vmem>>, vector<1x144x25xbf16>
    %13 = vector.shape_cast %12 : vector<1x144x25xbf16> to vector<144x25xbf16>
    %cst_10 = arith.constant dense<0.000000e+00> : vector<192x25xf32>
    %14 = tpu.matmul %3, %13, %cst_10 {dimension_numbers = #tpu.dot_dimension_numbers<[1], [0], [0], [1], [0, 0, 1, 1], [], []>} : vector<192x144xbf16>, vector<144x25xbf16>, vector<192x25xf32> -> vector<192x25xf32>
    %15 = arith.truncf %14 : vector<192x25xf32> to vector<192x25xbf16>
    %c3 = arith.constant 3 : index
    %c0_11 = arith.constant 0 : index
    %c0_12 = arith.constant 0 : index
    %16 = vector.load %arg2[%c3, %c0_11, %c0_12] : memref<9x144x25xbf16, #tpu.memory_space<vmem>>, vector<1x144x25xbf16>
    %17 = vector.shape_cast %16 : vector<1x144x25xbf16> to vector<144x25xbf16>
    %cst_13 = arith.constant dense<0.000000e+00> : vector<192x25xf32>
    %18 = tpu.matmul %3, %17, %cst_13 {dimension_numbers = #tpu.dot_dimension_numbers<[1], [0], [0], [1], [0, 0, 1, 1], [], []>} : vector<192x144xbf16>, vector<144x25xbf16>, vector<192x25xf32> -> vector<192x25xf32>
    %19 = arith.truncf %18 : vector<192x25xf32> to vector<192x25xbf16>
    %c4 = arith.constant 4 : index
    %c0_14 = arith.constant 0 : index
    %c0_15 = arith.constant 0 : index
    %20 = vector.load %arg2[%c4, %c0_14, %c0_15] : memref<9x144x25xbf16, #tpu.memory_space<vmem>>, vector<1x144x25xbf16>
    %21 = vector.shape_cast %20 : vector<1x144x25xbf16> to vector<144x25xbf16>
    %cst_16 = arith.constant dense<0.000000e+00> : vector<192x25xf32>
    %22 = tpu.matmul %3, %21, %cst_16 {dimension_numbers = #tpu.dot_dimension_numbers<[1], [0], [0], [1], [0, 0, 1, 1], [], []>} : vector<192x144xbf16>, vector<144x25xbf16>, vector<192x25xf32> -> vector<192x25xf32>
    %23 = arith.truncf %22 : vector<192x25xf32> to vector<192x25xbf16>
    %c5 = arith.constant 5 : index
    %c0_17 = arith.constant 0 : index
    %c0_18 = arith.constant 0 : index
    %24 = vector.load %arg2[%c5, %c0_17, %c0_18] : memref<9x144x25xbf16, #tpu.memory_space<vmem>>, vector<1x144x25xbf16>
    %25 = vector.shape_cast %24 : vector<1x144x25xbf16> to vector<144x25xbf16>
    %cst_19 = arith.constant dense<0.000000e+00> : vector<192x25xf32>
    %26 = tpu.matmul %3, %25, %cst_19 {dimension_numbers = #tpu.dot_dimension_numbers<[1], [0], [0], [1], [0, 0, 1, 1], [], []>} : vector<192x144xbf16>, vector<144x25xbf16>, vector<192x25xf32> -> vector<192x25xf32>
    %27 = arith.truncf %26 : vector<192x25xf32> to vector<192x25xbf16>
    %c6 = arith.constant 6 : index
    %c0_20 = arith.constant 0 : index
    %c0_21 = arith.constant 0 : index
    %28 = vector.load %arg2[%c6, %c0_20, %c0_21] : memref<9x144x25xbf16, #tpu.memory_space<vmem>>, vector<1x144x25xbf16>
    %29 = vector.shape_cast %28 : vector<1x144x25xbf16> to vector<144x25xbf16>
    %cst_22 = arith.constant dense<0.000000e+00> : vector<192x25xf32>
    %30 = tpu.matmul %3, %29, %cst_22 {dimension_numbers = #tpu.dot_dimension_numbers<[1], [0], [0], [1], [0, 0, 1, 1], [], []>} : vector<192x144xbf16>, vector<144x25xbf16>, vector<192x25xf32> -> vector<192x25xf32>
    %31 = arith.truncf %30 : vector<192x25xf32> to vector<192x25xbf16>
    %c7 = arith.constant 7 : index
    %c0_23 = arith.constant 0 : index
    %c0_24 = arith.constant 0 : index
    %32 = vector.load %arg2[%c7, %c0_23, %c0_24] : memref<9x144x25xbf16, #tpu.memory_space<vmem>>, vector<1x144x25xbf16>
    %33 = vector.shape_cast %32 : vector<1x144x25xbf16> to vector<144x25xbf16>
    %cst_25 = arith.constant dense<0.000000e+00> : vector<192x25xf32>
    %34 = tpu.matmul %3, %33, %cst_25 {dimension_numbers = #tpu.dot_dimension_numbers<[1], [0], [0], [1], [0, 0, 1, 1], [], []>} : vector<192x144xbf16>, vector<144x25xbf16>, vector<192x25xf32> -> vector<192x25xf32>
    %35 = arith.truncf %34 : vector<192x25xf32> to vector<192x25xbf16>
    %c8 = arith.constant 8 : index
    %c0_26 = arith.constant 0 : index
    %c0_27 = arith.constant 0 : index
    %36 = vector.load %arg2[%c8, %c0_26, %c0_27] : memref<9x144x25xbf16, #tpu.memory_space<vmem>>, vector<1x144x25xbf16>
    %37 = vector.shape_cast %36 : vector<1x144x25xbf16> to vector<144x25xbf16>
    %cst_28 = arith.constant dense<0.000000e+00> : vector<192x25xf32>
    %38 = tpu.matmul %3, %37, %cst_28 {dimension_numbers = #tpu.dot_dimension_numbers<[1], [0], [0], [1], [0, 0, 1, 1], [], []>} : vector<192x144xbf16>, vector<144x25xbf16>, vector<192x25xf32> -> vector<192x25xf32>
    %39 = arith.truncf %38 : vector<192x25xf32> to vector<192x25xbf16>
    %40 = tpu.concatenate %7, %11, %15, %19, %23, %27, %31, %35, %39 in 0 : vector<192x25xbf16>, vector<192x25xbf16>, vector<192x25xbf16>, vector<192x25xbf16>, vector<192x25xbf16>, vector<192x25xbf16>, vector<192x25xbf16>, vector<192x25xbf16>, vector<192x25xbf16> -> vector<1728x25xbf16>
    %c0_29 = arith.constant 0 : index
    %c0_30 = arith.constant 0 : index
    %41 = vector.load %arg1[%c0_29, %c0_30] : memref<192x1728xbf16, #tpu.memory_space<vmem>>, vector<192x1728xbf16>
    %cst_31 = arith.constant dense<0.000000e+00> : vector<192x25xf32>
    %42 = tpu.matmul %41, %40, %cst_31 {dimension_numbers = #tpu.dot_dimension_numbers<[1], [0], [0], [1], [0, 0, 1, 1], [], []>} : vector<192x1728xbf16>, vector<1728x25xbf16>, vector<192x25xf32> -> vector<192x25xf32>
    %c0_32 = arith.constant 0 : index
    %c0_33 = arith.constant 0 : index
    %43 = vector.load %arg3[%c0_32, %c0_33] : memref<192x25xf32, #tpu.memory_space<vmem>>, vector<192x25xf32>
    tpu.vector_store %arg3[%c0_32, %c0_33], %42 {strides = array<i32>} : memref<192x25xf32, #tpu.memory_space<vmem>>, vector<192x25xf32>,
    return
  }
}

</mosaic_0001>

<llo_original>
// kernel: relu_conv2d.1
$region0: #{relu_conv2d.1}
  #allocation0 [shape = 'u32[]', space=smem, size = 0x4, offset = 0x4, fixed_abs, tag = 'smem constant byte address 0x4 - core index']
  #allocation1 [shape = 'u32[144,128]{1,0:T(1,128)}', space=vmem, size = 0x12000, scoped, tag = 'internal scratch']
  %s0 = inlined_call_operand.vmem [shape: f32[192,144], index: 0, kind: input, shape index: {}]
  %s1 = inlined_call_operand.vmem [shape: bf16[192,1728], index: 1, kind: input, shape index: {}]
  %s2 = inlined_call_operand.vmem [shape: bf16[9,144,25], index: 2, kind: input, shape index: {}]
  %s3 = inlined_call_operand.vmem [shape: f32[192,25], index: 3, kind: output, shape index: {}]
  %s4 = sld [smem:[#allocation0]]
  $region22: #{relu_conv2d.1} parent=0
    _
  %s6 = ssub.s32 1, %s4
  %s7 = scalar_select 0, %s6, %s4
  // Predicated region
  $region2: #{relu_conv2d.1} parent=0 // pred_check
    _
  $region3: #{relu_conv2d.1} parent=0 // pred_check_branch
    %9 = sbr.rel (0) target = $region5
  $region4: #{relu_conv2d.1} parent=0 // pred_region
    _
  $region5: #{relu_conv2d.1} parent=0 // pred_fallthru
    _
  // Predicated region
  $region6: #{relu_conv2d.1} parent=0 // pred_check
    _
  $region7: #{relu_conv2d.1} parent=0 // pred_check_branch
    %11 = sbr.rel (0) target = $region9
  $region8: #{relu_conv2d.1} parent=0 // pred_region
    _
  $region9: #{relu_conv2d.1} parent=0 // pred_fallthru
    _
  // Predicated region
  $region10: #{relu_conv2d.1} parent=0 // pred_check
    _
  $region11: #{relu_conv2d.1} parent=0 // pred_check_branch
    %13 = sbr.rel (0) target = $region13
  $region12: #{relu_conv2d.1} parent=0 // pred_region
    _
  $region13: #{relu_conv2d.1} parent=0 // pred_fallthru
    _
  %v15 = vld [vmem:[%s0] sm:$0xff]
  %v16 = vld [vmem:[%s0 + $0x8] sm:$0xff]
  %v17 = vld [vmem:[%s0 + $0x10] sm:$0xff]
  %v18 = vld [vmem:[%s0 + $0x18] sm:$0xff]
  %v19 = vld [vmem:[%s0 + $0x20] sm:$0xff]
  %v20 = vld [vmem:[%s0 + $0x28] sm:$0xff]
  %v21 = vld [vmem:[%s0 + $0x30] sm:$0xff]
  %v22 = vld [vmem:[%s0 + $0x38] sm:$0xff]
  %v23 = vld [vmem:[%s0 + $0x40] sm:$0xff]
  %v24 = vld [vmem:[%s0 + $0x48] sm:$0xff]
  %v25 = vld [vmem:[%s0 + $0x50] sm:$0xff]
  %v26 = vld [vmem:[%s0 + $0x58] sm:$0xff]
  %v27 = vld [vmem:[%s0 + $0x60] sm:$0xff]
  %v28 = vld [vmem:[%s0 + $0x68] sm:$0xff]
  %v29 = vld [vmem:[%s0 + $0x70] sm:$0xff]
  %v30 = vld [vmem:[%s0 + $0x78] sm:$0xff]
  %v31 = vld [vmem:[%s0 + $0x80] sm:$0xff]
  %v32 = vld [vmem:[%s0 + $0x88] sm:$0xff]
  %v33 = vld [vmem:[%s0 + $0x90] sm:$0xff]
  %v34 = vld [vmem:[%s0 + $0x98] sm:$0xff]
  %v35 = vld [vmem:[%s0 + $0xa0] sm:$0xff]
  %v36 = vld [vmem:[%s0 + $0xa8] sm:$0xff]
  %v37 = vld [vmem:[%s0 + $0xb0] sm:$0xff]
  %v38 = vld [vmem:[%s0 + $0xb8] sm:$0xff]
  %v39 = vld [vmem:[%s0 + $0xc0] sm:$0xff]
  %v40 = vld [vmem:[%s0 + $0xc8] sm:$0xff]
  %v41 = vld [vmem:[%s0 + $0xd0] sm:$0xff]
  %v42 = vld [vmem:[%s0 + $0xd8] sm:$0xff]
  %v43 = vld [vmem:[%s0 + $0xe0] sm:$0xff]
  %v44 = vld [vmem:[%s0 + $0xe8] sm:$0xff]
  %v45 = vld [vmem:[%s0 + $0xf0] sm:$0xff]
  %v46 = vld [vmem:[%s0 + $0xf8] sm:$0xff]
  %v47 = vld [vmem:[%s0 + $0x100] sm:$0xff]
  %v48 = vld [vmem:[%s0 + $0x108] sm:$0xff]
  %v49 = vld [vmem:[%s0 + $0x110] sm:$0xff]
  %v50 = vld [vmem:[%s0 + $0x118] sm:$0xff]
  %v51 = vld [vmem:[%s0 + $0x120] sm:$0xff]
  %v52 = vld [vmem:[%s0 + $0x128] sm:$0xff]
  %v53 = vld [vmem:[%s0 + $0x130] sm:$0xff]
  %v54 = vld [vmem:[%s0 + $0x138] sm:$0xff]
  %v55 = vld [vmem:[%s0 + $0x140] sm:$0xff]
  %v56 = vld [vmem:[%s0 + $0x148] sm:$0xff]
  %v57 = vld [vmem:[%s0 + $0x150] sm:$0xff]
  %v58 = vld [vmem:[%s0 + $0x158] sm:$0xff]
  %v59 = vld [vmem:[%s0 + $0x160] sm:$0xff]
  %v60 = vld [vmem:[%s0 + $0x168] sm:$0xff]
  %v61 = vld [vmem:[%s0 + $0x170] sm:$0xff]
  %v62 = vld [vmem:[%s0 + $0x178] sm:$0xff]
  %v63 = vmax.f32 %v15, 0.0
  %v64 = vmax.f32 %v16, 0.0
  %v65 = vmax.f32 %v17, 0.0
  %v66 = vmax.f32 %v18, 0.0
  %v67 = vmax.f32 %v19, 0.0
  %v68 = vmax.f32 %v20, 0.0
  %v69 = vmax.f32 %v21, 0.0
  %v70 = vmax.f32 %v22, 0.0
  %v71 = vmax.f32 %v23, 0.0
  %v72 = vmax.f32 %v24, 0.0
  %v73 = vmax.f32 %v25, 0.0
  %v74 = vmax.f32 %v26, 0.0
  %v75 = vmax.f32 %v27, 0.0
  %v76 = vmax.f32 %v28, 0.0
  %v77 = vmax.f32 %v29, 0.0
  %v78 = vmax.f32 %v30, 0.0
  %v79 = vmax.f32 %v31, 0.0
  %v80 = vmax.f32 %v32, 0.0
  %v81 = vmax.f32 %v33, 0.0
  %v82 = vmax.f32 %v34, 0.0
  %v83 = vmax.f32 %v35, 0.0
  %v84 = vmax.f32 %v36, 0.0
  %v85 = vmax.f32 %v37, 0.0
  %v86 = vmax.f32 %v38, 0.0
  %v87 = vmax.f32 %v39, 0.0
  %v88 = vmax.f32 %v40, 0.0
  %v89 = vmax.f32 %v41, 0.0
  %v90 = vmax.f32 %v42, 0.0
  %v91 = vmax.f32 %v43, 0.0
  %v92 = vmax.f32 %v44, 0.0
  %v93 = vmax.f32 %v45, 0.0
  %v94 = vmax.f32 %v46, 0.0
  %v95 = vmax.f32 %v47, 0.0
  %v96 = vmax.f32 %v48, 0.0
  %v97 = vmax.f32 %v49, 0.0
  %v98 = vmax.f32 %v50, 0.0
  %v99 = vmax.f32 %v51, 0.0
  %v100 = vmax.f32 %v52, 0.0
  %v101 = vmax.f32 %v53, 0.0
  %v102 = vmax.f32 %v54, 0.0
  %v103 = vmax.f32 %v55, 0.0
  %v104 = vmax.f32 %v56, 0.0
  %v105 = vmax.f32 %v57, 0.0
  %v106 = vmax.f32 %v58, 0.0
  %v107 = vmax.f32 %v59, 0.0
  %v108 = vmax.f32 %v60, 0.0
  %v109 = vmax.f32 %v61, 0.0
  %v110 = vmax.f32 %v62, 0.0
  %v111 = vpack.c.bf16 %v65, %v63
  %v112 = vpack.c.bf16 %v66, %v64
  %v113 = vpack.c.bf16 %v69, %v67
  %v114 = vpack.c.bf16 %v70, %v68
  %v115 = vpack.c.bf16 %v73, %v71
  %v116 = vpack.c.bf16 %v74, %v72
  %v117 = vpack.c.bf16 %v77, %v75
  %v118 = vpack.c.bf16 %v78, %v76
  %v119 = vpack.c.bf16 %v81, %v79
  %v120 = vpack.c.bf16 %v82, %v80
  %v121 = vpack.c.bf16 %v85, %v83
  %v122 = vpack.c.bf16 %v86, %v84
  %v123 = vpack.c.bf16 %v89, %v87
  %v124 = vpack.c.bf16 %v90, %v88
  %v125 = vpack.c.bf16 %v93, %v91
  %v126 = vpack.c.bf16 %v94, %v92
  %v127 = vpack.c.bf16 %v97, %v95
  %v128 = vpack.c.bf16 %v98, %v96
  %v129 = vpack.c.bf16 %v101, %v99
  %v130 = vpack.c.bf16 %v102, %v100
  %v131 = vpack.c.bf16 %v105, %v103
  %v132 = vpack.c.bf16 %v106, %v104
  %v133 = vpack.c.bf16 %v109, %v107
  %v134 = vpack.c.bf16 %v110, %v108
  %v135 = vld [vmem:[%s2] sm:$0xf]
  %v136 = vld [vmem:[%s2 + $0x4] sm:$0xf]
  %v137 = vld [vmem:[%s2 + $0x8] sm:$0xf]
  %v138 = vld [vmem:[%s2 + $0xc] sm:$0xf]
  %v139 = vld [vmem:[%s2 + $0x10] sm:$0xf]
  %v140 = vld [vmem:[%s2 + $0x14] sm:$0xf]
  %v141 = vld [vmem:[%s2 + $0x18] sm:$0xf]
  %v142 = vld [vmem:[%s2 + $0x1c] sm:$0xf]
  %v143 = vld [vmem:[%s2 + $0x20] sm:$0xf]
  %v144 = vld [vmem:[%s2 + $0x24] sm:$0xf]
  %v145 = vld [vmem:[%s2 + $0x28] sm:$0xf]
  %v146 = vld [vmem:[%s2 + $0x2c] sm:$0xf]
  %v147 = vld [vmem:[%s2 + $0x30] sm:$0xf]
  %v148 = vld [vmem:[%s2 + $0x34] sm:$0xf]
  %v149 = vld [vmem:[%s2 + $0x38] sm:$0xf]
  %v150 = vld [vmem:[%s2 + $0x3c] sm:$0xf]
  %v151 = vld [vmem:[%s2 + $0x40] sm:$0xf]
  %v152 = vld [vmem:[%s2 + $0x44] sm:$0xf]
  %v171 = vunpack.c.l.b16 %v135
  %v172 = vunpack.c.l.b16 %v136
  %v173 = vunpack.c.l.b16 %v137
  %v174 = vunpack.c.l.b16 %v138
  %v175 = vunpack.c.l.b16 %v139
  %v176 = vunpack.c.l.b16 %v140
  %v177 = vunpack.c.l.b16 %v141
  %v178 = vunpack.c.l.b16 %v142
  %v179 = vunpack.c.l.b16 %v143
  %v180 = vunpack.c.l.b16 %v144
  %v181 = vunpack.c.l.b16 %v145
  %v182 = vunpack.c.l.b16 %v146
  %v183 = vunpack.c.l.b16 %v147
  %v184 = vunpack.c.l.b16 %v148
  %v185 = vunpack.c.l.b16 %v149
  %v186 = vunpack.c.l.b16 %v150
  %v187 = vunpack.c.l.b16 %v151
  %v188 = vunpack.c.l.b16 %v152
  %v189 = vpack.c.b16 %v172, %v171
  %v190 = vpack.c.b16 %v174, %v173
  %v191 = vpack.c.b16 %v176, %v175
  %v192 = vpack.c.b16 %v178, %v177
  %v193 = vpack.c.b16 %v180, %v179
  %v194 = vpack.c.b16 %v182, %v181
  %v195 = vpack.c.b16 %v184, %v183
  %v196 = vpack.c.b16 %v186, %v185
  %v197 = vpack.c.b16 %v188, %v187
  %vm207 = vcmask 130048
  %v209 = vsel %vm207, %v112, 0
  %v212 = vsel %vm207, %v114, 0
  %v215 = vsel %vm207, %v116, 0
  %v218 = vsel %vm207, %v118, 0
  %v221 = vsel %vm207, %v120, 0
  %v224 = vsel %vm207, %v122, 0
  %v227 = vsel %vm207, %v124, 0
  %v230 = vsel %vm207, %v126, 0
  %v233 = vsel %vm207, %v128, 0
  %v236 = vsel %vm207, %v130, 0
  %v239 = vsel %vm207, %v132, 0
  %v242 = vsel %vm207, %v134, 0
  %244 = vmatprep.subr.bf16.mxu0 0
  %245 = vmatpush1.bf16.msra.mxu0 %v189
  %246 = vmatprep.subr.bf16.mxu0 0
  %247 = vmatpush1.bf16.msra.mxu0 %v190
  %248 = vmatprep.subr.bf16.mxu0 0
  %249 = vmatpush1.bf16.msra.mxu0 %v191
  %250 = vmatprep.subr.bf16.mxu0 0
  %251 = vmatpush1.bf16.msra.mxu0 %v192
  %252 = vmatprep.subr.bf16.mxu0 0
  %253 = vmatpush1.bf16.msra.mxu0 %v193
  %254 = vmatprep.subr.bf16.mxu0 0
  %255 = vmatpush1.bf16.msra.mxu0 %v194
  %256 = vmatprep.subr.bf16.mxu0 0
  %257 = vmatpush1.bf16.msra.mxu0 %v195
  %258 = vmatprep.subr.bf16.mxu0 0
  %259 = vmatpush1.bf16.msra.mxu0 %v196
  %260 = vmatprep.subr.bf16.mxu0 0
  %261 = vmatpush1.bf16.msra.mxu0 %v197
  %262 = vmatprep.subr.bf16.mxu0 0
  %263 = vmatpush1.bf16.msra.mxu0 0
  %264 = vmatprep.subr.bf16.mxu0 0
  %265 = vmatpush1.bf16.msra.mxu0 0
  %266 = vmatprep.subr.bf16.mxu0 0
  %267 = vmatpush1.bf16.msra.mxu0 0
  %268 = vmatprep.subr.bf16.mxu0 0
  %269 = vmatpush1.bf16.msra.mxu0 0
  %270 = vmatprep.subr.bf16.mxu0 0
  %271 = vmatpush1.bf16.msra.mxu0 0
  %272 = vmatprep.subr.bf16.mxu0 0
  %273 = vmatpush1.bf16.msra.mxu0 0
  %274 = vmatprep.subr.bf16.mxu0 0
  %275 = vmatpush1.bf16.msra.mxu0 0
  %276 = vmatprep.mubr.bf16.mxu0 %v209
  %277 = vmatmul.mubr.bf16.gmra.mrb[0].mxu0 %v111
  %v278 = vpop.f32.mrb[0].mxu0
  %v279 = vadd.f32 0.0, %v278
  %v280 = vpop.f32.mrb[0].mxu0
  %v281 = vpop.f32.mrb[0].mxu0
  %v282 = vadd.f32 0.0, %v281
  %v283 = vpop.f32.mrb[0].mxu0
  %284 = vmatprep.mubr.bf16.mxu0 %v212
  %285 = vmatmul.mubr.bf16.gmra.mrb[0].mxu0 %v113
  %v286 = vpop.f32.mrb[0].mxu0
  %v287 = vadd.f32 0.0, %v286
  %v288 = vpop.f32.mrb[0].mxu0
  %v289 = vpop.f32.mrb[0].mxu0
  %v290 = vadd.f32 0.0, %v289
  %v291 = vpop.f32.mrb[0].mxu0
  %292 = vmatprep.mubr.bf16.mxu0 %v215
  %293 = vmatmul.mubr.bf16.gmra.mrb[0].mxu0 %v115
  %v294 = vpop.f32.mrb[0].mxu0
  %v295 = vadd.f32 0.0, %v294
  %v296 = vpop.f32.mrb[0].mxu0
  %v297 = vpop.f32.mrb[0].mxu0
  %v298 = vadd.f32 0.0, %v297
  %v299 = vpop.f32.mrb[0].mxu0
  %300 = vmatprep.mubr.bf16.mxu0 %v218
  %301 = vmatmul.mubr.bf16.gmra.mrb[0].mxu0 %v117
  %v302 = vpop.f32.mrb[0].mxu0
  %v303 = vadd.f32 0.0, %v302
  %v304 = vpop.f32.mrb[0].mxu0
  %v305 = vpop.f32.mrb[0].mxu0
  %v306 = vadd.f32 0.0, %v305
  %v307 = vpop.f32.mrb[0].mxu0
  %308 = vmatprep.mubr.bf16.mxu0 %v221
  %309 = vmatmul.mubr.bf16.gmra.mrb[0].mxu0 %v119
  %v310 = vpop.f32.mrb[0].mxu0
  %v311 = vadd.f32 0.0, %v310
  %v312 = vpop.f32.mrb[0].mxu0
  %v313 = vpop.f32.mrb[0].mxu0
  %v314 = vadd.f32 0.0, %v313
  %v315 = vpop.f32.mrb[0].mxu0
  %316 = vmatprep.mubr.bf16.mxu0 %v224
  %317 = vmatmul.mubr.bf16.gmra.mrb[0].mxu0 %v121
  %v318 = vpop.f32.mrb[0].mxu0
  %v319 = vadd.f32 0.0, %v318
  %v320 = vpop.f32.mrb[0].mxu0
  %v321 = vpop.f32.mrb[0].mxu0
  %v322 = vadd.f32 0.0, %v321
  %v323 = vpop.f32.mrb[0].mxu0
  %324 = vmatprep.mubr.bf16.mxu0 %v227
  %325 = vmatmul.mubr.bf16.gmra.mrb[0].mxu0 %v123
  %v326 = vpop.f32.mrb[0].mxu0
  %v327 = vadd.f32 0.0, %v326
  %v328 = vpop.f32.mrb[0].mxu0
  %v329 = vpop.f32.mrb[0].mxu0
  %v330 = vadd.f32 0.0, %v329
  %v331 = vpop.f32.mrb[0].mxu0
  %332 = vmatprep.mubr.bf16.mxu0 %v230
  %333 = vmatmul.mubr.bf16.gmra.mrb[0].mxu0 %v125
  %v334 = vpop.f32.mrb[0].mxu0
  %v335 = vadd.f32 0.0, %v334
  %v336 = vpop.f32.mrb[0].mxu0
  %v337 = vpop.f32.mrb[0].mxu0
  %v338 = vadd.f32 0.0, %v337
  %v339 = vpop.f32.mrb[0].mxu0
  %340 = vmatprep.mubr.bf16.mxu0 %v233
  %341 = vmatmul.mubr.bf16.gmra.mrb[0].mxu0 %v127
  %v342 = vpop.f32.mrb[0].mxu0
  %v343 = vadd.f32 0.0, %v342
  %v344 = vpop.f32.mrb[0].mxu0
  %v345 = vpop.f32.mrb[0].mxu0
  %v346 = vadd.f32 0.0, %v345
  %v347 = vpop.f32.mrb[0].mxu0
  %348 = vmatprep.mubr.bf16.mxu0 %v236
  %349 = vmatmul.mubr.bf16.gmra.mrb[0].mxu0 %v129
  %v350 = vpop.f32.mrb[0].mxu0
  %v351 = vadd.f32 0.0, %v350
  %v352 = vpop.f32.mrb[0].mxu0
  %v353 = vpop.f32.mrb[0].mxu0
  %v354 = vadd.f32 0.0, %v353
  %v355 = vpop.f32.mrb[0].mxu0
  %356 = vmatprep.mubr.bf16.mxu0 %v239
  %357 = vmatmul.mubr.bf16.gmra.mrb[0].mxu0 %v131
  %v358 = vpop.f32.mrb[0].mxu0
  %v359 = vadd.f32 0.0, %v358
  %v360 = vpop.f32.mrb[0].mxu0
  %v361 = vpop.f32.mrb[0].mxu0
  %v362 = vadd.f32 0.0, %v361
  %v363 = vpop.f32.mrb[0].mxu0
  %364 = vmatprep.mubr.bf16.mxu0 %v242
  %365 = vmatmul.mubr.bf16.gmra.mrb[0].mxu0 %v133
  %v366 = vpop.f32.mrb[0].mxu0
  %v367 = vadd.f32 0.0, %v366
  %v368 = vpop.f32.mrb[0].mxu0
  %v369 = vpop.f32.mrb[0].mxu0
  %v370 = vadd.f32 0.0, %v369
  %v371 = vpop.f32.mrb[0].mxu0
  %372 = vdwg.mxu0
  %v373 = vpack.c.bf16 %v282, %v279
  %v374 = vpack.c.bf16 %v290, %v287
  %v375 = vpack.c.bf16 %v298, %v295
  %v376 = vpack.c.bf16 %v306, %v303
  %v377 = vpack.c.bf16 %v314, %v311
  %v378 = vpack.c.bf16 %v322, %v319
  %v379 = vpack.c.bf16 %v330, %v327
  %v380 = vpack.c.bf16 %v338, %v335
  %v381 = vpack.c.bf16 %v346, %v343
  %v382 = vpack.c.bf16 %v354, %v351
  %v383 = vpack.c.bf16 %v362, %v359
  %v384 = vpack.c.bf16 %v370, %v367
  %s385 = scalar_lea.vmem %s2, 72
  %v386 = vld [vmem:[%s385] sm:$0xf]
  %v387 = vld [vmem:[%s385 + $0x4] sm:$0xf]
  %v388 = vld [vmem:[%s385 + $0x8] sm:$0xf]
  %v389 = vld [vmem:[%s385 + $0xc] sm:$0xf]
  %v390 = vld [vmem:[%s385 + $0x10] sm:$0xf]
  %v391 = vld [vmem:[%s385 + $0x14] sm:$0xf]
  %v392 = vld [vmem:[%s385 + $0x18] sm:$0xf]
  %v393 = vld [vmem:[%s385 + $0x1c] sm:$0xf]
  %v394 = vld [vmem:[%s385 + $0x20] sm:$0xf]
  %v395 = vld [vmem:[%s385 + $0x24] sm:$0xf]
  %v396 = vld [vmem:[%s385 + $0x28] sm:$0xf]
  %v397 = vld [vmem:[%s385 + $0x2c] sm:$0xf]
  %v398 = vld [vmem:[%s385 + $0x30] sm:$0xf]
  %v399 = vld [vmem:[%s385 + $0x34] sm:$0xf]
  %v400 = vld [vmem:[%s385 + $0x38] sm:$0xf]
  %v401 = vld [vmem:[%s385 + $0x3c] sm:$0xf]
  %v402 = vld [vmem:[%s385 + $0x40] sm:$0xf]
  %v403 = vld [vmem:[%s385 + $0x44] sm:$0xf]
  %v422 = vunpack.c.l.b16 %v386
  %v423 = vunpack.c.l.b16 %v387
  %v424 = vunpack.c.l.b16 %v388
  %v425 = vunpack.c.l.b16 %v389
  %v426 = vunpack.c.l.b16 %v390
  %v427 = vunpack.c.l.b16 %v391
  %v428 = vunpack.c.l.b16 %v392
  %v429 = vunpack.c.l.b16 %v393
  %v430 = vunpack.c.l.b16 %v394
  %v431 = vunpack.c.l.b16 %v395
  %v432 = vunpack.c.l.b16 %v396
  %v433 = vunpack.c.l.b16 %v397
  %v434 = vunpack.c.l.b16 %v398
  %v435 = vunpack.c.l.b16 %v399
  %v436 = vunpack.c.l.b16 %v400
  %v437 = vunpack.c.l.b16 %v401
  %v438 = vunpack.c.l.b16 %v402
  %v439 = vunpack.c.l.b16 %v403
  %v440 = vpack.c.b16 %v423, %v422
  %v441 = vpack.c.b16 %v425, %v424
  %v442 = vpack.c.b16 %v427, %v426
  %v443 = vpack.c.b16 %v429, %v428
  %v444 = vpack.c.b16 %v431, %v430
  %v445 = vpack.c.b16 %v433, %v432
  %v446 = vpack.c.b16 %v435, %v434
  %v447 = vpack.c.b16 %v437, %v436
  %v448 = vpack.c.b16 %v439, %v438
  %458 = vmatprep.subr.bf16.mxu0 0
  %459 = vmatpush1.bf16.msra.mxu0 %v440
  %460 = vmatprep.subr.bf16.mxu0 0
  %461 = vmatpush1.bf16.msra.mxu0 %v441
  %462 = vmatprep.subr.bf16.mxu0 0
  %463 = vmatpush1.bf16.msra.mxu0 %v442
  %464 = vmatprep.subr.bf16.mxu0 0
  %465 = vmatpush1.bf16.msra.mxu0 %v443
  %466 = vmatprep.subr.bf16.mxu0 0
  %467 = vmatpush1.bf16.msra.mxu0 %v444
  %468 = vmatprep.subr.bf16.mxu0 0
  %469 = vmatpush1.bf16.msra.mxu0 %v445
  %470 = vmatprep.subr.bf16.mxu0 0
  %471 = vmatpush1.bf16.msra.mxu0 %v446
  %472 = vmatprep.subr.bf16.mxu0 0
  %473 = vmatpush1.bf16.msra.mxu0 %v447
  %474 = vmatprep.subr.bf16.mxu0 0
  %475 = vmatpush1.bf16.msra.mxu0 %v448
  %476 = vmatprep.subr.bf16.mxu0 0
  %477 = vmatpush1.bf16.msra.mxu0 0
  %478 = vmatprep.subr.bf16.mxu0 0
  %479 = vmatpush1.bf16.msra.mxu0 0
  %480 = vmatprep.subr.bf16.mxu0 0
  %481 = vmatpush1.bf16.msra.mxu0 0
  %482 = vmatprep.subr.bf16.mxu0 0
  %483 = vmatpush1.bf16.msra.mxu0 0
  %484 = vmatprep.subr.bf16.mxu0 0
  %485 = vmatpush1.bf16.msra.mxu0 0
  %486 = vmatprep.subr.bf16.mxu0 0
  %487 = vmatpush1.bf16.msra.mxu0 0
  %488 = vmatprep.subr.bf16.mxu0 0
  %489 = vmatpush1.bf16.msra.mxu0 0
  %490 = vmatprep.mubr.bf16.mxu0 %v209
  %491 = vmatmul.mubr.bf16.gmra.mrb[0].mxu0 %v111
  %v492 = vpop.f32.mrb[0].mxu0
  %v493 = vadd.f32 0.0, %v492
  %v494 = vpop.f32.mrb[0].mxu0
  %v495 = vpop.f32.mrb[0].mxu0
  %v496 = vadd.f32 0.0, %v495
  %v497 = vpop.f32.mrb[0].mxu0
  %498 = vmatprep.mubr.bf16.mxu0 %v212
  %499 = vmatmul.mubr.bf16.gmra.mrb[0].mxu0 %v113
  %v500 = vpop.f32.mrb[0].mxu0
  %v501 = vadd.f32 0.0, %v500
  %v502 = vpop.f32.mrb[0].mxu0
  %v503 = vpop.f32.mrb[0].mxu0
  %v504 = vadd.f32 0.0, %v503
  %v505 = vpop.f32.mrb[0].mxu0
  %506 = vmatprep.mubr.bf16.mxu0 %v215
  %507 = vmatmul.mubr.bf16.gmra.mrb[0].mxu0 %v115
  %v508 = vpop.f32.mrb[0].mxu0
  %v509 = vadd.f32 0.0, %v508
  %v510 = vpop.f32.mrb[0].mxu0
  %v511 = vpop.f32.mrb[0].mxu0
  %v512 = vadd.f32 0.0, %v511
  %v513 = vpop.f32.mrb[0].mxu0
  %514 = vmatprep.mubr.bf16.mxu0 %v218
  %515 = vmatmul.mubr.bf16.gmra.mrb[0].mxu0 %v117
  %v516 = vpop.f32.mrb[0].mxu0
  %v517 = vadd.f32 0.0, %v516
  %v518 = vpop.f32.mrb[0].mxu0
  %v519 = vpop.f32.mrb[0].mxu0
  %v520 = vadd.f32 0.0, %v519
  %v521 = vpop.f32.mrb[0].mxu0
  %522 = vmatprep.mubr.bf16.mxu0 %v221
  %523 = vmatmul.mubr.bf16.gmra.mrb[0].mxu0 %v119
  %v524 = vpop.f32.mrb[0].mxu0
  %v525 = vadd.f32 0.0, %v524
  %v526 = vpop.f32.mrb[0].mxu0
  %v527 = vpop.f32.mrb[0].mxu0
  %v528 = vadd.f32 0.0, %v527
  %v529 = vpop.f32.mrb[0].mxu0
  %530 = vmatprep.mubr.bf16.mxu0 %v224
  %531 = vmatmul.mubr.bf16.gmra.mrb[0].mxu0 %v121
  %v532 = vpop.f32.mrb[0].mxu0
  %v533 = vadd.f32 0.0, %v532
  %v534 = vpop.f32.mrb[0].mxu0
  %v535 = vpop.f32.mrb[0].mxu0
  %v536 = vadd.f32 0.0, %v535
  %v537 = vpop.f32.mrb[0].mxu0
  %538 = vmatprep.mubr.bf16.mxu0 %v227
  %539 = vmatmul.mubr.bf16.gmra.mrb[0].mxu0 %v123
  %v540 = vpop.f32.mrb[0].mxu0
  %v541 = vadd.f32 0.0, %v540
  %v542 = vpop.f32.mrb[0].mxu0
  %v543 = vpop.f32.mrb[0].mxu0
  %v544 = vadd.f32 0.0, %v543
  %v545 = vpop.f32.mrb[0].mxu0
  %546 = vmatprep.mubr.bf16.mxu0 %v230
  %547 = vmatmul.mubr.bf16.gmra.mrb[0].mxu0 %v125
  %v548 = vpop.f32.mrb[0].mxu0
  %v549 = vadd.f32 0.0, %v548
  %v550 = vpop.f32.mrb[0].mxu0
  %v551 = vpop.f32.mrb[0].mxu0
  %v552 = vadd.f32 0.0, %v551
  %v553 = vpop.f32.mrb[0].mxu0
  %554 = vmatprep.mubr.bf16.mxu0 %v233
  %555 = vmatmul.mubr.bf16.gmra.mrb[0].mxu0 %v127
  %v556 = vpop.f32.mrb[0].mxu0
  %v557 = vadd.f32 0.0, %v556
  %v558 = vpop.f32.mrb[0].mxu0
  %v559 = vpop.f32.mrb[0].mxu0
  %v560 = vadd.f32 0.0, %v559
  %v561 = vpop.f32.mrb[0].mxu0
  %562 = vmatprep.mubr.bf16.mxu0 %v236
  %563 = vmatmul.mubr.bf16.gmra.mrb[0].mxu0 %v129
  %v564 = vpop.f32.mrb[0].mxu0
  %v565 = vadd.f32 0.0, %v564
  %v566 = vpop.f32.mrb[0].mxu0
  %v567 = vpop.f32.mrb[0].mxu0
  %v568 = vadd.f32 0.0, %v567
  %v569 = vpop.f32.mrb[0].mxu0
  %570 = vmatprep.mubr.bf16.mxu0 %v239
  %571 = vmatmul.mubr.bf16.gmra.mrb[0].mxu0 %v131
  %v572 = vpop.f32.mrb[0].mxu0
  %v573 = vadd.f32 0.0, %v572
  %v574 = vpop.f32.mrb[0].mxu0
  %v575 = vpop.f32.mrb[0].mxu0
  %v576 = vadd.f32 0.0, %v575
  %v577 = vpop.f32.mrb[0].mxu0
  %578 = vmatprep.mubr.bf16.mxu0 %v242
  %579 = vmatmul.mubr.bf16.gmra.mrb[0].mxu0 %v133
  %v580 = vpop.f32.mrb[0].mxu0
  %v581 = vadd.f32 0.0, %v580
  %v582 = vpop.f32.mrb[0].mxu0
  %v583 = vpop.f32.mrb[0].mxu0
  %v584 = vadd.f32 0.0, %v583
  %v585 = vpop.f32.mrb[0].mxu0
  %586 = vdwg.mxu0
  %v587 = vpack.c.bf16 %v496, %v493
  %v588 = vpack.c.bf16 %v504, %v501
  %v589 = vpack.c.bf16 %v512, %v509
  %v590 = vpack.c.bf16 %v520, %v517
  %v591 = vpack.c.bf16 %v528, %v525
  %v592 = vpack.c.bf16 %v536, %v533
  %v593 = vpack.c.bf16 %v544, %v541
  %v594 = vpack.c.bf16 %v552, %v549
  %v595 = vpack.c.bf16 %v560, %v557
  %v596 = vpack.c.bf16 %v568, %v565
  %v597 = vpack.c.bf16 %v576, %v573
  %v598 = vpack.c.bf16 %v584, %v581
  %s599 = scalar_lea.vmem %s2, 144
  %v600 = vld [vmem:[%s599] sm:$0xf]
  %v601 = vld [vmem:[%s599 + $0x4] sm:$0xf]
  %v602 = vld [vmem:[%s599 + $0x8] sm:$0xf]
  %v603 = vld [vmem:[%s599 + $0xc] sm:$0xf]
  %v604 = vld [vmem:[%s599 + $0x10] sm:$0xf]
  %v605 = vld [vmem:[%s599 + $0x14] sm:$0xf]
  %v606 = vld [vmem:[%s599 + $0x18] sm:$0xf]
  %v607 = vld [vmem:[%s599 + $0x1c] sm:$0xf]
  %v608 = vld [vmem:[%s599 + $0x20] sm:$0xf]
  %v609 = vld [vmem:[%s599 + $0x24] sm:$0xf]
  %v610 = vld [vmem:[%s599 + $0x28] sm:$0xf]
  %v611 = vld [vmem:[%s599 + $0x2c] sm:$0xf]
  %v612 = vld [vmem:[%s599 + $0x30] sm:$0xf]
  %v613 = vld [vmem:[%s599 + $0x34] sm:$0xf]
  %v614 = vld [vmem:[%s599 + $0x38] sm:$0xf]
  %v615 = vld [vmem:[%s599 + $0x3c] sm:$0xf]
  %v616 = vld [vmem:[%s599 + $0x40] sm:$0xf]
  %v617 = vld [vmem:[%s599 + $0x44] sm:$0xf]
  %v636 = vunpack.c.l.b16 %v600
  %v637 = vunpack.c.l.b16 %v601
  %v638 = vunpack.c.l.b16 %v602
  %v639 = vunpack.c.l.b16 %v603
  %v640 = vunpack.c.l.b16 %v604
  %v641 = vunpack.c.l.b16 %v605
  %v642 = vunpack.c.l.b16 %v606
  %v643 = vunpack.c.l.b16 %v607
  %v644 = vunpack.c.l.b16 %v608
  %v645 = vunpack.c.l.b16 %v609
  %v646 = vunpack.c.l.b16 %v610
  %v647 = vunpack.c.l.b16 %v611
  %v648 = vunpack.c.l.b16 %v612
  %v649 = vunpack.c.l.b16 %v613
  %v650 = vunpack.c.l.b16 %v614
  %v651 = vunpack.c.l.b16 %v615
  %v652 = vunpack.c.l.b16 %v616
  %v653 = vunpack.c.l.b16 %v617
  %v654 = vpack.c.b16 %v637, %v636
  %v655 = vpack.c.b16 %v639, %v638
  %v656 = vpack.c.b16 %v641, %v640
  %v657 = vpack.c.b16 %v643, %v642
  %v658 = vpack.c.b16 %v645, %v644
  %v659 = vpack.c.b16 %v647, %v646
  %v660 = vpack.c.b16 %v649, %v648
  %v661 = vpack.c.b16 %v651, %v650
  %v662 = vpack.c.b16 %v653, %v652
  %672 = vmatprep.subr.bf16.mxu0 0
  %673 = vmatpush1.bf16.msra.mxu0 %v654
  %674 = vmatprep.subr.bf16.mxu0 0
  %675 = vmatpush1.bf16.msra.mxu0 %v655
  %676 = vmatprep.subr.bf16.mxu0 0
  %677 = vmatpush1.bf16.msra.mxu0 %v656
  %678 = vmatprep.subr.bf16.mxu0 0
  %679 = vmatpush1.bf16.msra.mxu0 %v657
  %680 = vmatprep.subr.bf16.mxu0 0
  %681 = vmatpush1.bf16.msra.mxu0 %v658
  %682 = vmatprep.subr.bf16.mxu0 0
  %683 = vmatpush1.bf16.msra.mxu0 %v659
  %684 = vmatprep.subr.bf16.mxu0 0
  %685 = vmatpush1.bf16.msra.mxu0 %v660
  %686 = vmatprep.subr.bf16.mxu0 0
  %687 = vmatpush1.bf16.msra.mxu0 %v661
  %688 = vmatprep.subr.bf16.mxu0 0
  %689 = vmatpush1.bf16.msra.mxu0 %v662
  %690 = vmatprep.subr.bf16.mxu0 0
  %691 = vmatpush1.bf16.msra.mxu0 0
  %692 = vmatprep.subr.bf16.mxu0 0
  %693 = vmatpush1.bf16.msra.mxu0 0
  %694 = vmatprep.subr.bf16.mxu0 0
  %695 = vmatpush1.bf16.msra.mxu0 0
  %696 = vmatprep.subr.bf16.mxu0 0
  %697 = vmatpush1.bf16.msra.mxu0 0
  %698 = vmatprep.subr.bf16.mxu0 0
  %699 = vmatpush1.bf16.msra.mxu0 0
  %700 = vmatprep.subr.bf16.mxu0 0
  %701 = vmatpush1.bf16.msra.mxu0 0
  %702 = vmatprep.subr.bf16.mxu0 0
  %703 = vmatpush1.bf16.msra.mxu0 0
  %704 = vmatprep.mubr.bf16.mxu0 %v209
  %705 = vmatmul.mubr.bf16.gmra.mrb[0].mxu0 %v111
  %v706 = vpop.f32.mrb[0].mxu0
  %v707 = vadd.f32 0.0, %v706
  %v708 = vpop.f32.mrb[0].mxu0
  %v709 = vpop.f32.mrb[0].mxu0
  %v710 = vadd.f32 0.0, %v709
  %v711 = vpop.f32.mrb[0].mxu0
  %712 = vmatprep.mubr.bf16.mxu0 %v212
  %713 = vmatmul.mubr.bf16.gmra.mrb[0].mxu0 %v113
  %v714 = vpop.f32.mrb[0].mxu0
  %v715 = vadd.f32 0.0, %v714
  %v716 = vpop.f32.mrb[0].mxu0
  %v717 = vpop.f32.mrb[0].mxu0
  %v718 = vadd.f32 0.0, %v717
  %v719 = vpop.f32.mrb[0].mxu0
  %720 = vmatprep.mubr.bf16.mxu0 %v215
  %721 = vmatmul.mubr.bf16.gmra.mrb[0].mxu0 %v115
  %v722 = vpop.f32.mrb[0].mxu0
  %v723 = vadd.f32 0.0, %v722
  %v724 = vpop.f32.mrb[0].mxu0
  %v725 = vpop.f32.mrb[0].mxu0
  %v726 = vadd.f32 0.0, %v725
  %v727 = vpop.f32.mrb[0].mxu0
  %728 = vmatprep.mubr.bf16.mxu0 %v218
  %729 = vmatmul.mubr.bf16.gmra.mrb[0].mxu0 %v117
  %v730 = vpop.f32.mrb[0].mxu0
  %v731 = vadd.f32 0.0, %v730
  %v732 = vpop.f32.mrb[0].mxu0
  %v733 = vpop.f32.mrb[0].mxu0
  %v734 = vadd.f32 0.0, %v733
  %v735 = vpop.f32.mrb[0].mxu0
  %736 = vmatprep.mubr.bf16.mxu0 %v221
  %737 = vmatmul.mubr.bf16.gmra.mrb[0].mxu0 %v119
  %v738 = vpop.f32.mrb[0].mxu0
  %v739 = vadd.f32 0.0, %v738
  %v740 = vpop.f32.mrb[0].mxu0
  %v741 = vpop.f32.mrb[0].mxu0
  %v742 = vadd.f32 0.0, %v741
  %v743 = vpop.f32.mrb[0].mxu0
  %744 = vmatprep.mubr.bf16.mxu0 %v224
  %745 = vmatmul.mubr.bf16.gmra.mrb[0].mxu0 %v121
  %v746 = vpop.f32.mrb[0].mxu0
  %v747 = vadd.f32 0.0, %v746
  %v748 = vpop.f32.mrb[0].mxu0
  %v749 = vpop.f32.mrb[0].mxu0
  %v750 = vadd.f32 0.0, %v749
  %v751 = vpop.f32.mrb[0].mxu0
  %752 = vmatprep.mubr.bf16.mxu0 %v227
  %753 = vmatmul.mubr.bf16.gmra.mrb[0].mxu0 %v123
  %v754 = vpop.f32.mrb[0].mxu0
  %v755 = vadd.f32 0.0, %v754
  %v756 = vpop.f32.mrb[0].mxu0
  %v757 = vpop.f32.mrb[0].mxu0
  %v758 = vadd.f32 0.0, %v757
  %v759 = vpop.f32.mrb[0].mxu0
  %760 = vmatprep.mubr.bf16.mxu0 %v230
  %761 = vmatmul.mubr.bf16.gmra.mrb[0].mxu0 %v125
  %v762 = vpop.f32.mrb[0].mxu0
  %v763 = vadd.f32 0.0, %v762
  %v764 = vpop.f32.mrb[0].mxu0
  %v765 = vpop.f32.mrb[0].mxu0
  %v766 = vadd.f32 0.0, %v765
  %v767 = vpop.f32.mrb[0].mxu0
  %768 = vmatprep.mubr.bf16.mxu0 %v233
  %769 = vmatmul.mubr.bf16.gmra.mrb[0].mxu0 %v127
  %v770 = vpop.f32.mrb[0].mxu0
  %v771 = vadd.f32 0.0, %v770
  %v772 = vpop.f32.mrb[0].mxu0
  %v773 = vpop.f32.mrb[0].mxu0
  %v774 = vadd.f32 0.0, %v773
  %v775 = vpop.f32.mrb[0].mxu0
  %776 = vmatprep.mubr.bf16.mxu0 %v236
  %777 = vmatmul.mubr.bf16.gmra.mrb[0].mxu0 %v129
  %v778 = vpop.f32.mrb[0].mxu0
  %v779 = vadd.f32 0.0, %v778
  %v780 = vpop.f32.mrb[0].mxu0
  %v781 = vpop.f32.mrb[0].mxu0
  %v782 = vadd.f32 0.0, %v781
  %v783 = vpop.f32.mrb[0].mxu0
  %784 = vmatprep.mubr.bf16.mxu0 %v239
  %785 = vmatmul.mubr.bf16.gmra.mrb[0].mxu0 %v131
  %v786 = vpop.f32.mrb[0].mxu0
  %v787 = vadd.f32 0.0, %v786
  %v788 = vpop.f32.mrb[0].mxu0
  %v789 = vpop.f32.mrb[0].mxu0
  %v790 = vadd.f32 0.0, %v789
  %v791 = vpop.f32.mrb[0].mxu0
  %792 = vmatprep.mubr.bf16.mxu0 %v242
  %793 = vmatmul.mubr.bf16.gmra.mrb[0].mxu0 %v133
  %v794 = vpop.f32.mrb[0].mxu0
  %v795 = vadd.f32 0.0, %v794
  %v796 = vpop.f32.mrb[0].mxu0
  %v797 = vpop.f32.mrb[0].mxu0
  %v798 = vadd.f32 0.0, %v797
  %v799 = vpop.f32.mrb[0].mxu0
  %800 = vdwg.mxu0
  %v801 = vpack.c.bf16 %v710, %v707
  %v802 = vpack.c.bf16 %v718, %v715
  %v803 = vpack.c.bf16 %v726, %v723
  %v804 = vpack.c.bf16 %v734, %v731
  %v805 = vpack.c.bf16 %v742, %v739
  %v806 = vpack.c.bf16 %v750, %v747
  %v807 = vpack.c.bf16 %v758, %v755
  %v808 = vpack.c.bf16 %v766, %v763
  %v809 = vpack.c.bf16 %v774, %v771
  %v810 = vpack.c.bf16 %v782, %v779
  %v811 = vpack.c.bf16 %v790, %v787
  %v812 = vpack.c.bf16 %v798, %v795
  %s813 = scalar_lea.vmem %s2, 216
  %v814 = vld [vmem:[%s813] sm:$0xf]
  %v815 = vld [vmem:[%s813 + $0x4] sm:$0xf]
  %v816 = vld [vmem:[%s813 + $0x8] sm:$0xf]
  %v817 = vld [vmem:[%s813 + $0xc] sm:$0xf]
  %v818 = vld [vmem:[%s813 + $0x10] sm:$0xf]
  %v819 = vld [vmem:[%s813 + $0x14] sm:$0xf]
  %v820 = vld [vmem:[%s813 + $0x18] sm:$0xf]
  %v821 = vld [vmem:[%s813 + $0x1c] sm:$0xf]
  %v822 = vld [vmem:[%s813 + $0x20] sm:$0xf]
  %v823 = vld [vmem:[%s813 + $0x24] sm:$0xf]
  %v824 = vld [vmem:[%s813 + $0x28] sm:$0xf]
  %v825 = vld [vmem:[%s813 + $0x2c] sm:$0xf]
  %v826 = vld [vmem:[%s813 + $0x30] sm:$0xf]
  %v827 = vld [vmem:[%s813 + $0x34] sm:$0xf]
  %v828 = vld [vmem:[%s813 + $0x38] sm:$0xf]
  %v829 = vld [vmem:[%s813 + $0x3c] sm:$0xf]
  %v830 = vld [vmem:[%s813 + $0x40] sm:$0xf]
  %v831 = vld [vmem:[%s813 + $0x44] sm:$0xf]
  %v850 = vunpack.c.l.b16 %v814
  %v851 = vunpack.c.l.b16 %v815
  %v852 = vunpack.c.l.b16 %v816
  %v853 = vunpack.c.l.b16 %v817
  %v854 = vunpack.c.l.b16 %v818
  %v855 = vunpack.c.l.b16 %v819
  %v856 = vunpack.c.l.b16 %v820
  %v857 = vunpack.c.l.b16 %v821
  %v858 = vunpack.c.l.b16 %v822
  %v859 = vunpack.c.l.b16 %v823
  %v860 = vunpack.c.l.b16 %v824
  %v861 = vunpack.c.l.b16 %v825
  %v862 = vunpack.c.l.b16 %v826
  %v863 = vunpack.c.l.b16 %v827
  %v864 = vunpack.c.l.b16 %v828
  %v865 = vunpack.c.l.b16 %v829
  %v866 = vunpack.c.l.b16 %v830
  %v867 = vunpack.c.l.b16 %v831
  %v868 = vpack.c.b16 %v851, %v850
  %v869 = vpack.c.b16 %v853, %v852
  %v870 = vpack.c.b16 %v855, %v854
  %v871 = vpack.c.b16 %v857, %v856
  %v872 = vpack.c.b16 %v859, %v858
  %v873 = vpack.c.b16 %v861, %v860
  %v874 = vpack.c.b16 %v863, %v862
  %v875 = vpack.c.b16 %v865, %v864
  %v876 = vpack.c.b16 %v867, %v866
  %886 = vmatprep.subr.bf16.mxu0 0
  %887 = vmatpush1.bf16.msra.mxu0 %v868
  %888 = vmatprep.subr.bf16.mxu0 0
  %889 = vmatpush1.bf16.msra.mxu0 %v869
  %890 = vmatprep.subr.bf16.mxu0 0
  %891 = vmatpush1.bf16.msra.mxu0 %v870
  %892 = vmatprep.subr.bf16.mxu0 0
  %893 = vmatpush1.bf16.msra.mxu0 %v871
  %894 = vmatprep.subr.bf16.mxu0 0
  %895 = vmatpush1.bf16.msra.mxu0 %v872
  %896 = vmatprep.subr.bf16.mxu0 0
  %897 = vmatpush1.bf16.msra.mxu0 %v873
  %898 = vmatprep.subr.bf16.mxu0 0
  %899 = vmatpush1.bf16.msra.mxu0 %v874
  %900 = vmatprep.subr.bf16.mxu0 0
  %901 = vmatpush1.bf16.msra.mxu0 %v875
  %902 = vmatprep.subr.bf16.mxu0 0
  %903 = vmatpush1.bf16.msra.mxu0 %v876
  %904 = vmatprep.subr.bf16.mxu0 0
  %905 = vmatpush1.bf16.msra.mxu0 0
  %906 = vmatprep.subr.bf16.mxu0 0
  %907 = vmatpush1.bf16.msra.mxu0 0
  %908 = vmatprep.subr.bf16.mxu0 0
  %909 = vmatpush1.bf16.msra.mxu0 0
  %910 = vmatprep.subr.bf16.mxu0 0
  %911 = vmatpush1.bf16.msra.mxu0 0
  %912 = vmatprep.subr.bf16.mxu0 0
  %913 = vmatpush1.bf16.msra.mxu0 0
  %914 = vmatprep.subr.bf16.mxu0 0
  %915 = vmatpush1.bf16.msra.mxu0 0
  %916 = vmatprep.subr.bf16.mxu0 0
  %917 = vmatpush1.bf16.msra.mxu0 0
  %918 = vmatprep.mubr.bf16.mxu0 %v209
  %919 = vmatmul.mubr.bf16.gmra.mrb[0].mxu0 %v111
  %v920 = vpop.f32.mrb[0].mxu0
  %v921 = vadd.f32 0.0, %v920
  %v922 = vpop.f32.mrb[0].mxu0
  %v923 = vpop.f32.mrb[0].mxu0
  %v924 = vadd.f32 0.0, %v923
  %v925 = vpop.f32.mrb[0].mxu0
  %926 = vmatprep.mubr.bf16.mxu0 %v212
  %927 = vmatmul.mubr.bf16.gmra.mrb[0].mxu0 %v113
  %v928 = vpop.f32.mrb[0].mxu0
  %v929 = vadd.f32 0.0, %v928
  %v930 = vpop.f32.mrb[0].mxu0
  %v931 = vpop.f32.mrb[0].mxu0
  %v932 = vadd.f32 0.0, %v931
  %v933 = vpop.f32.mrb[0].mxu0
  %934 = vmatprep.mubr.bf16.mxu0 %v215
  %935 = vmatmul.mubr.bf16.gmra.mrb[0].mxu0 %v115
  %v936 = vpop.f32.mrb[0].mxu0
  %v937 = vadd.f32 0.0, %v936
  %v938 = vpop.f32.mrb[0].mxu0
  %v939 = vpop.f32.mrb[0].mxu0
  %v940 = vadd.f32 0.0, %v939
  %v941 = vpop.f32.mrb[0].mxu0
  %942 = vmatprep.mubr.bf16.mxu0 %v218
  %943 = vmatmul.mubr.bf16.gmra.mrb[0].mxu0 %v117
  %v944 = vpop.f32.mrb[0].mxu0
  %v945 = vadd.f32 0.0, %v944
  %v946 = vpop.f32.mrb[0].mxu0
  %v947 = vpop.f32.mrb[0].mxu0
  %v948 = vadd.f32 0.0, %v947
  %v949 = vpop.f32.mrb[0].mxu0
  %950 = vmatprep.mubr.bf16.mxu0 %v221
  %951 = vmatmul.mubr.bf16.gmra.mrb[0].mxu0 %v119
  %v952 = vpop.f32.mrb[0].mxu0
  %v953 = vadd.f32 0.0, %v952
  %v954 = vpop.f32.mrb[0].mxu0
  %v955 = vpop.f32.mrb[0].mxu0
  %v956 = vadd.f32 0.0, %v955
  %v957 = vpop.f32.mrb[0].mxu0
  %958 = vmatprep.mubr.bf16.mxu0 %v224
  %959 = vmatmul.mubr.bf16.gmra.mrb[0].mxu0 %v121
  %v960 = vpop.f32.mrb[0].mxu0
  %v961 = vadd.f32 0.0, %v960
  %v962 = vpop.f32.mrb[0].mxu0
  %v963 = vpop.f32.mrb[0].mxu0
  %v964 = vadd.f32 0.0, %v963
  %v965 = vpop.f32.mrb[0].mxu0
  %966 = vmatprep.mubr.bf16.mxu0 %v227
  %967 = vmatmul.mubr.bf16.gmra.mrb[0].mxu0 %v123
  %v968 = vpop.f32.mrb[0].mxu0
  %v969 = vadd.f32 0.0, %v968
  %v970 = vpop.f32.mrb[0].mxu0
  %v971 = vpop.f32.mrb[0].mxu0
  %v972 = vadd.f32 0.0, %v971
  %v973 = vpop.f32.mrb[0].mxu0
  %974 = vmatprep.mubr.bf16.mxu0 %v230
  %975 = vmatmul.mubr.bf16.gmra.mrb[0].mxu0 %v125
  %v976 = vpop.f32.mrb[0].mxu0
  %v977 = vadd.f32 0.0, %v976
  %v978 = vpop.f32.mrb[0].mxu0
  %v979 = vpop.f32.mrb[0].mxu0
  %v980 = vadd.f32 0.0, %v979
  %v981 = vpop.f32.mrb[0].mxu0
  %982 = vmatprep.mubr.bf16.mxu0 %v233
  %983 = vmatmul.mubr.bf16.gmra.mrb[0].mxu0 %v127
  %v984 = vpop.f32.mrb[0].mxu0
  %v985 = vadd.f32 0.0, %v984
  %v986 = vpop.f32.mrb[0].mxu0
  %v987 = vpop.f32.mrb[0].mxu0
  %v988 = vadd.f32 0.0, %v987
  %v989 = vpop.f32.mrb[0].mxu0
  %990 = vmatprep.mubr.bf16.mxu0 %v236
  %991 = vmatmul.mubr.bf16.gmra.mrb[0].mxu0 %v129
  %v992 = vpop.f32.mrb[0].mxu0
  %v993 = vadd.f32 0.0, %v992
  %v994 = vpop.f32.mrb[0].mxu0
  %v995 = vpop.f32.mrb[0].mxu0
  %v996 = vadd.f32 0.0, %v995
  %v997 = vpop.f32.mrb[0].mxu0
  %998 = vmatprep.mubr.bf16.mxu0 %v239
  %999 = vmatmul.mubr.bf16.gmra.mrb[0].mxu0 %v131
  %v1000 = vpop.f32.mrb[0].mxu0
  %v1001 = vadd.f32 0.0, %v1000
  %v1002 = vpop.f32.mrb[0].mxu0
  %v1003 = vpop.f32.mrb[0].mxu0
  %v1004 = vadd.f32 0.0, %v1003
  %v1005 = vpop.f32.mrb[0].mxu0
  %1006 = vmatprep.mubr.bf16.mxu0 %v242
  %1007 = vmatmul.mubr.bf16.gmra.mrb[0].mxu0 %v133
  %v1008 = vpop.f32.mrb[0].mxu0
  %v1009 = vadd.f32 0.0, %v1008
  %v1010 = vpop.f32.mrb[0].mxu0
  %v1011 = vpop.f32.mrb[0].mxu0
  %v1012 = vadd.f32 0.0, %v1011
  %v1013 = vpop.f32.mrb[0].mxu0
  %1014 = vdwg.mxu0
  %v1015 = vpack.c.bf16 %v924, %v921
  %v1016 = vpack.c.bf16 %v932, %v929
  %v1017 = vpack.c.bf16 %v940, %v937
  %v1018 = vpack.c.bf16 %v948, %v945
  %v1019 = vpack.c.bf16 %v956, %v953
  %v1020 = vpack.c.bf16 %v964, %v961
  %v1021 = vpack.c.bf16 %v972, %v969
  %v1022 = vpack.c.bf16 %v980, %v977
  %v1023 = vpack.c.bf16 %v988, %v985
  %v1024 = vpack.c.bf16 %v996, %v993
  %v1025 = vpack.c.bf16 %v1004, %v1001
  %v1026 = vpack.c.bf16 %v1012, %v1009
  %s1027 = scalar_lea.vmem %s2, 288
  %v1028 = vld [vmem:[%s1027] sm:$0xf]
  %v1029 = vld [vmem:[%s1027 + $0x4] sm:$0xf]
  %v1030 = vld [vmem:[%s1027 + $0x8] sm:$0xf]
  %v1031 = vld [vmem:[%s1027 + $0xc] sm:$0xf]
  %v1032 = vld [vmem:[%s1027 + $0x10] sm:$0xf]
  %v1033 = vld [vmem:[%s1027 + $0x14] sm:$0xf]
  %v1034 = vld [vmem:[%s1027 + $0x18] sm:$0xf]
  %v1035 = vld [vmem:[%s1027 + $0x1c] sm:$0xf]
  %v1036 = vld [vmem:[%s1027 + $0x20] sm:$0xf]
  %v1037 = vld [vmem:[%s1027 + $0x24] sm:$0xf]
  %v1038 = vld [vmem:[%s1027 + $0x28] sm:$0xf]
  %v1039 = vld [vmem:[%s1027 + $0x2c] sm:$0xf]
  %v1040 = vld [vmem:[%s1027 + $0x30] sm:$0xf]
  %v1041 = vld [vmem:[%s1027 + $0x34] sm:$0xf]
  %v1042 = vld [vmem:[%s1027 + $0x38] sm:$0xf]
  %v1043 = vld [vmem:[%s1027 + $0x3c] sm:$0xf]
  %v1044 = vld [vmem:[%s1027 + $0x40] sm:$0xf]
  %v1045 = vld [vmem:[%s1027 + $0x44] sm:$0xf]
  %v1064 = vunpack.c.l.b16 %v1028
  %v1065 = vunpack.c.l.b16 %v1029
  %v1066 = vunpack.c.l.b16 %v1030
  %v1067 = vunpack.c.l.b16 %v1031
  %v1068 = vunpack.c.l.b16 %v1032
  %v1069 = vunpack.c.l.b16 %v1033
  %v1070 = vunpack.c.l.b16 %v1034
  %v1071 = vunpack.c.l.b16 %v1035
  %v1072 = vunpack.c.l.b16 %v1036
  %v1073 = vunpack.c.l.b16 %v1037
  %v1074 = vunpack.c.l.b16 %v1038
  %v1075 = vunpack.c.l.b16 %v1039
  %v1076 = vunpack.c.l.b16 %v1040
  %v1077 = vunpack.c.l.b16 %v1041
  %v1078 = vunpack.c.l.b16 %v1042
  %v1079 = vunpack.c.l.b16 %v1043
  %v1080 = vunpack.c.l.b16 %v1044
  %v1081 = vunpack.c.l.b16 %v1045
  %v1082 = vpack.c.b16 %v1065, %v1064
  %v1083 = vpack.c.b16 %v1067, %v1066
  %v1084 = vpack.c.b16 %v1069, %v1068
  %v1085 = vpack.c.b16 %v1071, %v1070
  %v1086 = vpack.c.b16 %v1073, %v1072
  %v1087 = vpack.c.b16 %v1075, %v1074
  %v1088 = vpack.c.b16 %v1077, %v1076
  %v1089 = vpack.c.b16 %v1079, %v1078
  %v1090 = vpack.c.b16 %v1081, %v1080
  %1100 = vmatprep.subr.bf16.mxu0 0
  %1101 = vmatpush1.bf16.msra.mxu0 %v1082
  %1102 = vmatprep.subr.bf16.mxu0 0
  %1103 = vmatpush1.bf16.msra.mxu0 %v1083
  %1104 = vmatprep.subr.bf16.mxu0 0
  %1105 = vmatpush1.bf16.msra.mxu0 %v1084
  %1106 = vmatprep.subr.bf16.mxu0 0
  %1107 = vmatpush1.bf16.msra.mxu0 %v1085
  %1108 = vmatprep.subr.bf16.mxu0 0
  %1109 = vmatpush1.bf16.msra.mxu0 %v1086
  %1110 = vmatprep.subr.bf16.mxu0 0
  %1111 = vmatpush1.bf16.msra.mxu0 %v1087
  %1112 = vmatprep.subr.bf16.mxu0 0
  %1113 = vmatpush1.bf16.msra.mxu0 %v1088
  %1114 = vmatprep.subr.bf16.mxu0 0
  %1115 = vmatpush1.bf16.msra.mxu0 %v1089
  %1116 = vmatprep.subr.bf16.mxu0 0
  %1117 = vmatpush1.bf16.msra.mxu0 %v1090
  %1118 = vmatprep.subr.bf16.mxu0 0
  %1119 = vmatpush1.bf16.msra.mxu0 0
  %1120 = vmatprep.subr.bf16.mxu0 0
  %1121 = vmatpush1.bf16.msra.mxu0 0
  %1122 = vmatprep.subr.bf16.mxu0 0
  %1123 = vmatpush1.bf16.msra.mxu0 0
  %1124 = vmatprep.subr.bf16.mxu0 0
  %1125 = vmatpush1.bf16.msra.mxu0 0
  %1126 = vmatprep.subr.bf16.mxu0 0
  %1127 = vmatpush1.bf16.msra.mxu0 0
  %1128 = vmatprep.subr.bf16.mxu0 0
  %1129 = vmatpush1.bf16.msra.mxu0 0
  %1130 = vmatprep.subr.bf16.mxu0 0
  %1131 = vmatpush1.bf16.msra.mxu0 0
  %1132 = vmatprep.mubr.bf16.mxu0 %v209
  %1133 = vmatmul.mubr.bf16.gmra.mrb[0].mxu0 %v111
  %v1134 = vpop.f32.mrb[0].mxu0
  %v1135 = vadd.f32 0.0, %v1134
  %v1136 = vpop.f32.mrb[0].mxu0
  %v1137 = vpop.f32.mrb[0].mxu0
  %v1138 = vadd.f32 0.0, %v1137
  %v1139 = vpop.f32.mrb[0].mxu0
  %1140 = vmatprep.mubr.bf16.mxu0 %v212
  %1141 = vmatmul.mubr.bf16.gmra.mrb[0].mxu0 %v113
  %v1142 = vpop.f32.mrb[0].mxu0
  %v1143 = vadd.f32 0.0, %v1142
  %v1144 = vpop.f32.mrb[0].mxu0
  %v1145 = vpop.f32.mrb[0].mxu0
  %v1146 = vadd.f32 0.0, %v1145
  %v1147 = vpop.f32.mrb[0].mxu0
  %1148 = vmatprep.mubr.bf16.mxu0 %v215
  %1149 = vmatmul.mubr.bf16.gmra.mrb[0].mxu0 %v115
  %v1150 = vpop.f32.mrb[0].mxu0
  %v1151 = vadd.f32 0.0, %v1150
  %v1152 = vpop.f32.mrb[0].mxu0
  %v1153 = vpop.f32.mrb[0].mxu0
  %v1154 = vadd.f32 0.0, %v1153
  %v1155 = vpop.f32.mrb[0].mxu0
  %1156 = vmatprep.mubr.bf16.mxu0 %v218
  %1157 = vmatmul.mubr.bf16.gmra.mrb[0].mxu0 %v117
  %v1158 = vpop.f32.mrb[0].mxu0
  %v1159 = vadd.f32 0.0, %v1158
  %v1160 = vpop.f32.mrb[0].mxu0
  %v1161 = vpop.f32.mrb[0].mxu0
  %v1162 = vadd.f32 0.0, %v1161
  %v1163 = vpop.f32.mrb[0].mxu0
  %1164 = vmatprep.mubr.bf16.mxu0 %v221
  %1165 = vmatmul.mubr.bf16.gmra.mrb[0].mxu0 %v119
  %v1166 = vpop.f32.mrb[0].mxu0
  %v1167 = vadd.f32 0.0, %v1166
  %v1168 = vpop.f32.mrb[0].mxu0
  %v1169 = vpop.f32.mrb[0].mxu0
  %v1170 = vadd.f32 0.0, %v1169
  %v1171 = vpop.f32.mrb[0].mxu0
  %1172 = vmatprep.mubr.bf16.mxu0 %v224
  %1173 = vmatmul.mubr.bf16.gmra.mrb[0].mxu0 %v121
  %v1174 = vpop.f32.mrb[0].mxu0
  %v1175 = vadd.f32 0.0, %v1174
  %v1176 = vpop.f32.mrb[0].mxu0
  %v1177 = vpop.f32.mrb[0].mxu0
  %v1178 = vadd.f32 0.0, %v1177
  %v1179 = vpop.f32.mrb[0].mxu0
  %1180 = vmatprep.mubr.bf16.mxu0 %v227
  %1181 = vmatmul.mubr.bf16.gmra.mrb[0].mxu0 %v123
  %v1182 = vpop.f32.mrb[0].mxu0
  %v1183 = vadd.f32 0.0, %v1182
  %v1184 = vpop.f32.mrb[0].mxu0
  %v1185 = vpop.f32.mrb[0].mxu0
  %v1186 = vadd.f32 0.0, %v1185
  %v1187 = vpop.f32.mrb[0].mxu0
  %1188 = vmatprep.mubr.bf16.mxu0 %v230
  %1189 = vmatmul.mubr.bf16.gmra.mrb[0].mxu0 %v125
  %v1190 = vpop.f32.mrb[0].mxu0
  %v1191 = vadd.f32 0.0, %v1190
  %v1192 = vpop.f32.mrb[0].mxu0
  %v1193 = vpop.f32.mrb[0].mxu0
  %v1194 = vadd.f32 0.0, %v1193
  %v1195 = vpop.f32.mrb[0].mxu0
  %1196 = vmatprep.mubr.bf16.mxu0 %v233
  %1197 = vmatmul.mubr.bf16.gmra.mrb[0].mxu0 %v127
  %v1198 = vpop.f32.mrb[0].mxu0
  %v1199 = vadd.f32 0.0, %v1198
  %v1200 = vpop.f32.mrb[0].mxu0
  %v1201 = vpop.f32.mrb[0].mxu0
  %v1202 = vadd.f32 0.0, %v1201
  %v1203 = vpop.f32.mrb[0].mxu0
  %1204 = vmatprep.mubr.bf16.mxu0 %v236
  %1205 = vmatmul.mubr.bf16.gmra.mrb[0].mxu0 %v129
  %v1206 = vpop.f32.mrb[0].mxu0
  %v1207 = vadd.f32 0.0, %v1206
  %v1208 = vpop.f32.mrb[0].mxu0
  %v1209 = vpop.f32.mrb[0].mxu0
  %v1210 = vadd.f32 0.0, %v1209
  %v1211 = vpop.f32.mrb[0].mxu0
  %1212 = vmatprep.mubr.bf16.mxu0 %v239
  %1213 = vmatmul.mubr.bf16.gmra.mrb[0].mxu0 %v131
  %v1214 = vpop.f32.mrb[0].mxu0
  %v1215 = vadd.f32 0.0, %v1214
  %v1216 = vpop.f32.mrb[0].mxu0
  %v1217 = vpop.f32.mrb[0].mxu0
  %v1218 = vadd.f32 0.0, %v1217
  %v1219 = vpop.f32.mrb[0].mxu0
  %1220 = vmatprep.mubr.bf16.mxu0 %v242
  %1221 = vmatmul.mubr.bf16.gmra.mrb[0].mxu0 %v133
  %v1222 = vpop.f32.mrb[0].mxu0
  %v1223 = vadd.f32 0.0, %v1222
  %v1224 = vpop.f32.mrb[0].mxu0
  %v1225 = vpop.f32.mrb[0].mxu0
  %v1226 = vadd.f32 0.0, %v1225
  %v1227 = vpop.f32.mrb[0].mxu0
  %1228 = vdwg.mxu0
  %v1229 = vpack.c.bf16 %v1138, %v1135
  %v1230 = vpack.c.bf16 %v1146, %v1143
  %v1231 = vpack.c.bf16 %v1154, %v1151
  %v1232 = vpack.c.bf16 %v1162, %v1159
  %v1233 = vpack.c.bf16 %v1170, %v1167
  %v1234 = vpack.c.bf16 %v1178, %v1175
  %v1235 = vpack.c.bf16 %v1186, %v1183
  %v1236 = vpack.c.bf16 %v1194, %v1191
  %v1237 = vpack.c.bf16 %v1202, %v1199
  %v1238 = vpack.c.bf16 %v1210, %v1207
  %v1239 = vpack.c.bf16 %v1218, %v1215
  %v1240 = vpack.c.bf16 %v1226, %v1223
  %s1241 = scalar_lea.vmem %s2, 360
  %v1242 = vld [vmem:[%s1241] sm:$0xf]
  %v1243 = vld [vmem:[%s1241 + $0x4] sm:$0xf]
  %v1244 = vld [vmem:[%s1241 + $0x8] sm:$0xf]
  %v1245 = vld [vmem:[%s1241 + $0xc] sm:$0xf]
  %v1246 = vld [vmem:[%s1241 + $0x10] sm:$0xf]
  %v1247 = vld [vmem:[%s1241 + $0x14] sm:$0xf]
  %v1248 = vld [vmem:[%s1241 + $0x18] sm:$0xf]
  %v1249 = vld [vmem:[%s1241 + $0x1c] sm:$0xf]
  %v1250 = vld [vmem:[%s1241 + $0x20] sm:$0xf]
  %v1251 = vld [vmem:[%s1241 + $0x24] sm:$0xf]
  %v1252 = vld [vmem:[%s1241 + $0x28] sm:$0xf]
  %v1253 = vld [vmem:[%s1241 + $0x2c] sm:$0xf]
  %v1254 = vld [vmem:[%s1241 + $0x30] sm:$0xf]
  %v1255 = vld [vmem:[%s1241 + $0x34] sm:$0xf]
  %v1256 = vld [vmem:[%s1241 + $0x38] sm:$0xf]
  %v1257 = vld [vmem:[%s1241 + $0x3c] sm:$0xf]
  %v1258 = vld [vmem:[%s1241 + $0x40] sm:$0xf]
  %v1259 = vld [vmem:[%s1241 + $0x44] sm:$0xf]
  %v1278 = vunpack.c.l.b16 %v1242
  %v1279 = vunpack.c.l.b16 %v1243
  %v1280 = vunpack.c.l.b16 %v1244
  %v1281 = vunpack.c.l.b16 %v1245
  %v1282 = vunpack.c.l.b16 %v1246
  %v1283 = vunpack.c.l.b16 %v1247
  %v1284 = vunpack.c.l.b16 %v1248
  %v1285 = vunpack.c.l.b16 %v1249
  %v1286 = vunpack.c.l.b16 %v1250
  %v1287 = vunpack.c.l.b16 %v1251
  %v1288 = vunpack.c.l.b16 %v1252
  %v1289 = vunpack.c.l.b16 %v1253
  %v1290 = vunpack.c.l.b16 %v1254
  %v1291 = vunpack.c.l.b16 %v1255
  %v1292 = vunpack.c.l.b16 %v1256
  %v1293 = vunpack.c.l.b16 %v1257
  %v1294 = vunpack.c.l.b16 %v1258
  %v1295 = vunpack.c.l.b16 %v1259
  %v1296 = vpack.c.b16 %v1279, %v1278
  %v1297 = vpack.c.b16 %v1281, %v1280
  %v1298 = vpack.c.b16 %v1283, %v1282
  %v1299 = vpack.c.b16 %v1285, %v1284
  %v1300 = vpack.c.b16 %v1287, %v1286
  %v1301 = vpack.c.b16 %v1289, %v1288
  %v1302 = vpack.c.b16 %v1291, %v1290
  %v1303 = vpack.c.b16 %v1293, %v1292
  %v1304 = vpack.c.b16 %v1295, %v1294
  %1314 = vmatprep.subr.bf16.mxu0 0
  %1315 = vmatpush1.bf16.msra.mxu0 %v1296
  %1316 = vmatprep.subr.bf16.mxu0 0
  %1317 = vmatpush1.bf16.msra.mxu0 %v1297
  %1318 = vmatprep.subr.bf16.mxu0 0
  %1319 = vmatpush1.bf16.msra.mxu0 %v1298
  %1320 = vmatprep.subr.bf16.mxu0 0
  %1321 = vmatpush1.bf16.msra.mxu0 %v1299
  %1322 = vmatprep.subr.bf16.mxu0 0
  %1323 = vmatpush1.bf16.msra.mxu0 %v1300
  %1324 = vmatprep.subr.bf16.mxu0 0
  %1325 = vmatpush1.bf16.msra.mxu0 %v1301
  %1326 = vmatprep.subr.bf16.mxu0 0
  %1327 = vmatpush1.bf16.msra.mxu0 %v1302
  %1328 = vmatprep.subr.bf16.mxu0 0
  %1329 = vmatpush1.bf16.msra.mxu0 %v1303
  %1330 = vmatprep.subr.bf16.mxu0 0
  %1331 = vmatpush1.bf16.msra.mxu0 %v1304
  %1332 = vmatprep.subr.bf16.mxu0 0
  %1333 = vmatpush1.bf16.msra.mxu0 0
  %1334 = vmatprep.subr.bf16.mxu0 0
  %1335 = vmatpush1.bf16.msra.mxu0 0
  %1336 = vmatprep.subr.bf16.mxu0 0
  %1337 = vmatpush1.bf16.msra.mxu0 0
  %1338 = vmatprep.subr.bf16.mxu0 0
  %1339 = vmatpush1.bf16.msra.mxu0 0
  %1340 = vmatprep.subr.bf16.mxu0 0
  %1341 = vmatpush1.bf16.msra.mxu0 0
  %1342 = vmatprep.subr.bf16.mxu0 0
  %1343 = vmatpush1.bf16.msra.mxu0 0
  %1344 = vmatprep.subr.bf16.mxu0 0
  %1345 = vmatpush1.bf16.msra.mxu0 0
  %1346 = vmatprep.mubr.bf16.mxu0 %v209
  %1347 = vmatmul.mubr.bf16.gmra.mrb[0].mxu0 %v111
  %v1348 = vpop.f32.mrb[0].mxu0
  %v1349 = vadd.f32 0.0, %v1348
  %v1350 = vpop.f32.mrb[0].mxu0
  %v1351 = vpop.f32.mrb[0].mxu0
  %v1352 = vadd.f32 0.0, %v1351
  %v1353 = vpop.f32.mrb[0].mxu0
  %1354 = vmatprep.mubr.bf16.mxu0 %v212
  %1355 = vmatmul.mubr.bf16.gmra.mrb[0].mxu0 %v113
  %v1356 = vpop.f32.mrb[0].mxu0
  %v1357 = vadd.f32 0.0, %v1356
  %v1358 = vpop.f32.mrb[0].mxu0
  %v1359 = vpop.f32.mrb[0].mxu0
  %v1360 = vadd.f32 0.0, %v1359
  %v1361 = vpop.f32.mrb[0].mxu0
  %1362 = vmatprep.mubr.bf16.mxu0 %v215
  %1363 = vmatmul.mubr.bf16.gmra.mrb[0].mxu0 %v115
  %v1364 = vpop.f32.mrb[0].mxu0
  %v1365 = vadd.f32 0.0, %v1364
  %v1366 = vpop.f32.mrb[0].mxu0
  %v1367 = vpop.f32.mrb[0].mxu0
  %v1368 = vadd.f32 0.0, %v1367
  %v1369 = vpop.f32.mrb[0].mxu0
  %1370 = vmatprep.mubr.bf16.mxu0 %v218
  %1371 = vmatmul.mubr.bf16.gmra.mrb[0].mxu0 %v117
  %v1372 = vpop.f32.mrb[0].mxu0
  %v1373 = vadd.f32 0.0, %v1372
  %v1374 = vpop.f32.mrb[0].mxu0
  %v1375 = vpop.f32.mrb[0].mxu0
  %v1376 = vadd.f32 0.0, %v1375
  %v1377 = vpop.f32.mrb[0].mxu0
  %1378 = vmatprep.mubr.bf16.mxu0 %v221
  %1379 = vmatmul.mubr.bf16.gmra.mrb[0].mxu0 %v119
  %v1380 = vpop.f32.mrb[0].mxu0
  %v1381 = vadd.f32 0.0, %v1380
  %v1382 = vpop.f32.mrb[0].mxu0
  %v1383 = vpop.f32.mrb[0].mxu0
  %v1384 = vadd.f32 0.0, %v1383
  %v1385 = vpop.f32.mrb[0].mxu0
  %1386 = vmatprep.mubr.bf16.mxu0 %v224
  %1387 = vmatmul.mubr.bf16.gmra.mrb[0].mxu0 %v121
  %v1388 = vpop.f32.mrb[0].mxu0
  %v1389 = vadd.f32 0.0, %v1388
  %v1390 = vpop.f32.mrb[0].mxu0
  %v1391 = vpop.f32.mrb[0].mxu0
  %v1392 = vadd.f32 0.0, %v1391
  %v1393 = vpop.f32.mrb[0].mxu0
  %1394 = vmatprep.mubr.bf16.mxu0 %v227
  %1395 = vmatmul.mubr.bf16.gmra.mrb[0].mxu0 %v123
  %v1396 = vpop.f32.mrb[0].mxu0
  %v1397 = vadd.f32 0.0, %v1396
  %v1398 = vpop.f32.mrb[0].mxu0
  %v1399 = vpop.f32.mrb[0].mxu0
  %v1400 = vadd.f32 0.0, %v1399
  %v1401 = vpop.f32.mrb[0].mxu0
  %1402 = vmatprep.mubr.bf16.mxu0 %v230
  %1403 = vmatmul.mubr.bf16.gmra.mrb[0].mxu0 %v125
  %v1404 = vpop.f32.mrb[0].mxu0
  %v1405 = vadd.f32 0.0, %v1404
  %v1406 = vpop.f32.mrb[0].mxu0
  %v1407 = vpop.f32.mrb[0].mxu0
  %v1408 = vadd.f32 0.0, %v1407
  %v1409 = vpop.f32.mrb[0].mxu0
  %1410 = vmatprep.mubr.bf16.mxu0 %v233
  %1411 = vmatmul.mubr.bf16.gmra.mrb[0].mxu0 %v127
  %v1412 = vpop.f32.mrb[0].mxu0
  %v1413 = vadd.f32 0.0, %v1412
  %v1414 = vpop.f32.mrb[0].mxu0
  %v1415 = vpop.f32.mrb[0].mxu0
  %v1416 = vadd.f32 0.0, %v1415
  %v1417 = vpop.f32.mrb[0].mxu0
  %1418 = vmatprep.mubr.bf16.mxu0 %v236
  %1419 = vmatmul.mubr.bf16.gmra.mrb[0].mxu0 %v129
  %v1420 = vpop.f32.mrb[0].mxu0
  %v1421 = vadd.f32 0.0, %v1420
  %v1422 = vpop.f32.mrb[0].mxu0
  %v1423 = vpop.f32.mrb[0].mxu0
  %v1424 = vadd.f32 0.0, %v1423
  %v1425 = vpop.f32.mrb[0].mxu0
  %1426 = vmatprep.mubr.bf16.mxu0 %v239
  %1427 = vmatmul.mubr.bf16.gmra.mrb[0].mxu0 %v131
  %v1428 = vpop.f32.mrb[0].mxu0
  %v1429 = vadd.f32 0.0, %v1428
  %v1430 = vpop.f32.mrb[0].mxu0
  %v1431 = vpop.f32.mrb[0].mxu0
  %v1432 = vadd.f32 0.0, %v1431
  %v1433 = vpop.f32.mrb[0].mxu0
  %1434 = vmatprep.mubr.bf16.mxu0 %v242
  %1435 = vmatmul.mubr.bf16.gmra.mrb[0].mxu0 %v133
  %v1436 = vpop.f32.mrb[0].mxu0
  %v1437 = vadd.f32 0.0, %v1436
  %v1438 = vpop.f32.mrb[0].mxu0
  %v1439 = vpop.f32.mrb[0].mxu0
  %v1440 = vadd.f32 0.0, %v1439
  %v1441 = vpop.f32.mrb[0].mxu0
  %1442 = vdwg.mxu0
  %v1443 = vpack.c.bf16 %v1352, %v1349
  %v1444 = vpack.c.bf16 %v1360, %v1357
  %v1445 = vpack.c.bf16 %v1368, %v1365
  %v1446 = vpack.c.bf16 %v1376, %v1373
  %v1447 = vpack.c.bf16 %v1384, %v1381
  %v1448 = vpack.c.bf16 %v1392, %v1389
  %v1449 = vpack.c.bf16 %v1400, %v1397
  %v1450 = vpack.c.bf16 %v1408, %v1405
  %v1451 = vpack.c.bf16 %v1416, %v1413
  %v1452 = vpack.c.bf16 %v1424, %v1421
  %v1453 = vpack.c.bf16 %v1432, %v1429
  %v1454 = vpack.c.bf16 %v1440, %v1437
  %s1455 = scalar_lea.vmem %s2, 432
  %v1456 = vld [vmem:[%s1455] sm:$0xf]
  %v1457 = vld [vmem:[%s1455 + $0x4] sm:$0xf]
  %v1458 = vld [vmem:[%s1455 + $0x8] sm:$0xf]
  %v1459 = vld [vmem:[%s1455 + $0xc] sm:$0xf]
  %v1460 = vld [vmem:[%s1455 + $0x10] sm:$0xf]
  %v1461 = vld [vmem:[%s1455 + $0x14] sm:$0xf]
  %v1462 = vld [vmem:[%s1455 + $0x18] sm:$0xf]
  %v1463 = vld [vmem:[%s1455 + $0x1c] sm:$0xf]
  %v1464 = vld [vmem:[%s1455 + $0x20] sm:$0xf]
  %v1465 = vld [vmem:[%s1455 + $0x24] sm:$0xf]
  %v1466 = vld [vmem:[%s1455 + $0x28] sm:$0xf]
  %v1467 = vld [vmem:[%s1455 + $0x2c] sm:$0xf]
  %v1468 = vld [vmem:[%s1455 + $0x30] sm:$0xf]
  %v1469 = vld [vmem:[%s1455 + $0x34] sm:$0xf]
  %v1470 = vld [vmem:[%s1455 + $0x38] sm:$0xf]
  %v1471 = vld [vmem:[%s1455 + $0x3c] sm:$0xf]
  %v1472 = vld [vmem:[%s1455 + $0x40] sm:$0xf]
  %v1473 = vld [vmem:[%s1455 + $0x44] sm:$0xf]
  %v1492 = vunpack.c.l.b16 %v1456
  %v1493 = vunpack.c.l.b16 %v1457
  %v1494 = vunpack.c.l.b16 %v1458
  %v1495 = vunpack.c.l.b16 %v1459
  %v1496 = vunpack.c.l.b16 %v1460
  %v1497 = vunpack.c.l.b16 %v1461
  %v1498 = vunpack.c.l.b16 %v1462
  %v1499 = vunpack.c.l.b16 %v1463
  %v1500 = vunpack.c.l.b16 %v1464
  %v1501 = vunpack.c.l.b16 %v1465
  %v1502 = vunpack.c.l.b16 %v1466
  %v1503 = vunpack.c.l.b16 %v1467
  %v1504 = vunpack.c.l.b16 %v1468
  %v1505 = vunpack.c.l.b16 %v1469
  %v1506 = vunpack.c.l.b16 %v1470
  %v1507 = vunpack.c.l.b16 %v1471
  %v1508 = vunpack.c.l.b16 %v1472
  %v1509 = vunpack.c.l.b16 %v1473
  %v1510 = vpack.c.b16 %v1493, %v1492
  %v1511 = vpack.c.b16 %v1495, %v1494
  %v1512 = vpack.c.b16 %v1497, %v1496
  %v1513 = vpack.c.b16 %v1499, %v1498
  %v1514 = vpack.c.b16 %v1501, %v1500
  %v1515 = vpack.c.b16 %v1503, %v1502
  %v1516 = vpack.c.b16 %v1505, %v1504
  %v1517 = vpack.c.b16 %v1507, %v1506
  %v1518 = vpack.c.b16 %v1509, %v1508
  %1528 = vmatprep.subr.bf16.mxu0 0
  %1529 = vmatpush1.bf16.msra.mxu0 %v1510
  %1530 = vmatprep.subr.bf16.mxu0 0
  %1531 = vmatpush1.bf16.msra.mxu0 %v1511
  %1532 = vmatprep.subr.bf16.mxu0 0
  %1533 = vmatpush1.bf16.msra.mxu0 %v1512
  %1534 = vmatprep.subr.bf16.mxu0 0
  %1535 = vmatpush1.bf16.msra.mxu0 %v1513
  %1536 = vmatprep.subr.bf16.mxu0 0
  %1537 = vmatpush1.bf16.msra.mxu0 %v1514
  %1538 = vmatprep.subr.bf16.mxu0 0
  %1539 = vmatpush1.bf16.msra.mxu0 %v1515
  %1540 = vmatprep.subr.bf16.mxu0 0
  %1541 = vmatpush1.bf16.msra.mxu0 %v1516
  %1542 = vmatprep.subr.bf16.mxu0 0
  %1543 = vmatpush1.bf16.msra.mxu0 %v1517
  %1544 = vmatprep.subr.bf16.mxu0 0
  %1545 = vmatpush1.bf16.msra.mxu0 %v1518
  %1546 = vmatprep.subr.bf16.mxu0 0
  %1547 = vmatpush1.bf16.msra.mxu0 0
  %1548 = vmatprep.subr.bf16.mxu0 0
  %1549 = vmatpush1.bf16.msra.mxu0 0
  %1550 = vmatprep.subr.bf16.mxu0 0
  %1551 = vmatpush1.bf16.msra.mxu0 0
  %1552 = vmatprep.subr.bf16.mxu0 0
  %1553 = vmatpush1.bf16.msra.mxu0 0
  %1554 = vmatprep.subr.bf16.mxu0 0
  %1555 = vmatpush1.bf16.msra.mxu0 0
  %1556 = vmatprep.subr.bf16.mxu0 0
  %1557 = vmatpush1.bf16.msra.mxu0 0
  %1558 = vmatprep.subr.bf16.mxu0 0
  %1559 = vmatpush1.bf16.msra.mxu0 0
  %1560 = vmatprep.mubr.bf16.mxu0 %v209
  %1561 = vmatmul.mubr.bf16.gmra.mrb[0].mxu0 %v111
  %v1562 = vpop.f32.mrb[0].mxu0
  %v1563 = vadd.f32 0.0, %v1562
  %v1564 = vpop.f32.mrb[0].mxu0
  %v1565 = vpop.f32.mrb[0].mxu0
  %v1566 = vadd.f32 0.0, %v1565
  %v1567 = vpop.f32.mrb[0].mxu0
  %1568 = vmatprep.mubr.bf16.mxu0 %v212
  %1569 = vmatmul.mubr.bf16.gmra.mrb[0].mxu0 %v113
  %v1570 = vpop.f32.mrb[0].mxu0
  %v1571 = vadd.f32 0.0, %v1570
  %v1572 = vpop.f32.mrb[0].mxu0
  %v1573 = vpop.f32.mrb[0].mxu0
  %v1574 = vadd.f32 0.0, %v1573
  %v1575 = vpop.f32.mrb[0].mxu0
  %1576 = vmatprep.mubr.bf16.mxu0 %v215
  %1577 = vmatmul.mubr.bf16.gmra.mrb[0].mxu0 %v115
  %v1578 = vpop.f32.mrb[0].mxu0
  %v1579 = vadd.f32 0.0, %v1578
  %v1580 = vpop.f32.mrb[0].mxu0
  %v1581 = vpop.f32.mrb[0].mxu0
  %v1582 = vadd.f32 0.0, %v1581
  %v1583 = vpop.f32.mrb[0].mxu0
  %1584 = vmatprep.mubr.bf16.mxu0 %v218
  %1585 = vmatmul.mubr.bf16.gmra.mrb[0].mxu0 %v117
  %v1586 = vpop.f32.mrb[0].mxu0
  %v1587 = vadd.f32 0.0, %v1586
  %v1588 = vpop.f32.mrb[0].mxu0
  %v1589 = vpop.f32.mrb[0].mxu0
  %v1590 = vadd.f32 0.0, %v1589
  %v1591 = vpop.f32.mrb[0].mxu0
  %1592 = vmatprep.mubr.bf16.mxu0 %v221
  %1593 = vmatmul.mubr.bf16.gmra.mrb[0].mxu0 %v119
  %v1594 = vpop.f32.mrb[0].mxu0
  %v1595 = vadd.f32 0.0, %v1594
  %v1596 = vpop.f32.mrb[0].mxu0
  %v1597 = vpop.f32.mrb[0].mxu0
  %v1598 = vadd.f32 0.0, %v1597
  %v1599 = vpop.f32.mrb[0].mxu0
  %1600 = vmatprep.mubr.bf16.mxu0 %v224
  %1601 = vmatmul.mubr.bf16.gmra.mrb[0].mxu0 %v121
  %v1602 = vpop.f32.mrb[0].mxu0
  %v1603 = vadd.f32 0.0, %v1602
  %v1604 = vpop.f32.mrb[0].mxu0
  %v1605 = vpop.f32.mrb[0].mxu0
  %v1606 = vadd.f32 0.0, %v1605
  %v1607 = vpop.f32.mrb[0].mxu0
  %1608 = vmatprep.mubr.bf16.mxu0 %v227
  %1609 = vmatmul.mubr.bf16.gmra.mrb[0].mxu0 %v123
  %v1610 = vpop.f32.mrb[0].mxu0
  %v1611 = vadd.f32 0.0, %v1610
  %v1612 = vpop.f32.mrb[0].mxu0
  %v1613 = vpop.f32.mrb[0].mxu0
  %v1614 = vadd.f32 0.0, %v1613
  %v1615 = vpop.f32.mrb[0].mxu0
  %1616 = vmatprep.mubr.bf16.mxu0 %v230
  %1617 = vmatmul.mubr.bf16.gmra.mrb[0].mxu0 %v125
  %v1618 = vpop.f32.mrb[0].mxu0
  %v1619 = vadd.f32 0.0, %v1618
  %v1620 = vpop.f32.mrb[0].mxu0
  %v1621 = vpop.f32.mrb[0].mxu0
  %v1622 = vadd.f32 0.0, %v1621
  %v1623 = vpop.f32.mrb[0].mxu0
  %1624 = vmatprep.mubr.bf16.mxu0 %v233
  %1625 = vmatmul.mubr.bf16.gmra.mrb[0].mxu0 %v127
  %v1626 = vpop.f32.mrb[0].mxu0
  %v1627 = vadd.f32 0.0, %v1626
  %v1628 = vpop.f32.mrb[0].mxu0
  %v1629 = vpop.f32.mrb[0].mxu0
  %v1630 = vadd.f32 0.0, %v1629
  %v1631 = vpop.f32.mrb[0].mxu0
  %1632 = vmatprep.mubr.bf16.mxu0 %v236
  %1633 = vmatmul.mubr.bf16.gmra.mrb[0].mxu0 %v129
  %v1634 = vpop.f32.mrb[0].mxu0
  %v1635 = vadd.f32 0.0, %v1634
  %v1636 = vpop.f32.mrb[0].mxu0
  %v1637 = vpop.f32.mrb[0].mxu0
  %v1638 = vadd.f32 0.0, %v1637
  %v1639 = vpop.f32.mrb[0].mxu0
  %1640 = vmatprep.mubr.bf16.mxu0 %v239
  %1641 = vmatmul.mubr.bf16.gmra.mrb[0].mxu0 %v131
  %v1642 = vpop.f32.mrb[0].mxu0
  %v1643 = vadd.f32 0.0, %v1642
  %v1644 = vpop.f32.mrb[0].mxu0
  %v1645 = vpop.f32.mrb[0].mxu0
  %v1646 = vadd.f32 0.0, %v1645
  %v1647 = vpop.f32.mrb[0].mxu0
  %1648 = vmatprep.mubr.bf16.mxu0 %v242
  %1649 = vmatmul.mubr.bf16.gmra.mrb[0].mxu0 %v133
  %v1650 = vpop.f32.mrb[0].mxu0
  %v1651 = vadd.f32 0.0, %v1650
  %v1652 = vpop.f32.mrb[0].mxu0
  %v1653 = vpop.f32.mrb[0].mxu0
  %v1654 = vadd.f32 0.0, %v1653
  %v1655 = vpop.f32.mrb[0].mxu0
  %1656 = vdwg.mxu0
  %v1657 = vpack.c.bf16 %v1566, %v1563
  %v1658 = vpack.c.bf16 %v1574, %v1571
  %v1659 = vpack.c.bf16 %v1582, %v1579
  %v1660 = vpack.c.bf16 %v1590, %v1587
  %v1661 = vpack.c.bf16 %v1598, %v1595
  %v1662 = vpack.c.bf16 %v1606, %v1603
  %v1663 = vpack.c.bf16 %v1614, %v1611
  %v1664 = vpack.c.bf16 %v1622, %v1619
  %v1665 = vpack.c.bf16 %v1630, %v1627
  %v1666 = vpack.c.bf16 %v1638, %v1635
  %v1667 = vpack.c.bf16 %v1646, %v1643
  %v1668 = vpack.c.bf16 %v1654, %v1651
  %s1669 = scalar_lea.vmem %s2, 504
  %v1670 = vld [vmem:[%s1669] sm:$0xf]
  %v1671 = vld [vmem:[%s1669 + $0x4] sm:$0xf]
  %v1672 = vld [vmem:[%s1669 + $0x8] sm:$0xf]
  %v1673 = vld [vmem:[%s1669 + $0xc] sm:$0xf]
  %v1674 = vld [vmem:[%s1669 + $0x10] sm:$0xf]
  %v1675 = vld [vmem:[%s1669 + $0x14] sm:$0xf]
  %v1676 = vld [vmem:[%s1669 + $0x18] sm:$0xf]
  %v1677 = vld [vmem:[%s1669 + $0x1c] sm:$0xf]
  %v1678 = vld [vmem:[%s1669 + $0x20] sm:$0xf]
  %v1679 = vld [vmem:[%s1669 + $0x24] sm:$0xf]
  %v1680 = vld [vmem:[%s1669 + $0x28] sm:$0xf]
  %v1681 = vld [vmem:[%s1669 + $0x2c] sm:$0xf]
  %v1682 = vld [vmem:[%s1669 + $0x30] sm:$0xf]
  %v1683 = vld [vmem:[%s1669 + $0x34] sm:$0xf]
  %v1684 = vld [vmem:[%s1669 + $0x38] sm:$0xf]
  %v1685 = vld [vmem:[%s1669 + $0x3c] sm:$0xf]
  %v1686 = vld [vmem:[%s1669 + $0x40] sm:$0xf]
  %v1687 = vld [vmem:[%s1669 + $0x44] sm:$0xf]
  %v1706 = vunpack.c.l.b16 %v1670
  %v1707 = vunpack.c.l.b16 %v1671
  %v1708 = vunpack.c.l.b16 %v1672
  %v1709 = vunpack.c.l.b16 %v1673
  %v1710 = vunpack.c.l.b16 %v1674
  %v1711 = vunpack.c.l.b16 %v1675
  %v1712 = vunpack.c.l.b16 %v1676
  %v1713 = vunpack.c.l.b16 %v1677
  %v1714 = vunpack.c.l.b16 %v1678
  %v1715 = vunpack.c.l.b16 %v1679
  %v1716 = vunpack.c.l.b16 %v1680
  %v1717 = vunpack.c.l.b16 %v1681
  %v1718 = vunpack.c.l.b16 %v1682
  %v1719 = vunpack.c.l.b16 %v1683
  %v1720 = vunpack.c.l.b16 %v1684
  %v1721 = vunpack.c.l.b16 %v1685
  %v1722 = vunpack.c.l.b16 %v1686
  %v1723 = vunpack.c.l.b16 %v1687
  %v1724 = vpack.c.b16 %v1707, %v1706
  %v1725 = vpack.c.b16 %v1709, %v1708
  %v1726 = vpack.c.b16 %v1711, %v1710
  %v1727 = vpack.c.b16 %v1713, %v1712
  %v1728 = vpack.c.b16 %v1715, %v1714
  %v1729 = vpack.c.b16 %v1717, %v1716
  %v1730 = vpack.c.b16 %v1719, %v1718
  %v1731 = vpack.c.b16 %v1721, %v1720
  %v1732 = vpack.c.b16 %v1723, %v1722
  %1742 = vmatprep.subr.bf16.mxu0 0
  %1743 = vmatpush1.bf16.msra.mxu0 %v1724
  %1744 = vmatprep.subr.bf16.mxu0 0
  %1745 = vmatpush1.bf16.msra.mxu0 %v1725
  %1746 = vmatprep.subr.bf16.mxu0 0
  %1747 = vmatpush1.bf16.msra.mxu0 %v1726
  %1748 = vmatprep.subr.bf16.mxu0 0
  %1749 = vmatpush1.bf16.msra.mxu0 %v1727
  %1750 = vmatprep.subr.bf16.mxu0 0
  %1751 = vmatpush1.bf16.msra.mxu0 %v1728
  %1752 = vmatprep.subr.bf16.mxu0 0
  %1753 = vmatpush1.bf16.msra.mxu0 %v1729
  %1754 = vmatprep.subr.bf16.mxu0 0
  %1755 = vmatpush1.bf16.msra.mxu0 %v1730
  %1756 = vmatprep.subr.bf16.mxu0 0
  %1757 = vmatpush1.bf16.msra.mxu0 %v1731
  %1758 = vmatprep.subr.bf16.mxu0 0
  %1759 = vmatpush1.bf16.msra.mxu0 %v1732
  %1760 = vmatprep.subr.bf16.mxu0 0
  %1761 = vmatpush1.bf16.msra.mxu0 0
  %1762 = vmatprep.subr.bf16.mxu0 0
  %1763 = vmatpush1.bf16.msra.mxu0 0
  %1764 = vmatprep.subr.bf16.mxu0 0
  %1765 = vmatpush1.bf16.msra.mxu0 0
  %1766 = vmatprep.subr.bf16.mxu0 0
  %1767 = vmatpush1.bf16.msra.mxu0 0
  %1768 = vmatprep.subr.bf16.mxu0 0
  %1769 = vmatpush1.bf16.msra.mxu0 0
  %1770 = vmatprep.subr.bf16.mxu0 0
  %1771 = vmatpush1.bf16.msra.mxu0 0
  %1772 = vmatprep.subr.bf16.mxu0 0
  %1773 = vmatpush1.bf16.msra.mxu0 0
  %1774 = vmatprep.mubr.bf16.mxu0 %v209
  %1775 = vmatmul.mubr.bf16.gmra.mrb[0].mxu0 %v111
  %v1776 = vpop.f32.mrb[0].mxu0
  %v1777 = vadd.f32 0.0, %v1776
  %v1778 = vpop.f32.mrb[0].mxu0
  %v1779 = vpop.f32.mrb[0].mxu0
  %v1780 = vadd.f32 0.0, %v1779
  %v1781 = vpop.f32.mrb[0].mxu0
  %1782 = vmatprep.mubr.bf16.mxu0 %v212
  %1783 = vmatmul.mubr.bf16.gmra.mrb[0].mxu0 %v113
  %v1784 = vpop.f32.mrb[0].mxu0
  %v1785 = vadd.f32 0.0, %v1784
  %v1786 = vpop.f32.mrb[0].mxu0
  %v1787 = vpop.f32.mrb[0].mxu0
  %v1788 = vadd.f32 0.0, %v1787
  %v1789 = vpop.f32.mrb[0].mxu0
  %1790 = vmatprep.mubr.bf16.mxu0 %v215
  %1791 = vmatmul.mubr.bf16.gmra.mrb[0].mxu0 %v115
  %v1792 = vpop.f32.mrb[0].mxu0
  %v1793 = vadd.f32 0.0, %v1792
  %v1794 = vpop.f32.mrb[0].mxu0
  %v1795 = vpop.f32.mrb[0].mxu0
  %v1796 = vadd.f32 0.0, %v1795
  %v1797 = vpop.f32.mrb[0].mxu0
  %1798 = vmatprep.mubr.bf16.mxu0 %v218
  %1799 = vmatmul.mubr.bf16.gmra.mrb[0].mxu0 %v117
  %v1800 = vpop.f32.mrb[0].mxu0
  %v1801 = vadd.f32 0.0, %v1800
  %v1802 = vpop.f32.mrb[0].mxu0
  %v1803 = vpop.f32.mrb[0].mxu0
  %v1804 = vadd.f32 0.0, %v1803
  %v1805 = vpop.f32.mrb[0].mxu0
  %1806 = vmatprep.mubr.bf16.mxu0 %v221
  %1807 = vmatmul.mubr.bf16.gmra.mrb[0].mxu0 %v119
  %v1808 = vpop.f32.mrb[0].mxu0
  %v1809 = vadd.f32 0.0, %v1808
  %v1810 = vpop.f32.mrb[0].mxu0
  %v1811 = vpop.f32.mrb[0].mxu0
  %v1812 = vadd.f32 0.0, %v1811
  %v1813 = vpop.f32.mrb[0].mxu0
  %1814 = vmatprep.mubr.bf16.mxu0 %v224
  %1815 = vmatmul.mubr.bf16.gmra.mrb[0].mxu0 %v121
  %v1816 = vpop.f32.mrb[0].mxu0
  %v1817 = vadd.f32 0.0, %v1816
  %v1818 = vpop.f32.mrb[0].mxu0
  %v1819 = vpop.f32.mrb[0].mxu0
  %v1820 = vadd.f32 0.0, %v1819
  %v1821 = vpop.f32.mrb[0].mxu0
  %1822 = vmatprep.mubr.bf16.mxu0 %v227
  %1823 = vmatmul.mubr.bf16.gmra.mrb[0].mxu0 %v123
  %v1824 = vpop.f32.mrb[0].mxu0
  %v1825 = vadd.f32 0.0, %v1824
  %v1826 = vpop.f32.mrb[0].mxu0
  %v1827 = vpop.f32.mrb[0].mxu0
  %v1828 = vadd.f32 0.0, %v1827
  %v1829 = vpop.f32.mrb[0].mxu0
  %1830 = vmatprep.mubr.bf16.mxu0 %v230
  %1831 = vmatmul.mubr.bf16.gmra.mrb[0].mxu0 %v125
  %v1832 = vpop.f32.mrb[0].mxu0
  %v1833 = vadd.f32 0.0, %v1832
  %v1834 = vpop.f32.mrb[0].mxu0
  %v1835 = vpop.f32.mrb[0].mxu0
  %v1836 = vadd.f32 0.0, %v1835
  %v1837 = vpop.f32.mrb[0].mxu0
  %1838 = vmatprep.mubr.bf16.mxu0 %v233
  %1839 = vmatmul.mubr.bf16.gmra.mrb[0].mxu0 %v127
  %v1840 = vpop.f32.mrb[0].mxu0
  %v1841 = vadd.f32 0.0, %v1840
  %v1842 = vpop.f32.mrb[0].mxu0
  %v1843 = vpop.f32.mrb[0].mxu0
  %v1844 = vadd.f32 0.0, %v1843
  %v1845 = vpop.f32.mrb[0].mxu0
  %1846 = vmatprep.mubr.bf16.mxu0 %v236
  %1847 = vmatmul.mubr.bf16.gmra.mrb[0].mxu0 %v129
  %v1848 = vpop.f32.mrb[0].mxu0
  %v1849 = vadd.f32 0.0, %v1848
  %v1850 = vpop.f32.mrb[0].mxu0
  %v1851 = vpop.f32.mrb[0].mxu0
  %v1852 = vadd.f32 0.0, %v1851
  %v1853 = vpop.f32.mrb[0].mxu0
  %1854 = vmatprep.mubr.bf16.mxu0 %v239
  %1855 = vmatmul.mubr.bf16.gmra.mrb[0].mxu0 %v131
  %v1856 = vpop.f32.mrb[0].mxu0
  %v1857 = vadd.f32 0.0, %v1856
  %v1858 = vpop.f32.mrb[0].mxu0
  %v1859 = vpop.f32.mrb[0].mxu0
  %v1860 = vadd.f32 0.0, %v1859
  %v1861 = vpop.f32.mrb[0].mxu0
  %1862 = vmatprep.mubr.bf16.mxu0 %v242
  %1863 = vmatmul.mubr.bf16.gmra.mrb[0].mxu0 %v133
  %v1864 = vpop.f32.mrb[0].mxu0
  %v1865 = vadd.f32 0.0, %v1864
  %v1866 = vpop.f32.mrb[0].mxu0
  %v1867 = vpop.f32.mrb[0].mxu0
  %v1868 = vadd.f32 0.0, %v1867
  %v1869 = vpop.f32.mrb[0].mxu0
  %1870 = vdwg.mxu0
  %v1871 = vpack.c.bf16 %v1780, %v1777
  %v1872 = vpack.c.bf16 %v1788, %v1785
  %v1873 = vpack.c.bf16 %v1796, %v1793
  %v1874 = vpack.c.bf16 %v1804, %v1801
  %v1875 = vpack.c.bf16 %v1812, %v1809
  %v1876 = vpack.c.bf16 %v1820, %v1817
  %v1877 = vpack.c.bf16 %v1828, %v1825
  %v1878 = vpack.c.bf16 %v1836, %v1833
  %v1879 = vpack.c.bf16 %v1844, %v1841
  %v1880 = vpack.c.bf16 %v1852, %v1849
  %v1881 = vpack.c.bf16 %v1860, %v1857
  %v1882 = vpack.c.bf16 %v1868, %v1865
  %s1883 = scalar_lea.vmem %s2, 576
  %v1884 = vld [vmem:[%s1883] sm:$0xf]
  %v1885 = vld [vmem:[%s1883 + $0x4] sm:$0xf]
  %v1886 = vld [vmem:[%s1883 + $0x8] sm:$0xf]
  %v1887 = vld [vmem:[%s1883 + $0xc] sm:$0xf]
  %v1888 = vld [vmem:[%s1883 + $0x10] sm:$0xf]
  %v1889 = vld [vmem:[%s1883 + $0x14] sm:$0xf]
  %v1890 = vld [vmem:[%s1883 + $0x18] sm:$0xf]
  %v1891 = vld [vmem:[%s1883 + $0x1c] sm:$0xf]
  %v1892 = vld [vmem:[%s1883 + $0x20] sm:$0xf]
  %v1893 = vld [vmem:[%s1883 + $0x24] sm:$0xf]
  %v1894 = vld [vmem:[%s1883 + $0x28] sm:$0xf]
  %v1895 = vld [vmem:[%s1883 + $0x2c] sm:$0xf]
  %v1896 = vld [vmem:[%s1883 + $0x30] sm:$0xf]
  %v1897 = vld [vmem:[%s1883 + $0x34] sm:$0xf]
  %v1898 = vld [vmem:[%s1883 + $0x38] sm:$0xf]
  %v1899 = vld [vmem:[%s1883 + $0x3c] sm:$0xf]
  %v1900 = vld [vmem:[%s1883 + $0x40] sm:$0xf]
  %v1901 = vld [vmem:[%s1883 + $0x44] sm:$0xf]
  %v1920 = vunpack.c.l.b16 %v1884
  %v1921 = vunpack.c.l.b16 %v1885
  %v1922 = vunpack.c.l.b16 %v1886
  %v1923 = vunpack.c.l.b16 %v1887
  %v1924 = vunpack.c.l.b16 %v1888
  %v1925 = vunpack.c.l.b16 %v1889
  %v1926 = vunpack.c.l.b16 %v1890
  %v1927 = vunpack.c.l.b16 %v1891
  %v1928 = vunpack.c.l.b16 %v1892
  %v1929 = vunpack.c.l.b16 %v1893
  %v1930 = vunpack.c.l.b16 %v1894
  %v1931 = vunpack.c.l.b16 %v1895
  %v1932 = vunpack.c.l.b16 %v1896
  %v1933 = vunpack.c.l.b16 %v1897
  %v1934 = vunpack.c.l.b16 %v1898
  %v1935 = vunpack.c.l.b16 %v1899
  %v1936 = vunpack.c.l.b16 %v1900
  %v1937 = vunpack.c.l.b16 %v1901
  %v1938 = vpack.c.b16 %v1921, %v1920
  %v1939 = vpack.c.b16 %v1923, %v1922
  %v1940 = vpack.c.b16 %v1925, %v1924
  %v1941 = vpack.c.b16 %v1927, %v1926
  %v1942 = vpack.c.b16 %v1929, %v1928
  %v1943 = vpack.c.b16 %v1931, %v1930
  %v1944 = vpack.c.b16 %v1933, %v1932
  %v1945 = vpack.c.b16 %v1935, %v1934
  %v1946 = vpack.c.b16 %v1937, %v1936
  %1956 = vmatprep.subr.bf16.mxu0 0
  %1957 = vmatpush1.bf16.msra.mxu0 %v1938
  %1958 = vmatprep.subr.bf16.mxu0 0
  %1959 = vmatpush1.bf16.msra.mxu0 %v1939
  %1960 = vmatprep.subr.bf16.mxu0 0
  %1961 = vmatpush1.bf16.msra.mxu0 %v1940
  %1962 = vmatprep.subr.bf16.mxu0 0
  %1963 = vmatpush1.bf16.msra.mxu0 %v1941
  %1964 = vmatprep.subr.bf16.mxu0 0
  %1965 = vmatpush1.bf16.msra.mxu0 %v1942
  %1966 = vmatprep.subr.bf16.mxu0 0
  %1967 = vmatpush1.bf16.msra.mxu0 %v1943
  %1968 = vmatprep.subr.bf16.mxu0 0
  %1969 = vmatpush1.bf16.msra.mxu0 %v1944
  %1970 = vmatprep.subr.bf16.mxu0 0
  %1971 = vmatpush1.bf16.msra.mxu0 %v1945
  %1972 = vmatprep.subr.bf16.mxu0 0
  %1973 = vmatpush1.bf16.msra.mxu0 %v1946
  %1974 = vmatprep.subr.bf16.mxu0 0
  %1975 = vmatpush1.bf16.msra.mxu0 0
  %1976 = vmatprep.subr.bf16.mxu0 0
  %1977 = vmatpush1.bf16.msra.mxu0 0
  %1978 = vmatprep.subr.bf16.mxu0 0
  %1979 = vmatpush1.bf16.msra.mxu0 0
  %1980 = vmatprep.subr.bf16.mxu0 0
  %1981 = vmatpush1.bf16.msra.mxu0 0
  %1982 = vmatprep.subr.bf16.mxu0 0
  %1983 = vmatpush1.bf16.msra.mxu0 0
  %1984 = vmatprep.subr.bf16.mxu0 0
  %1985 = vmatpush1.bf16.msra.mxu0 0
  %1986 = vmatprep.subr.bf16.mxu0 0
  %1987 = vmatpush1.bf16.msra.mxu0 0
  %1988 = vmatprep.mubr.bf16.mxu0 %v209
  %1989 = vmatmul.mubr.bf16.gmra.mrb[0].mxu0 %v111
  %v1990 = vpop.f32.mrb[0].mxu0
  %v1991 = vadd.f32 0.0, %v1990
  %v1992 = vpop.f32.mrb[0].mxu0
  %v1993 = vpop.f32.mrb[0].mxu0
  %v1994 = vadd.f32 0.0, %v1993
  %v1995 = vpop.f32.mrb[0].mxu0
  %1996 = vmatprep.mubr.bf16.mxu0 %v212
  %1997 = vmatmul.mubr.bf16.gmra.mrb[0].mxu0 %v113
  %v1998 = vpop.f32.mrb[0].mxu0
  %v1999 = vadd.f32 0.0, %v1998
  %v2000 = vpop.f32.mrb[0].mxu0
  %v2001 = vpop.f32.mrb[0].mxu0
  %v2002 = vadd.f32 0.0, %v2001
  %v2003 = vpop.f32.mrb[0].mxu0
  %2004 = vmatprep.mubr.bf16.mxu0 %v215
  %2005 = vmatmul.mubr.bf16.gmra.mrb[0].mxu0 %v115
  %v2006 = vpop.f32.mrb[0].mxu0
  %v2007 = vadd.f32 0.0, %v2006
  %v2008 = vpop.f32.mrb[0].mxu0
  %v2009 = vpop.f32.mrb[0].mxu0
  %v2010 = vadd.f32 0.0, %v2009
  %v2011 = vpop.f32.mrb[0].mxu0
  %2012 = vmatprep.mubr.bf16.mxu0 %v218
  %2013 = vmatmul.mubr.bf16.gmra.mrb[0].mxu0 %v117
  %v2014 = vpop.f32.mrb[0].mxu0
  %v2015 = vadd.f32 0.0, %v2014
  %v2016 = vpop.f32.mrb[0].mxu0
  %v2017 = vpop.f32.mrb[0].mxu0
  %v2018 = vadd.f32 0.0, %v2017
  %v2019 = vpop.f32.mrb[0].mxu0
  %2020 = vmatprep.mubr.bf16.mxu0 %v221
  %2021 = vmatmul.mubr.bf16.gmra.mrb[0].mxu0 %v119
  %v2022 = vpop.f32.mrb[0].mxu0
  %v2023 = vadd.f32 0.0, %v2022
  %v2024 = vpop.f32.mrb[0].mxu0
  %v2025 = vpop.f32.mrb[0].mxu0
  %v2026 = vadd.f32 0.0, %v2025
  %v2027 = vpop.f32.mrb[0].mxu0
  %2028 = vmatprep.mubr.bf16.mxu0 %v224
  %2029 = vmatmul.mubr.bf16.gmra.mrb[0].mxu0 %v121
  %v2030 = vpop.f32.mrb[0].mxu0
  %v2031 = vadd.f32 0.0, %v2030
  %v2032 = vpop.f32.mrb[0].mxu0
  %v2033 = vpop.f32.mrb[0].mxu0
  %v2034 = vadd.f32 0.0, %v2033
  %v2035 = vpop.f32.mrb[0].mxu0
  %2036 = vmatprep.mubr.bf16.mxu0 %v227
  %2037 = vmatmul.mubr.bf16.gmra.mrb[0].mxu0 %v123
  %v2038 = vpop.f32.mrb[0].mxu0
  %v2039 = vadd.f32 0.0, %v2038
  %v2040 = vpop.f32.mrb[0].mxu0
  %v2041 = vpop.f32.mrb[0].mxu0
  %v2042 = vadd.f32 0.0, %v2041
  %v2043 = vpop.f32.mrb[0].mxu0
  %2044 = vmatprep.mubr.bf16.mxu0 %v230
  %2045 = vmatmul.mubr.bf16.gmra.mrb[0].mxu0 %v125
  %v2046 = vpop.f32.mrb[0].mxu0
  %v2047 = vadd.f32 0.0, %v2046
  %v2048 = vpop.f32.mrb[0].mxu0
  %v2049 = vpop.f32.mrb[0].mxu0
  %v2050 = vadd.f32 0.0, %v2049
  %v2051 = vpop.f32.mrb[0].mxu0
  %2052 = vmatprep.mubr.bf16.mxu0 %v233
  %2053 = vmatmul.mubr.bf16.gmra.mrb[0].mxu0 %v127
  %v2054 = vpop.f32.mrb[0].mxu0
  %v2055 = vadd.f32 0.0, %v2054
  %v2056 = vpop.f32.mrb[0].mxu0
  %v2057 = vpop.f32.mrb[0].mxu0
  %v2058 = vadd.f32 0.0, %v2057
  %v2059 = vpop.f32.mrb[0].mxu0
  %2060 = vmatprep.mubr.bf16.mxu0 %v236
  %2061 = vmatmul.mubr.bf16.gmra.mrb[0].mxu0 %v129
  %v2062 = vpop.f32.mrb[0].mxu0
  %v2063 = vadd.f32 0.0, %v2062
  %v2064 = vpop.f32.mrb[0].mxu0
  %v2065 = vpop.f32.mrb[0].mxu0
  %v2066 = vadd.f32 0.0, %v2065
  %v2067 = vpop.f32.mrb[0].mxu0
  %2068 = vmatprep.mubr.bf16.mxu0 %v239
  %2069 = vmatmul.mubr.bf16.gmra.mrb[0].mxu0 %v131
  %v2070 = vpop.f32.mrb[0].mxu0
  %v2071 = vadd.f32 0.0, %v2070
  %v2072 = vpop.f32.mrb[0].mxu0
  %v2073 = vpop.f32.mrb[0].mxu0
  %v2074 = vadd.f32 0.0, %v2073
  %v2075 = vpop.f32.mrb[0].mxu0
  %2076 = vmatprep.mubr.bf16.mxu0 %v242
  %2077 = vmatmul.mubr.bf16.gmra.mrb[0].mxu0 %v133
  %v2078 = vpop.f32.mrb[0].mxu0
  %v2079 = vadd.f32 0.0, %v2078
  %v2080 = vpop.f32.mrb[0].mxu0
  %v2081 = vpop.f32.mrb[0].mxu0
  %v2082 = vadd.f32 0.0, %v2081
  %v2083 = vpop.f32.mrb[0].mxu0
  %2084 = vdwg.mxu0
  %v2085 = vpack.c.bf16 %v1994, %v1991
  %v2086 = vpack.c.bf16 %v2002, %v1999
  %v2087 = vpack.c.bf16 %v2010, %v2007
  %v2088 = vpack.c.bf16 %v2018, %v2015
  %v2089 = vpack.c.bf16 %v2026, %v2023
  %v2090 = vpack.c.bf16 %v2034, %v2031
  %v2091 = vpack.c.bf16 %v2042, %v2039
  %v2092 = vpack.c.bf16 %v2050, %v2047
  %v2093 = vpack.c.bf16 %v2058, %v2055
  %v2094 = vpack.c.bf16 %v2066, %v2063
  %v2095 = vpack.c.bf16 %v2074, %v2071
  %v2096 = vpack.c.bf16 %v2082, %v2079
  %v2097 = vld [vmem:[%s1] sm:$0xff]
  %v2098 = vld [vmem:[%s1 + $0x8] sm:$0xff]
  %v2099 = vld [vmem:[%s1 + $0x10] sm:$0xff]
  %v2100 = vld [vmem:[%s1 + $0x18] sm:$0xff]
  %v2101 = vld [vmem:[%s1 + $0x20] sm:$0xff]
  %v2102 = vld [vmem:[%s1 + $0x28] sm:$0xff]
  %v2103 = vld [vmem:[%s1 + $0x30] sm:$0xff]
  %v2104 = vld [vmem:[%s1 + $0x38] sm:$0xff]
  %v2105 = vld [vmem:[%s1 + $0x40] sm:$0xff]
  %v2106 = vld [vmem:[%s1 + $0x48] sm:$0xff]
  %v2107 = vld [vmem:[%s1 + $0x50] sm:$0xff]
  %v2108 = vld [vmem:[%s1 + $0x58] sm:$0xff]
  %v2109 = vld [vmem:[%s1 + $0x60] sm:$0xff]
  %v2110 = vld [vmem:[%s1 + $0x68] sm:$0xff]
  %v2111 = vld [vmem:[%s1 + $0x70] sm:$0xff]
  %v2112 = vld [vmem:[%s1 + $0x78] sm:$0xff]
  %v2113 = vld [vmem:[%s1 + $0x80] sm:$0xff]
  %v2114 = vld [vmem:[%s1 + $0x88] sm:$0xff]
  %v2115 = vld [vmem:[%s1 + $0x90] sm:$0xff]
  %v2116 = vld [vmem:[%s1 + $0x98] sm:$0xff]
  %v2117 = vld [vmem:[%s1 + $0xa0] sm:$0xff]
  %v2118 = vld [vmem:[%s1 + $0xa8] sm:$0xff]
  %v2119 = vld [vmem:[%s1 + $0xb0] sm:$0xff]
  %v2120 = vld [vmem:[%s1 + $0xb8] sm:$0xff]
  %v2121 = vld [vmem:[%s1 + $0xc0] sm:$0xff]
  %v2122 = vld [vmem:[%s1 + $0xc8] sm:$0xff]
  %v2123 = vld [vmem:[%s1 + $0xd0] sm:$0xff]
  %v2124 = vld [vmem:[%s1 + $0xd8] sm:$0xff]
  %v2125 = vld [vmem:[%s1 + $0xe0] sm:$0xff]
  %v2126 = vld [vmem:[%s1 + $0xe8] sm:$0xff]
  %v2127 = vld [vmem:[%s1 + $0xf0] sm:$0xff]
  %v2128 = vld [vmem:[%s1 + $0xf8] sm:$0xff]
  %v2129 = vld [vmem:[%s1 + $0x100] sm:$0xff]
  %v2130 = vld [vmem:[%s1 + $0x108] sm:$0xff]
  %v2131 = vld [vmem:[%s1 + $0x110] sm:$0xff]
  %v2132 = vld [vmem:[%s1 + $0x118] sm:$0xff]
  %v2133 = vld [vmem:[%s1 + $0x120] sm:$0xff]
  %v2134 = vld [vmem:[%s1 + $0x128] sm:$0xff]
  %v2135 = vld [vmem:[%s1 + $0x130] sm:$0xff]
  %v2136 = vld [vmem:[%s1 + $0x138] sm:$0xff]
  %v2137 = vld [vmem:[%s1 + $0x140] sm:$0xff]
  %v2138 = vld [vmem:[%s1 + $0x148] sm:$0xff]
  %v2139 = vld [vmem:[%s1 + $0x150] sm:$0xff]
  %v2140 = vld [vmem:[%s1 + $0x158] sm:$0xff]
  %v2141 = vld [vmem:[%s1 + $0x160] sm:$0xff]
  %v2142 = vld [vmem:[%s1 + $0x168] sm:$0xff]
  %v2143 = vld [vmem:[%s1 + $0x170] sm:$0xff]
  %v2144 = vld [vmem:[%s1 + $0x178] sm:$0xff]
  %v2145 = vld [vmem:[%s1 + $0x180] sm:$0xff]
  %v2146 = vld [vmem:[%s1 + $0x188] sm:$0xff]
  %v2147 = vld [vmem:[%s1 + $0x190] sm:$0xff]
  %v2148 = vld [vmem:[%s1 + $0x198] sm:$0xff]
  %v2149 = vld [vmem:[%s1 + $0x1a0] sm:$0xff]
  %v2150 = vld [vmem:[%s1 + $0x1a8] sm:$0xff]
  %v2151 = vld [vmem:[%s1 + $0x1b0] sm:$0xff]
  %v2152 = vld [vmem:[%s1 + $0x1b8] sm:$0xff]
  %v2153 = vld [vmem:[%s1 + $0x1c0] sm:$0xff]
  %v2154 = vld [vmem:[%s1 + $0x1c8] sm:$0xff]
  %v2155 = vld [vmem:[%s1 + $0x1d0] sm:$0xff]
  %v2156 = vld [vmem:[%s1 + $0x1d8] sm:$0xff]
  %v2157 = vld [vmem:[%s1 + $0x1e0] sm:$0xff]
  %v2158 = vld [vmem:[%s1 + $0x1e8] sm:$0xff]
  %v2159 = vld [vmem:[%s1 + $0x1f0] sm:$0xff]
  %v2160 = vld [vmem:[%s1 + $0x1f8] sm:$0xff]
  %v2161 = vld [vmem:[%s1 + $0x200] sm:$0xff]
  %v2162 = vld [vmem:[%s1 + $0x208] sm:$0xff]
  %v2163 = vld [vmem:[%s1 + $0x210] sm:$0xff]
  %v2164 = vld [vmem:[%s1 + $0x218] sm:$0xff]
  %v2165 = vld [vmem:[%s1 + $0x220] sm:$0xff]
  %v2166 = vld [vmem:[%s1 + $0x228] sm:$0xff]
  %v2167 = vld [vmem:[%s1 + $0x230] sm:$0xff]
  %v2168 = vld [vmem:[%s1 + $0x238] sm:$0xff]
  %v2169 = vld [vmem:[%s1 + $0x240] sm:$0xff]
  %v2170 = vld [vmem:[%s1 + $0x248] sm:$0xff]
  %v2171 = vld [vmem:[%s1 + $0x250] sm:$0xff]
  %v2172 = vld [vmem:[%s1 + $0x258] sm:$0xff]
  %v2173 = vld [vmem:[%s1 + $0x260] sm:$0xff]
  %v2174 = vld [vmem:[%s1 + $0x268] sm:$0xff]
  %v2175 = vld [vmem:[%s1 + $0x270] sm:$0xff]
  %v2176 = vld [vmem:[%s1 + $0x278] sm:$0xff]
  %v2177 = vld [vmem:[%s1 + $0x280] sm:$0xff]
  %v2178 = vld [vmem:[%s1 + $0x288] sm:$0xff]
  %v2179 = vld [vmem:[%s1 + $0x290] sm:$0xff]
  %v2180 = vld [vmem:[%s1 + $0x298] sm:$0xff]
  %v2181 = vld [vmem:[%s1 + $0x2a0] sm:$0xff]
  %v2182 = vld [vmem:[%s1 + $0x2a8] sm:$0xff]
  %v2183 = vld [vmem:[%s1 + $0x2b0] sm:$0xff]
  %v2184 = vld [vmem:[%s1 + $0x2b8] sm:$0xff]
  %v2185 = vld [vmem:[%s1 + $0x2c0] sm:$0xff]
  %v2186 = vld [vmem:[%s1 + $0x2c8] sm:$0xff]
  %v2187 = vld [vmem:[%s1 + $0x2d0] sm:$0xff]
  %v2188 = vld [vmem:[%s1 + $0x2d8] sm:$0xff]
  %v2189 = vld [vmem:[%s1 + $0x2e0] sm:$0xff]
  %v2190 = vld [vmem:[%s1 + $0x2e8] sm:$0xff]
  %v2191 = vld [vmem:[%s1 + $0x2f0] sm:$0xff]
  %v2192 = vld [vmem:[%s1 + $0x2f8] sm:$0xff]
  %v2193 = vld [vmem:[%s1 + $0x300] sm:$0xff]
  %v2194 = vld [vmem:[%s1 + $0x308] sm:$0xff]
  %v2195 = vld [vmem:[%s1 + $0x310] sm:$0xff]
  %v2196 = vld [vmem:[%s1 + $0x318] sm:$0xff]
  %v2197 = vld [vmem:[%s1 + $0x320] sm:$0xff]
  %v2198 = vld [vmem:[%s1 + $0x328] sm:$0xff]
  %v2199 = vld [vmem:[%s1 + $0x330] sm:$0xff]
  %v2200 = vld [vmem:[%s1 + $0x338] sm:$0xff]
  %v2201 = vld [vmem:[%s1 + $0x340] sm:$0xff]
  %v2202 = vld [vmem:[%s1 + $0x348] sm:$0xff]
  %v2203 = vld [vmem:[%s1 + $0x350] sm:$0xff]
  %v2204 = vld [vmem:[%s1 + $0x358] sm:$0xff]
  %v2205 = vld [vmem:[%s1 + $0x360] sm:$0xff]
  %v2206 = vld [vmem:[%s1 + $0x368] sm:$0xff]
  %v2207 = vld [vmem:[%s1 + $0x370] sm:$0xff]
  %v2208 = vld [vmem:[%s1 + $0x378] sm:$0xff]
  %v2209 = vld [vmem:[%s1 + $0x380] sm:$0xff]
  %v2210 = vld [vmem:[%s1 + $0x388] sm:$0xff]
  %v2211 = vld [vmem:[%s1 + $0x390] sm:$0xff]
  %v2212 = vld [vmem:[%s1 + $0x398] sm:$0xff]
  %v2213 = vld [vmem:[%s1 + $0x3a0] sm:$0xff]
  %v2214 = vld [vmem:[%s1 + $0x3a8] sm:$0xff]
  %v2215 = vld [vmem:[%s1 + $0x3b0] sm:$0xff]
  %v2216 = vld [vmem:[%s1 + $0x3b8] sm:$0xff]
  %v2217 = vld [vmem:[%s1 + $0x3c0] sm:$0xff]
  %v2218 = vld [vmem:[%s1 + $0x3c8] sm:$0xff]
  %v2219 = vld [vmem:[%s1 + $0x3d0] sm:$0xff]
  %v2220 = vld [vmem:[%s1 + $0x3d8] sm:$0xff]
  %v2221 = vld [vmem:[%s1 + $0x3e0] sm:$0xff]
  %v2222 = vld [vmem:[%s1 + $0x3e8] sm:$0xff]
  %v2223 = vld [vmem:[%s1 + $0x3f0] sm:$0xff]
  %v2224 = vld [vmem:[%s1 + $0x3f8] sm:$0xff]
  %v2225 = vld [vmem:[%s1 + $0x400] sm:$0xff]
  %v2226 = vld [vmem:[%s1 + $0x408] sm:$0xff]
  %v2227 = vld [vmem:[%s1 + $0x410] sm:$0xff]
  %v2228 = vld [vmem:[%s1 + $0x418] sm:$0xff]
  %v2229 = vld [vmem:[%s1 + $0x420] sm:$0xff]
  %v2230 = vld [vmem:[%s1 + $0x428] sm:$0xff]
  %v2231 = vld [vmem:[%s1 + $0x430] sm:$0xff]
  %v2232 = vld [vmem:[%s1 + $0x438] sm:$0xff]
  %v2233 = vld [vmem:[%s1 + $0x440] sm:$0xff]
  %v2234 = vld [vmem:[%s1 + $0x448] sm:$0xff]
  %v2235 = vld [vmem:[%s1 + $0x450] sm:$0xff]
  %v2236 = vld [vmem:[%s1 + $0x458] sm:$0xff]
  %v2237 = vld [vmem:[%s1 + $0x460] sm:$0xff]
  %v2238 = vld [vmem:[%s1 + $0x468] sm:$0xff]
  %v2239 = vld [vmem:[%s1 + $0x470] sm:$0xff]
  %v2240 = vld [vmem:[%s1 + $0x478] sm:$0xff]
  %v2241 = vld [vmem:[%s1 + $0x480] sm:$0xff]
  %v2242 = vld [vmem:[%s1 + $0x488] sm:$0xff]
  %v2243 = vld [vmem:[%s1 + $0x490] sm:$0xff]
  %v2244 = vld [vmem:[%s1 + $0x498] sm:$0xff]
  %v2245 = vld [vmem:[%s1 + $0x4a0] sm:$0xff]
  %v2246 = vld [vmem:[%s1 + $0x4a8] sm:$0xff]
  %v2247 = vld [vmem:[%s1 + $0x4b0] sm:$0xff]
  %v2248 = vld [vmem:[%s1 + $0x4b8] sm:$0xff]
  %v2249 = vld [vmem:[%s1 + $0x4c0] sm:$0xff]
  %v2250 = vld [vmem:[%s1 + $0x4c8] sm:$0xff]
  %v2251 = vld [vmem:[%s1 + $0x4d0] sm:$0xff]
  %v2252 = vld [vmem:[%s1 + $0x4d8] sm:$0xff]
  %v2253 = vld [vmem:[%s1 + $0x4e0] sm:$0xff]
  %v2254 = vld [vmem:[%s1 + $0x4e8] sm:$0xff]
  %v2255 = vld [vmem:[%s1 + $0x4f0] sm:$0xff]
  %v2256 = vld [vmem:[%s1 + $0x4f8] sm:$0xff]
  %v2257 = vld [vmem:[%s1 + $0x500] sm:$0xff]
  %v2258 = vld [vmem:[%s1 + $0x508] sm:$0xff]
  %v2259 = vld [vmem:[%s1 + $0x510] sm:$0xff]
  %v2260 = vld [vmem:[%s1 + $0x518] sm:$0xff]
  %v2261 = vld [vmem:[%s1 + $0x520] sm:$0xff]
  %v2262 = vld [vmem:[%s1 + $0x528] sm:$0xff]
  %v2263 = vld [vmem:[%s1 + $0x530] sm:$0xff]
  %v2264 = vld [vmem:[%s1 + $0x538] sm:$0xff]
  %v2433 = vunpack.c.l.b16 %v2097
  %v2434 = vunpack.c.h.b16 %v2097
  %v2435 = vunpack.c.l.b16 %v2098
  %v2436 = vunpack.c.h.b16 %v2098
  %v2437 = vunpack.c.l.b16 %v2099
  %v2438 = vunpack.c.h.b16 %v2099
  %v2439 = vunpack.c.l.b16 %v2100
  %v2440 = vunpack.c.h.b16 %v2100
  %v2441 = vunpack.c.l.b16 %v2101
  %v2442 = vunpack.c.h.b16 %v2101
  %v2443 = vunpack.c.l.b16 %v2102
  %v2444 = vunpack.c.h.b16 %v2102
  %v2445 = vunpack.c.l.b16 %v2103
  %v2446 = vunpack.c.h.b16 %v2103
  %v2447 = vunpack.c.l.b16 %v2104
  %v2448 = vunpack.c.h.b16 %v2104
  %v2449 = vunpack.c.l.b16 %v2105
  %v2450 = vunpack.c.h.b16 %v2105
  %v2451 = vunpack.c.l.b16 %v2106
  %v2452 = vunpack.c.h.b16 %v2106
  %v2453 = vunpack.c.l.b16 %v2107
  %v2454 = vunpack.c.h.b16 %v2107
  %v2455 = vunpack.c.l.b16 %v2108
  %v2456 = vunpack.c.h.b16 %v2108
  %v2457 = vunpack.c.l.b16 %v2109
  %v2458 = vunpack.c.h.b16 %v2109
  %v2459 = vunpack.c.l.b16 %v2110
  %v2460 = vunpack.c.h.b16 %v2110
  %v2461 = vunpack.c.l.b16 %v2111
  %v2462 = vunpack.c.h.b16 %v2111
  %v2463 = vunpack.c.l.b16 %v2112
  %v2464 = vunpack.c.h.b16 %v2112
  %v2465 = vunpack.c.l.b16 %v2113
  %v2466 = vunpack.c.h.b16 %v2113
  %v2467 = vunpack.c.l.b16 %v2114
  %v2468 = vunpack.c.h.b16 %v2114
  %v2469 = vunpack.c.l.b16 %v2115
  %v2470 = vunpack.c.h.b16 %v2115
  %v2471 = vunpack.c.l.b16 %v2116
  %v2472 = vunpack.c.h.b16 %v2116
  %v2473 = vunpack.c.l.b16 %v2117
  %v2474 = vunpack.c.h.b16 %v2117
  %v2475 = vunpack.c.l.b16 %v2118
  %v2476 = vunpack.c.h.b16 %v2118
  %v2477 = vunpack.c.l.b16 %v2119
  %v2478 = vunpack.c.h.b16 %v2119
  %v2479 = vunpack.c.l.b16 %v2120
  %v2480 = vunpack.c.h.b16 %v2120
  %v2481 = vunpack.c.l.b16 %v2121
  %v2482 = vunpack.c.h.b16 %v2121
  %v2483 = vunpack.c.l.b16 %v2122
  %v2484 = vunpack.c.h.b16 %v2122
  %v2485 = vunpack.c.l.b16 %v2123
  %v2486 = vunpack.c.h.b16 %v2123
  %v2487 = vunpack.c.l.b16 %v2124
  %v2488 = vunpack.c.h.b16 %v2124
  %v2489 = vunpack.c.l.b16 %v2125
  %v2490 = vunpack.c.h.b16 %v2125
  %v2491 = vunpack.c.l.b16 %v2126
  %v2492 = vunpack.c.h.b16 %v2126
  %v2493 = vunpack.c.l.b16 %v2127
  %v2494 = vunpack.c.h.b16 %v2127
  %v2495 = vunpack.c.l.b16 %v2128
  %v2496 = vunpack.c.h.b16 %v2128
  %v2497 = vunpack.c.l.b16 %v2129
  %v2498 = vunpack.c.h.b16 %v2129
  %v2499 = vunpack.c.l.b16 %v2130
  %v2500 = vunpack.c.h.b16 %v2130
  %v2501 = vunpack.c.l.b16 %v2131
  %v2502 = vunpack.c.h.b16 %v2131
  %v2503 = vunpack.c.l.b16 %v2132
  %v2504 = vunpack.c.h.b16 %v2132
  %v2505 = vunpack.c.l.b16 %v2133
  %v2506 = vunpack.c.h.b16 %v2133
  %v2507 = vunpack.c.l.b16 %v2134
  %v2508 = vunpack.c.h.b16 %v2134
  %v2509 = vunpack.c.l.b16 %v2135
  %v2510 = vunpack.c.h.b16 %v2135
  %v2511 = vunpack.c.l.b16 %v2136
  %v2512 = vunpack.c.h.b16 %v2136
  %v2513 = vunpack.c.l.b16 %v2137
  %v2514 = vunpack.c.h.b16 %v2137
  %v2515 = vunpack.c.l.b16 %v2138
  %v2516 = vunpack.c.h.b16 %v2138
  %v2517 = vunpack.c.l.b16 %v2139
  %v2518 = vunpack.c.h.b16 %v2139
  %v2519 = vunpack.c.l.b16 %v2140
  %v2520 = vunpack.c.h.b16 %v2140
  %v2521 = vunpack.c.l.b16 %v2141
  %v2522 = vunpack.c.h.b16 %v2141
  %v2523 = vunpack.c.l.b16 %v2142
  %v2524 = vunpack.c.h.b16 %v2142
  %v2525 = vunpack.c.l.b16 %v2143
  %v2526 = vunpack.c.h.b16 %v2143
  %v2527 = vunpack.c.l.b16 %v2144
  %v2528 = vunpack.c.h.b16 %v2144
  %v2529 = vunpack.c.l.b16 %v2145
  %v2530 = vunpack.c.h.b16 %v2145
  %v2531 = vunpack.c.l.b16 %v2146
  %v2532 = vunpack.c.h.b16 %v2146
  %v2533 = vunpack.c.l.b16 %v2147
  %v2534 = vunpack.c.h.b16 %v2147
  %v2535 = vunpack.c.l.b16 %v2148
  %v2536 = vunpack.c.h.b16 %v2148
  %v2537 = vunpack.c.l.b16 %v2149
  %v2538 = vunpack.c.h.b16 %v2149
  %v2539 = vunpack.c.l.b16 %v2150
  %v2540 = vunpack.c.h.b16 %v2150
  %v2541 = vunpack.c.l.b16 %v2151
  %v2542 = vunpack.c.h.b16 %v2151
  %v2543 = vunpack.c.l.b16 %v2152
  %v2544 = vunpack.c.h.b16 %v2152
  %v2545 = vunpack.c.l.b16 %v2153
  %v2546 = vunpack.c.h.b16 %v2153
  %v2547 = vunpack.c.l.b16 %v2154
  %v2548 = vunpack.c.h.b16 %v2154
  %v2549 = vunpack.c.l.b16 %v2155
  %v2550 = vunpack.c.h.b16 %v2155
  %v2551 = vunpack.c.l.b16 %v2156
  %v2552 = vunpack.c.h.b16 %v2156
  %v2553 = vunpack.c.l.b16 %v2157
  %v2554 = vunpack.c.h.b16 %v2157
  %v2555 = vunpack.c.l.b16 %v2158
  %v2556 = vunpack.c.h.b16 %v2158
  %v2557 = vunpack.c.l.b16 %v2159
  %v2558 = vunpack.c.h.b16 %v2159
  %v2559 = vunpack.c.l.b16 %v2160
  %v2560 = vunpack.c.h.b16 %v2160
  %v2561 = vunpack.c.l.b16 %v2161
  %v2562 = vunpack.c.h.b16 %v2161
  %v2563 = vunpack.c.l.b16 %v2162
  %v2564 = vunpack.c.h.b16 %v2162
  %v2565 = vunpack.c.l.b16 %v2163
  %v2566 = vunpack.c.h.b16 %v2163
  %v2567 = vunpack.c.l.b16 %v2164
  %v2568 = vunpack.c.h.b16 %v2164
  %v2569 = vunpack.c.l.b16 %v2165
  %v2570 = vunpack.c.h.b16 %v2165
  %v2571 = vunpack.c.l.b16 %v2166
  %v2572 = vunpack.c.h.b16 %v2166
  %v2573 = vunpack.c.l.b16 %v2167
  %v2574 = vunpack.c.h.b16 %v2167
  %v2575 = vunpack.c.l.b16 %v2168
  %v2576 = vunpack.c.h.b16 %v2168
  %v2577 = vunpack.c.l.b16 %v2169
  %v2578 = vunpack.c.h.b16 %v2169
  %v2579 = vunpack.c.l.b16 %v2170
  %v2580 = vunpack.c.h.b16 %v2170
  %v2581 = vunpack.c.l.b16 %v2171
  %v2582 = vunpack.c.h.b16 %v2171
  %v2583 = vunpack.c.l.b16 %v2172
  %v2584 = vunpack.c.h.b16 %v2172
  %v2585 = vunpack.c.l.b16 %v2173
  %v2586 = vunpack.c.h.b16 %v2173
  %v2587 = vunpack.c.l.b16 %v2174
  %v2588 = vunpack.c.h.b16 %v2174
  %v2589 = vunpack.c.l.b16 %v2175
  %v2590 = vunpack.c.h.b16 %v2175
  %v2591 = vunpack.c.l.b16 %v2176
  %v2592 = vunpack.c.h.b16 %v2176
  %v2593 = vunpack.c.l.b16 %v2177
  %v2594 = vunpack.c.h.b16 %v2177
  %v2595 = vunpack.c.l.b16 %v2178
  %v2596 = vunpack.c.h.b16 %v2178
  %v2597 = vunpack.c.l.b16 %v2179
  %v2598 = vunpack.c.h.b16 %v2179
  %v2599 = vunpack.c.l.b16 %v2180
  %v2600 = vunpack.c.h.b16 %v2180
  %v2601 = vunpack.c.l.b16 %v2181
  %v2602 = vunpack.c.h.b16 %v2181
  %v2603 = vunpack.c.l.b16 %v2182
  %v2604 = vunpack.c.h.b16 %v2182
  %v2605 = vunpack.c.l.b16 %v2183
  %v2606 = vunpack.c.h.b16 %v2183
  %v2607 = vunpack.c.l.b16 %v2184
  %v2608 = vunpack.c.h.b16 %v2184
  %v2609 = vunpack.c.l.b16 %v2185
  %v2610 = vunpack.c.h.b16 %v2185
  %v2611 = vunpack.c.l.b16 %v2186
  %v2612 = vunpack.c.h.b16 %v2186
  %v2613 = vunpack.c.l.b16 %v2187
  %v2614 = vunpack.c.h.b16 %v2187
  %v2615 = vunpack.c.l.b16 %v2188
  %v2616 = vunpack.c.h.b16 %v2188
  %v2617 = vunpack.c.l.b16 %v2189
  %v2618 = vunpack.c.h.b16 %v2189
  %v2619 = vunpack.c.l.b16 %v2190
  %v2620 = vunpack.c.h.b16 %v2190
  %v2621 = vunpack.c.l.b16 %v2191
  %v2622 = vunpack.c.h.b16 %v2191
  %v2623 = vunpack.c.l.b16 %v2192
  %v2624 = vunpack.c.h.b16 %v2192
  %v2625 = vunpack.c.l.b16 %v2193
  %v2626 = vunpack.c.h.b16 %v2193
  %v2627 = vunpack.c.l.b16 %v2194
  %v2628 = vunpack.c.h.b16 %v2194
  %v2629 = vunpack.c.l.b16 %v2195
  %v2630 = vunpack.c.h.b16 %v2195
  %v2631 = vunpack.c.l.b16 %v2196
  %v2632 = vunpack.c.h.b16 %v2196
  %v2633 = vunpack.c.l.b16 %v2197
  %v2634 = vunpack.c.h.b16 %v2197
  %v2635 = vunpack.c.l.b16 %v2198
  %v2636 = vunpack.c.h.b16 %v2198
  %v2637 = vunpack.c.l.b16 %v2199
  %v2638 = vunpack.c.h.b16 %v2199
  %v2639 = vunpack.c.l.b16 %v2200
  %v2640 = vunpack.c.h.b16 %v2200
  %v2641 = vunpack.c.l.b16 %v2201
  %v2642 = vunpack.c.h.b16 %v2201
  %v2643 = vunpack.c.l.b16 %v2202
  %v2644 = vunpack.c.h.b16 %v2202
  %v2645 = vunpack.c.l.b16 %v2203
  %v2646 = vunpack.c.h.b16 %v2203
  %v2647 = vunpack.c.l.b16 %v2204
  %v2648 = vunpack.c.h.b16 %v2204
  %v2649 = vunpack.c.l.b16 %v2205
  %v2650 = vunpack.c.h.b16 %v2205
  %v2651 = vunpack.c.l.b16 %v2206
  %v2652 = vunpack.c.h.b16 %v2206
  %v2653 = vunpack.c.l.b16 %v2207
  %v2654 = vunpack.c.h.b16 %v2207
  %v2655 = vunpack.c.l.b16 %v2208
  %v2656 = vunpack.c.h.b16 %v2208
  %v2657 = vunpack.c.l.b16 %v2209
  %v2658 = vunpack.c.h.b16 %v2209
  %v2659 = vunpack.c.l.b16 %v2210
  %v2660 = vunpack.c.h.b16 %v2210
  %v2661 = vunpack.c.l.b16 %v2211
  %v2662 = vunpack.c.h.b16 %v2211
  %v2663 = vunpack.c.l.b16 %v2212
  %v2664 = vunpack.c.h.b16 %v2212
  %v2665 = vunpack.c.l.b16 %v2213
  %v2666 = vunpack.c.h.b16 %v2213
  %v2667 = vunpack.c.l.b16 %v2214
  %v2668 = vunpack.c.h.b16 %v2214
  %v2669 = vunpack.c.l.b16 %v2215
  %v2670 = vunpack.c.h.b16 %v2215
  %v2671 = vunpack.c.l.b16 %v2216
  %v2672 = vunpack.c.h.b16 %v2216
  %v2673 = vunpack.c.l.b16 %v2217
  %v2674 = vunpack.c.h.b16 %v2217
  %v2675 = vunpack.c.l.b16 %v2218
  %v2676 = vunpack.c.h.b16 %v2218
  %v2677 = vunpack.c.l.b16 %v2219
  %v2678 = vunpack.c.h.b16 %v2219
  %v2679 = vunpack.c.l.b16 %v2220
  %v2680 = vunpack.c.h.b16 %v2220
  %v2681 = vunpack.c.l.b16 %v2221
  %v2682 = vunpack.c.h.b16 %v2221
  %v2683 = vunpack.c.l.b16 %v2222
  %v2684 = vunpack.c.h.b16 %v2222
  %v2685 = vunpack.c.l.b16 %v2223
  %v2686 = vunpack.c.h.b16 %v2223
  %v2687 = vunpack.c.l.b16 %v2224
  %v2688 = vunpack.c.h.b16 %v2224
  %v2689 = vunpack.c.l.b16 %v2225
  %v2690 = vunpack.c.h.b16 %v2225
  %v2691 = vunpack.c.l.b16 %v2226
  %v2692 = vunpack.c.h.b16 %v2226
  %v2693 = vunpack.c.l.b16 %v2227
  %v2694 = vunpack.c.h.b16 %v2227
  %v2695 = vunpack.c.l.b16 %v2228
  %v2696 = vunpack.c.h.b16 %v2228
  %v2697 = vunpack.c.l.b16 %v2229
  %v2698 = vunpack.c.h.b16 %v2229
  %v2699 = vunpack.c.l.b16 %v2230
  %v2700 = vunpack.c.h.b16 %v2230
  %v2701 = vunpack.c.l.b16 %v2231
  %v2702 = vunpack.c.h.b16 %v2231
  %v2703 = vunpack.c.l.b16 %v2232
  %v2704 = vunpack.c.h.b16 %v2232
  %v2705 = vunpack.c.l.b16 %v2233
  %v2706 = vunpack.c.h.b16 %v2233
  %v2707 = vunpack.c.l.b16 %v2234
  %v2708 = vunpack.c.h.b16 %v2234
  %v2709 = vunpack.c.l.b16 %v2235
  %v2710 = vunpack.c.h.b16 %v2235
  %v2711 = vunpack.c.l.b16 %v2236
  %v2712 = vunpack.c.h.b16 %v2236
  %v2713 = vunpack.c.l.b16 %v2237
  %v2714 = vunpack.c.h.b16 %v2237
  %v2715 = vunpack.c.l.b16 %v2238
  %v2716 = vunpack.c.h.b16 %v2238
  %v2717 = vunpack.c.l.b16 %v2239
  %v2718 = vunpack.c.h.b16 %v2239
  %v2719 = vunpack.c.l.b16 %v2240
  %v2720 = vunpack.c.h.b16 %v2240
  %v2721 = vunpack.c.l.b16 %v2241
  %v2722 = vunpack.c.h.b16 %v2241
  %v2723 = vunpack.c.l.b16 %v2242
  %v2724 = vunpack.c.h.b16 %v2242
  %v2725 = vunpack.c.l.b16 %v2243
  %v2726 = vunpack.c.h.b16 %v2243
  %v2727 = vunpack.c.l.b16 %v2244
  %v2728 = vunpack.c.h.b16 %v2244
  %v2729 = vunpack.c.l.b16 %v2245
  %v2730 = vunpack.c.h.b16 %v2245
  %v2731 = vunpack.c.l.b16 %v2246
  %v2732 = vunpack.c.h.b16 %v2246
  %v2733 = vunpack.c.l.b16 %v2247
  %v2734 = vunpack.c.h.b16 %v2247
  %v2735 = vunpack.c.l.b16 %v2248
  %v2736 = vunpack.c.h.b16 %v2248
  %v2737 = vunpack.c.l.b16 %v2249
  %v2738 = vunpack.c.h.b16 %v2249
  %v2739 = vunpack.c.l.b16 %v2250
  %v2740 = vunpack.c.h.b16 %v2250
  %v2741 = vunpack.c.l.b16 %v2251
  %v2742 = vunpack.c.h.b16 %v2251
  %v2743 = vunpack.c.l.b16 %v2252
  %v2744 = vunpack.c.h.b16 %v2252
  %v2745 = vunpack.c.l.b16 %v2253
  %v2746 = vunpack.c.h.b16 %v2253
  %v2747 = vunpack.c.l.b16 %v2254
  %v2748 = vunpack.c.h.b16 %v2254
  %v2749 = vunpack.c.l.b16 %v2255
  %v2750 = vunpack.c.h.b16 %v2255
  %v2751 = vunpack.c.l.b16 %v2256
  %v2752 = vunpack.c.h.b16 %v2256
  %v2753 = vunpack.c.l.b16 %v2257
  %v2754 = vunpack.c.h.b16 %v2257
  %v2755 = vunpack.c.l.b16 %v2258
  %v2756 = vunpack.c.h.b16 %v2258
  %v2757 = vunpack.c.l.b16 %v2259
  %v2758 = vunpack.c.h.b16 %v2259
  %v2759 = vunpack.c.l.b16 %v2260
  %v2760 = vunpack.c.h.b16 %v2260
  %v2761 = vunpack.c.l.b16 %v2261
  %v2762 = vunpack.c.h.b16 %v2261
  %v2763 = vunpack.c.l.b16 %v2262
  %v2764 = vunpack.c.h.b16 %v2262
  %v2765 = vunpack.c.l.b16 %v2263
  %v2766 = vunpack.c.h.b16 %v2263
  %v2767 = vunpack.c.l.b16 %v2264
  %v2768 = vunpack.c.h.b16 %v2264
  %v2769 = vpack.c.b16 %v2447, %v2433
  %v2770 = vpack.c.b16 %v2448, %v2434
  %v2771 = vpack.c.b16 %v2449, %v2435
  %v2772 = vpack.c.b16 %v2450, %v2436
  %v2773 = vpack.c.b16 %v2451, %v2437
  %v2774 = vpack.c.b16 %v2452, %v2438
  %v2775 = vpack.c.b16 %v2453, %v2439
  %v2776 = vpack.c.b16 %v2454, %v2440
  %v2777 = vpack.c.b16 %v2455, %v2441
  %v2778 = vpack.c.b16 %v2456, %v2442
  %v2779 = vpack.c.b16 %v2457, %v2443
  %v2780 = vpack.c.b16 %v2458, %v2444
  %v2781 = vpack.c.b16 %v2459, %v2445
  %v2782 = vpack.c.b16 %v2460, %v2446
  %v2783 = vpack.c.b16 %v2475, %v2461
  %v2784 = vpack.c.b16 %v2476, %v2462
  %v2785 = vpack.c.b16 %v2477, %v2463
  %v2786 = vpack.c.b16 %v2478, %v2464
  %v2787 = vpack.c.b16 %v2479, %v2465
  %v2788 = vpack.c.b16 %v2480, %v2466
  %v2789 = vpack.c.b16 %v2481, %v2467
  %v2790 = vpack.c.b16 %v2482, %v2468
  %v2791 = vpack.c.b16 %v2483, %v2469
  %v2792 = vpack.c.b16 %v2484, %v2470
  %v2793 = vpack.c.b16 %v2485, %v2471
  %v2794 = vpack.c.b16 %v2486, %v2472
  %v2795 = vpack.c.b16 %v2487, %v2473
  %v2796 = vpack.c.b16 %v2488, %v2474
  %v2797 = vpack.c.b16 %v2503, %v2489
  %v2798 = vpack.c.b16 %v2504, %v2490
  %v2799 = vpack.c.b16 %v2505, %v2491
  %v2800 = vpack.c.b16 %v2506, %v2492
  %v2801 = vpack.c.b16 %v2507, %v2493
  %v2802 = vpack.c.b16 %v2508, %v2494
  %v2803 = vpack.c.b16 %v2509, %v2495
  %v2804 = vpack.c.b16 %v2510, %v2496
  %v2805 = vpack.c.b16 %v2511, %v2497
  %v2806 = vpack.c.b16 %v2512, %v2498
  %v2807 = vpack.c.b16 %v2513, %v2499
  %v2808 = vpack.c.b16 %v2514, %v2500
  %v2809 = vpack.c.b16 %v2515, %v2501
  %v2810 = vpack.c.b16 %v2516, %v2502
  %v2811 = vpack.c.b16 %v2531, %v2517
  %v2812 = vpack.c.b16 %v2532, %v2518
  %v2813 = vpack.c.b16 %v2533, %v2519
  %v2814 = vpack.c.b16 %v2534, %v2520
  %v2815 = vpack.c.b16 %v2535, %v2521
  %v2816 = vpack.c.b16 %v2536, %v2522
  %v2817 = vpack.c.b16 %v2537, %v2523
  %v2818 = vpack.c.b16 %v2538, %v2524
  %v2819 = vpack.c.b16 %v2539, %v2525
  %v2820 = vpack.c.b16 %v2540, %v2526
  %v2821 = vpack.c.b16 %v2541, %v2527
  %v2822 = vpack.c.b16 %v2542, %v2528
  %v2823 = vpack.c.b16 %v2543, %v2529
  %v2824 = vpack.c.b16 %v2544, %v2530
  %v2825 = vpack.c.b16 %v2559, %v2545
  %v2826 = vpack.c.b16 %v2560, %v2546
  %v2827 = vpack.c.b16 %v2561, %v2547
  %v2828 = vpack.c.b16 %v2562, %v2548
  %v2829 = vpack.c.b16 %v2563, %v2549
  %v2830 = vpack.c.b16 %v2564, %v2550
  %v2831 = vpack.c.b16 %v2565, %v2551
  %v2832 = vpack.c.b16 %v2566, %v2552
  %v2833 = vpack.c.b16 %v2567, %v2553
  %v2834 = vpack.c.b16 %v2568, %v2554
  %v2835 = vpack.c.b16 %v2569, %v2555
  %v2836 = vpack.c.b16 %v2570, %v2556
  %v2837 = vpack.c.b16 %v2571, %v2557
  %v2838 = vpack.c.b16 %v2572, %v2558
  %v2839 = vpack.c.b16 %v2587, %v2573
  %v2840 = vpack.c.b16 %v2588, %v2574
  %v2841 = vpack.c.b16 %v2589, %v2575
  %v2842 = vpack.c.b16 %v2590, %v2576
  %v2843 = vpack.c.b16 %v2591, %v2577
  %v2844 = vpack.c.b16 %v2592, %v2578
  %v2845 = vpack.c.b16 %v2593, %v2579
  %v2846 = vpack.c.b16 %v2594, %v2580
  %v2847 = vpack.c.b16 %v2595, %v2581
  %v2848 = vpack.c.b16 %v2596, %v2582
  %v2849 = vpack.c.b16 %v2597, %v2583
  %v2850 = vpack.c.b16 %v2598, %v2584
  %v2851 = vpack.c.b16 %v2599, %v2585
  %v2852 = vpack.c.b16 %v2600, %v2586
  %v2853 = vpack.c.b16 %v2615, %v2601
  %v2854 = vpack.c.b16 %v2616, %v2602
  %v2855 = vpack.c.b16 %v2617, %v2603
  %v2856 = vpack.c.b16 %v2618, %v2604
  %v2857 = vpack.c.b16 %v2619, %v2605
  %v2858 = vpack.c.b16 %v2620, %v2606
  %v2859 = vpack.c.b16 %v2621, %v2607
  %v2860 = vpack.c.b16 %v2622, %v2608
  %v2861 = vpack.c.b16 %v2623, %v2609
  %v2862 = vpack.c.b16 %v2624, %v2610
  %v2863 = vpack.c.b16 %v2625, %v2611
  %v2864 = vpack.c.b16 %v2626, %v2612
  %v2865 = vpack.c.b16 %v2627, %v2613
  %v2866 = vpack.c.b16 %v2628, %v2614
  %v2867 = vpack.c.b16 %v2643, %v2629
  %v2868 = vpack.c.b16 %v2644, %v2630
  %v2869 = vpack.c.b16 %v2645, %v2631
  %v2870 = vpack.c.b16 %v2646, %v2632
  %v2871 = vpack.c.b16 %v2647, %v2633
  %v2872 = vpack.c.b16 %v2648, %v2634
  %v2873 = vpack.c.b16 %v2649, %v2635
  %v2874 = vpack.c.b16 %v2650, %v2636
  %v2875 = vpack.c.b16 %v2651, %v2637
  %v2876 = vpack.c.b16 %v2652, %v2638
  %v2877 = vpack.c.b16 %v2653, %v2639
  %v2878 = vpack.c.b16 %v2654, %v2640
  %v2879 = vpack.c.b16 %v2655, %v2641
  %v2880 = vpack.c.b16 %v2656, %v2642
  %v2881 = vpack.c.b16 %v2671, %v2657
  %v2882 = vpack.c.b16 %v2672, %v2658
  %v2883 = vpack.c.b16 %v2673, %v2659
  %v2884 = vpack.c.b16 %v2674, %v2660
  %v2885 = vpack.c.b16 %v2675, %v2661
  %v2886 = vpack.c.b16 %v2676, %v2662
  %v2887 = vpack.c.b16 %v2677, %v2663
  %v2888 = vpack.c.b16 %v2678, %v2664
  %v2889 = vpack.c.b16 %v2679, %v2665
  %v2890 = vpack.c.b16 %v2680, %v2666
  %v2891 = vpack.c.b16 %v2681, %v2667
  %v2892 = vpack.c.b16 %v2682, %v2668
  %v2893 = vpack.c.b16 %v2683, %v2669
  %v2894 = vpack.c.b16 %v2684, %v2670
  %v2895 = vpack.c.b16 %v2699, %v2685
  %v2896 = vpack.c.b16 %v2700, %v2686
  %v2897 = vpack.c.b16 %v2701, %v2687
  %v2898 = vpack.c.b16 %v2702, %v2688
  %v2899 = vpack.c.b16 %v2703, %v2689
  %v2900 = vpack.c.b16 %v2704, %v2690
  %v2901 = vpack.c.b16 %v2705, %v2691
  %v2902 = vpack.c.b16 %v2706, %v2692
  %v2903 = vpack.c.b16 %v2707, %v2693
  %v2904 = vpack.c.b16 %v2708, %v2694
  %v2905 = vpack.c.b16 %v2709, %v2695
  %v2906 = vpack.c.b16 %v2710, %v2696
  %v2907 = vpack.c.b16 %v2711, %v2697
  %v2908 = vpack.c.b16 %v2712, %v2698
  %v2909 = vpack.c.b16 %v2727, %v2713
  %v2910 = vpack.c.b16 %v2728, %v2714
  %v2911 = vpack.c.b16 %v2729, %v2715
  %v2912 = vpack.c.b16 %v2730, %v2716
  %v2913 = vpack.c.b16 %v2731, %v2717
  %v2914 = vpack.c.b16 %v2732, %v2718
  %v2915 = vpack.c.b16 %v2733, %v2719
  %v2916 = vpack.c.b16 %v2734, %v2720
  %v2917 = vpack.c.b16 %v2735, %v2721
  %v2918 = vpack.c.b16 %v2736, %v2722
  %v2919 = vpack.c.b16 %v2737, %v2723
  %v2920 = vpack.c.b16 %v2738, %v2724
  %v2921 = vpack.c.b16 %v2739, %v2725
  %v2922 = vpack.c.b16 %v2740, %v2726
  %v2923 = vpack.c.b16 %v2755, %v2741
  %v2924 = vpack.c.b16 %v2756, %v2742
  %v2925 = vpack.c.b16 %v2757, %v2743
  %v2926 = vpack.c.b16 %v2758, %v2744
  %v2927 = vpack.c.b16 %v2759, %v2745
  %v2928 = vpack.c.b16 %v2760, %v2746
  %v2929 = vpack.c.b16 %v2761, %v2747
  %v2930 = vpack.c.b16 %v2762, %v2748
  %v2931 = vpack.c.b16 %v2763, %v2749
  %v2932 = vpack.c.b16 %v2764, %v2750
  %v2933 = vpack.c.b16 %v2765, %v2751
  %v2934 = vpack.c.b16 %v2766, %v2752
  %v2935 = vpack.c.b16 %v2767, %v2753
  %v2936 = vpack.c.b16 %v2768, %v2754
  %vm3093 = vcmask 523264
  %v3095 = vsel %vm3093, %v2782, 0
  %v3098 = vsel %vm3093, %v2796, 0
  %v3101 = vsel %vm3093, %v2810, 0
  %v3104 = vsel %vm3093, %v2824, 0
  %v3107 = vsel %vm3093, %v2838, 0
  %v3110 = vsel %vm3093, %v2852, 0
  %v3113 = vsel %vm3093, %v2866, 0
  %v3116 = vsel %vm3093, %v2880, 0
  %v3119 = vsel %vm3093, %v2894, 0
  %v3122 = vsel %vm3093, %v2908, 0
  %v3125 = vsel %vm3093, %v2922, 0
  %v3128 = vsel %vm3093, %v2936, 0
  %3130 = vmatprep.subr.bf16.mxu0 0
  %3131 = vmatpush1.bf16.msra.mxu0 %v373
  %3132 = vmatprep.subr.bf16.mxu0 0
  %3133 = vmatpush1.bf16.msra.mxu0 %v374
  %3134 = vmatprep.subr.bf16.mxu0 0
  %3135 = vmatpush1.bf16.msra.mxu0 %v375
  %3136 = vmatprep.subr.bf16.mxu0 0
  %3137 = vmatpush1.bf16.msra.mxu0 %v376
  %3138 = vmatprep.subr.bf16.mxu0 0
  %3139 = vmatpush1.bf16.msra.mxu0 %v377
  %3140 = vmatprep.subr.bf16.mxu0 0
  %3141 = vmatpush1.bf16.msra.mxu0 %v378
  %3142 = vmatprep.subr.bf16.mxu0 0
  %3143 = vmatpush1.bf16.msra.mxu0 %v379
  %3144 = vmatprep.subr.bf16.mxu0 0
  %3145 = vmatpush1.bf16.msra.mxu0 %v380
  %3146 = vmatprep.subr.bf16.mxu0 0
  %3147 = vmatpush1.bf16.msra.mxu0 %v381
  %3148 = vmatprep.subr.bf16.mxu0 0
  %3149 = vmatpush1.bf16.msra.mxu0 %v382
  %3150 = vmatprep.subr.bf16.mxu0 0
  %3151 = vmatpush1.bf16.msra.mxu0 %v383
  %3152 = vmatprep.subr.bf16.mxu0 0
  %3153 = vmatpush1.bf16.msra.mxu0 %v384
  %3154 = vmatprep.subr.bf16.mxu0 0
  %3155 = vmatpush1.bf16.msra.mxu0 %v587
  %3156 = vmatprep.subr.bf16.mxu0 0
  %3157 = vmatpush1.bf16.msra.mxu0 %v588
  %3158 = vmatprep.subr.bf16.mxu0 0
  %3159 = vmatpush1.bf16.msra.mxu0 %v589
  %3160 = vmatprep.subr.bf16.mxu0 0
  %3161 = vmatpush1.bf16.msra.mxu0 %v590
  %3162 = vmatprep.mubr.bf16.mxu0 %v2770
  %3163 = vmatmul.mubr.bf16.gmra.mrb[0].mxu0 %v2769
  %v3164 = vpop.f32.mrb[0].mxu0
  %v3165 = vadd.f32 0.0, %v3164
  %v3166 = vpop.f32.mrb[0].mxu0
  %v3167 = vpop.f32.mrb[0].mxu0
  %v3168 = vadd.f32 0.0, %v3167
  %v3169 = vpop.f32.mrb[0].mxu0
  %3170 = vmatprep.mubr.bf16.mxu0 %v2784
  %3171 = vmatmul.mubr.bf16.gmra.mrb[0].mxu0 %v2783
  %v3172 = vpop.f32.mrb[0].mxu0
  %v3173 = vadd.f32 0.0, %v3172
  %v3174 = vpop.f32.mrb[0].mxu0
  %v3175 = vpop.f32.mrb[0].mxu0
  %v3176 = vadd.f32 0.0, %v3175
  %v3177 = vpop.f32.mrb[0].mxu0
  %3178 = vmatprep.mubr.bf16.mxu0 %v2798
  %3179 = vmatmul.mubr.bf16.gmra.mrb[0].mxu0 %v2797
  %v3180 = vpop.f32.mrb[0].mxu0
  %v3181 = vadd.f32 0.0, %v3180
  %v3182 = vpop.f32.mrb[0].mxu0
  %v3183 = vpop.f32.mrb[0].mxu0
  %v3184 = vadd.f32 0.0, %v3183
  %v3185 = vpop.f32.mrb[0].mxu0
  %3186 = vmatprep.mubr.bf16.mxu0 %v2812
  %3187 = vmatmul.mubr.bf16.gmra.mrb[0].mxu0 %v2811
  %v3188 = vpop.f32.mrb[0].mxu0
  %v3189 = vadd.f32 0.0, %v3188
  %v3190 = vpop.f32.mrb[0].mxu0
  %v3191 = vpop.f32.mrb[0].mxu0
  %v3192 = vadd.f32 0.0, %v3191
  %v3193 = vpop.f32.mrb[0].mxu0
  %3194 = vmatprep.mubr.bf16.mxu0 %v2826
  %3195 = vmatmul.mubr.bf16.gmra.mrb[0].mxu0 %v2825
  %v3196 = vpop.f32.mrb[0].mxu0
  %v3197 = vadd.f32 0.0, %v3196
  %v3198 = vpop.f32.mrb[0].mxu0
  %v3199 = vpop.f32.mrb[0].mxu0
  %v3200 = vadd.f32 0.0, %v3199
  %v3201 = vpop.f32.mrb[0].mxu0
  %3202 = vmatprep.mubr.bf16.mxu0 %v2840
  %3203 = vmatmul.mubr.bf16.gmra.mrb[0].mxu0 %v2839
  %v3204 = vpop.f32.mrb[0].mxu0
  %v3205 = vadd.f32 0.0, %v3204
  %v3206 = vpop.f32.mrb[0].mxu0
  %v3207 = vpop.f32.mrb[0].mxu0
  %v3208 = vadd.f32 0.0, %v3207
  %v3209 = vpop.f32.mrb[0].mxu0
  %3210 = vmatprep.mubr.bf16.mxu0 %v2854
  %3211 = vmatmul.mubr.bf16.gmra.mrb[0].mxu0 %v2853
  %v3212 = vpop.f32.mrb[0].mxu0
  %v3213 = vadd.f32 0.0, %v3212
  %v3214 = vpop.f32.mrb[0].mxu0
  %v3215 = vpop.f32.mrb[0].mxu0
  %v3216 = vadd.f32 0.0, %v3215
  %v3217 = vpop.f32.mrb[0].mxu0
  %3218 = vmatprep.mubr.bf16.mxu0 %v2868
  %3219 = vmatmul.mubr.bf16.gmra.mrb[0].mxu0 %v2867
  %v3220 = vpop.f32.mrb[0].mxu0
  %v3221 = vadd.f32 0.0, %v3220
  %v3222 = vpop.f32.mrb[0].mxu0
  %v3223 = vpop.f32.mrb[0].mxu0
  %v3224 = vadd.f32 0.0, %v3223
  %v3225 = vpop.f32.mrb[0].mxu0
  %3226 = vmatprep.mubr.bf16.mxu0 %v2882
  %3227 = vmatmul.mubr.bf16.gmra.mrb[0].mxu0 %v2881
  %v3228 = vpop.f32.mrb[0].mxu0
  %v3229 = vadd.f32 0.0, %v3228
  %v3230 = vpop.f32.mrb[0].mxu0
  %v3231 = vpop.f32.mrb[0].mxu0
  %v3232 = vadd.f32 0.0, %v3231
  %v3233 = vpop.f32.mrb[0].mxu0
  %3234 = vmatprep.mubr.bf16.mxu0 %v2896
  %3235 = vmatmul.mubr.bf16.gmra.mrb[0].mxu0 %v2895
  %v3236 = vpop.f32.mrb[0].mxu0
  %v3237 = vadd.f32 0.0, %v3236
  %v3238 = vpop.f32.mrb[0].mxu0
  %v3239 = vpop.f32.mrb[0].mxu0
  %v3240 = vadd.f32 0.0, %v3239
  %v3241 = vpop.f32.mrb[0].mxu0
  %3242 = vmatprep.mubr.bf16.mxu0 %v2910
  %3243 = vmatmul.mubr.bf16.gmra.mrb[0].mxu0 %v2909
  %v3244 = vpop.f32.mrb[0].mxu0
  %v3245 = vadd.f32 0.0, %v3244
  %v3246 = vpop.f32.mrb[0].mxu0
  %v3247 = vpop.f32.mrb[0].mxu0
  %v3248 = vadd.f32 0.0, %v3247
  %v3249 = vpop.f32.mrb[0].mxu0
  %3250 = vmatprep.mubr.bf16.mxu0 %v2924
  %3251 = vmatmul.mubr.bf16.gmra.mrb[0].mxu0 %v2923
  %v3252 = vpop.f32.mrb[0].mxu0
  %v3253 = vadd.f32 0.0, %v3252
  %v3254 = vpop.f32.mrb[0].mxu0
  %v3255 = vpop.f32.mrb[0].mxu0
  %v3256 = vadd.f32 0.0, %v3255
  %v3257 = vpop.f32.mrb[0].mxu0
  %3258 = vdwg.mxu0
  %3259 = vmatprep.subr.bf16.mxu0 0
  %3260 = vmatpush1.bf16.msra.mxu0 %v591
  %3261 = vmatprep.subr.bf16.mxu0 0
  %3262 = vmatpush1.bf16.msra.mxu0 %v592
  %3263 = vmatprep.subr.bf16.mxu0 0
  %3264 = vmatpush1.bf16.msra.mxu0 %v593
  %3265 = vmatprep.subr.bf16.mxu0 0
  %3266 = vmatpush1.bf16.msra.mxu0 %v594
  %3267 = vmatprep.subr.bf16.mxu0 0
  %3268 = vmatpush1.bf16.msra.mxu0 %v595
  %3269 = vmatprep.subr.bf16.mxu0 0
  %3270 = vmatpush1.bf16.msra.mxu0 %v596
  %3271 = vmatprep.subr.bf16.mxu0 0
  %3272 = vmatpush1.bf16.msra.mxu0 %v597
  %3273 = vmatprep.subr.bf16.mxu0 0
  %3274 = vmatpush1.bf16.msra.mxu0 %v598
  %3275 = vmatprep.subr.bf16.mxu0 0
  %3276 = vmatpush1.bf16.msra.mxu0 %v801
  %3277 = vmatprep.subr.bf16.mxu0 0
  %3278 = vmatpush1.bf16.msra.mxu0 %v802
  %3279 = vmatprep.subr.bf16.mxu0 0
  %3280 = vmatpush1.bf16.msra.mxu0 %v803
  %3281 = vmatprep.subr.bf16.mxu0 0
  %3282 = vmatpush1.bf16.msra.mxu0 %v804
  %3283 = vmatprep.subr.bf16.mxu0 0
  %3284 = vmatpush1.bf16.msra.mxu0 %v805
  %3285 = vmatprep.subr.bf16.mxu0 0
  %3286 = vmatpush1.bf16.msra.mxu0 %v806
  %3287 = vmatprep.subr.bf16.mxu0 0
  %3288 = vmatpush1.bf16.msra.mxu0 %v807
  %3289 = vmatprep.subr.bf16.mxu0 0
  %3290 = vmatpush1.bf16.msra.mxu0 %v808
  %3291 = vmatprep.mubr.bf16.mxu0 %v2772
  %3292 = vmatmul.mubr.bf16.gmra.mrb[0].mxu0 %v2771
  %v3293 = vpop.f32.mrb[0].mxu0
  %v3294 = vadd.f32 %v3165, %v3293
  %v3295 = vpop.f32.mrb[0].mxu0
  %v3296 = vpop.f32.mrb[0].mxu0
  %v3297 = vadd.f32 %v3168, %v3296
  %v3298 = vpop.f32.mrb[0].mxu0
  %3299 = vmatprep.mubr.bf16.mxu0 %v2786
  %3300 = vmatmul.mubr.bf16.gmra.mrb[0].mxu0 %v2785
  %v3301 = vpop.f32.mrb[0].mxu0
  %v3302 = vadd.f32 %v3173, %v3301
  %v3303 = vpop.f32.mrb[0].mxu0
  %v3304 = vpop.f32.mrb[0].mxu0
  %v3305 = vadd.f32 %v3176, %v3304
  %v3306 = vpop.f32.mrb[0].mxu0
  %3307 = vmatprep.mubr.bf16.mxu0 %v2800
  %3308 = vmatmul.mubr.bf16.gmra.mrb[0].mxu0 %v2799
  %v3309 = vpop.f32.mrb[0].mxu0
  %v3310 = vadd.f32 %v3181, %v3309
  %v3311 = vpop.f32.mrb[0].mxu0
  %v3312 = vpop.f32.mrb[0].mxu0
  %v3313 = vadd.f32 %v3184, %v3312
  %v3314 = vpop.f32.mrb[0].mxu0
  %3315 = vmatprep.mubr.bf16.mxu0 %v2814
  %3316 = vmatmul.mubr.bf16.gmra.mrb[0].mxu0 %v2813
  %v3317 = vpop.f32.mrb[0].mxu0
  %v3318 = vadd.f32 %v3189, %v3317
  %v3319 = vpop.f32.mrb[0].mxu0
  %v3320 = vpop.f32.mrb[0].mxu0
  %v3321 = vadd.f32 %v3192, %v3320
  %v3322 = vpop.f32.mrb[0].mxu0
  %3323 = vmatprep.mubr.bf16.mxu0 %v2828
  %3324 = vmatmul.mubr.bf16.gmra.mrb[0].mxu0 %v2827
  %v3325 = vpop.f32.mrb[0].mxu0
  %v3326 = vadd.f32 %v3197, %v3325
  %v3327 = vpop.f32.mrb[0].mxu0
  %v3328 = vpop.f32.mrb[0].mxu0
  %v3329 = vadd.f32 %v3200, %v3328
  %v3330 = vpop.f32.mrb[0].mxu0
  %3331 = vmatprep.mubr.bf16.mxu0 %v2842
  %3332 = vmatmul.mubr.bf16.gmra.mrb[0].mxu0 %v2841
  %v3333 = vpop.f32.mrb[0].mxu0
  %v3334 = vadd.f32 %v3205, %v3333
  %v3335 = vpop.f32.mrb[0].mxu0
  %v3336 = vpop.f32.mrb[0].mxu0
  %v3337 = vadd.f32 %v3208, %v3336
  %v3338 = vpop.f32.mrb[0].mxu0
  %3339 = vmatprep.mubr.bf16.mxu0 %v2856
  %3340 = vmatmul.mubr.bf16.gmra.mrb[0].mxu0 %v2855
  %v3341 = vpop.f32.mrb[0].mxu0
  %v3342 = vadd.f32 %v3213, %v3341
  %v3343 = vpop.f32.mrb[0].mxu0
  %v3344 = vpop.f32.mrb[0].mxu0
  %v3345 = vadd.f32 %v3216, %v3344
  %v3346 = vpop.f32.mrb[0].mxu0
  %3347 = vmatprep.mubr.bf16.mxu0 %v2870
  %3348 = vmatmul.mubr.bf16.gmra.mrb[0].mxu0 %v2869
  %v3349 = vpop.f32.mrb[0].mxu0
  %v3350 = vadd.f32 %v3221, %v3349
  %v3351 = vpop.f32.mrb[0].mxu0
  %v3352 = vpop.f32.mrb[0].mxu0
  %v3353 = vadd.f32 %v3224, %v3352
  %v3354 = vpop.f32.mrb[0].mxu0
  %3355 = vmatprep.mubr.bf16.mxu0 %v2884
  %3356 = vmatmul.mubr.bf16.gmra.mrb[0].mxu0 %v2883
  %v3357 = vpop.f32.mrb[0].mxu0
  %v3358 = vadd.f32 %v3229, %v3357
  %v3359 = vpop.f32.mrb[0].mxu0
  %v3360 = vpop.f32.mrb[0].mxu0
  %v3361 = vadd.f32 %v3232, %v3360
  %v3362 = vpop.f32.mrb[0].mxu0
  %3363 = vmatprep.mubr.bf16.mxu0 %v2898
  %3364 = vmatmul.mubr.bf16.gmra.mrb[0].mxu0 %v2897
  %v3365 = vpop.f32.mrb[0].mxu0
  %v3366 = vadd.f32 %v3237, %v3365
  %v3367 = vpop.f32.mrb[0].mxu0
  %v3368 = vpop.f32.mrb[0].mxu0
  %v3369 = vadd.f32 %v3240, %v3368
  %v3370 = vpop.f32.mrb[0].mxu0
  %3371 = vmatprep.mubr.bf16.mxu0 %v2912
  %3372 = vmatmul.mubr.bf16.gmra.mrb[0].mxu0 %v2911
  %v3373 = vpop.f32.mrb[0].mxu0
  %v3374 = vadd.f32 %v3245, %v3373
  %v3375 = vpop.f32.mrb[0].mxu0
  %v3376 = vpop.f32.mrb[0].mxu0
  %v3377 = vadd.f32 %v3248, %v3376
  %v3378 = vpop.f32.mrb[0].mxu0
  %3379 = vmatprep.mubr.bf16.mxu0 %v2926
  %3380 = vmatmul.mubr.bf16.gmra.mrb[0].mxu0 %v2925
  %v3381 = vpop.f32.mrb[0].mxu0
  %v3382 = vadd.f32 %v3253, %v3381
  %v3383 = vpop.f32.mrb[0].mxu0
  %v3384 = vpop.f32.mrb[0].mxu0
  %v3385 = vadd.f32 %v3256, %v3384
  %v3386 = vpop.f32.mrb[0].mxu0
  %3387 = vdwg.mxu0
  %3388 = vmatprep.subr.bf16.mxu0 0
  %3389 = vmatpush1.bf16.msra.mxu0 %v809
  %3390 = vmatprep.subr.bf16.mxu0 0
  %3391 = vmatpush1.bf16.msra.mxu0 %v810
  %3392 = vmatprep.subr.bf16.mxu0 0
  %3393 = vmatpush1.bf16.msra.mxu0 %v811
  %3394 = vmatprep.subr.bf16.mxu0 0
  %3395 = vmatpush1.bf16.msra.mxu0 %v812
  %3396 = vmatprep.subr.bf16.mxu0 0
  %3397 = vmatpush1.bf16.msra.mxu0 %v1015
  %3398 = vmatprep.subr.bf16.mxu0 0
  %3399 = vmatpush1.bf16.msra.mxu0 %v1016
  %3400 = vmatprep.subr.bf16.mxu0 0
  %3401 = vmatpush1.bf16.msra.mxu0 %v1017
  %3402 = vmatprep.subr.bf16.mxu0 0
  %3403 = vmatpush1.bf16.msra.mxu0 %v1018
  %3404 = vmatprep.subr.bf16.mxu0 0
  %3405 = vmatpush1.bf16.msra.mxu0 %v1019
  %3406 = vmatprep.subr.bf16.mxu0 0
  %3407 = vmatpush1.bf16.msra.mxu0 %v1020
  %3408 = vmatprep.subr.bf16.mxu0 0
  %3409 = vmatpush1.bf16.msra.mxu0 %v1021
  %3410 = vmatprep.subr.bf16.mxu0 0
  %3411 = vmatpush1.bf16.msra.mxu0 %v1022
  %3412 = vmatprep.subr.bf16.mxu0 0
  %3413 = vmatpush1.bf16.msra.mxu0 %v1023
  %3414 = vmatprep.subr.bf16.mxu0 0
  %3415 = vmatpush1.bf16.msra.mxu0 %v1024
  %3416 = vmatprep.subr.bf16.mxu0 0
  %3417 = vmatpush1.bf16.msra.mxu0 %v1025
  %3418 = vmatprep.subr.bf16.mxu0 0
  %3419 = vmatpush1.bf16.msra.mxu0 %v1026
  %3420 = vmatprep.mubr.bf16.mxu0 %v2774
  %3421 = vmatmul.mubr.bf16.gmra.mrb[0].mxu0 %v2773
  %v3422 = vpop.f32.mrb[0].mxu0
  %v3423 = vadd.f32 %v3294, %v3422
  %v3424 = vpop.f32.mrb[0].mxu0
  %v3425 = vpop.f32.mrb[0].mxu0
  %v3426 = vadd.f32 %v3297, %v3425
  %v3427 = vpop.f32.mrb[0].mxu0
  %3428 = vmatprep.mubr.bf16.mxu0 %v2788
  %3429 = vmatmul.mubr.bf16.gmra.mrb[0].mxu0 %v2787
  %v3430 = vpop.f32.mrb[0].mxu0
  %v3431 = vadd.f32 %v3302, %v3430
  %v3432 = vpop.f32.mrb[0].mxu0
  %v3433 = vpop.f32.mrb[0].mxu0
  %v3434 = vadd.f32 %v3305, %v3433
  %v3435 = vpop.f32.mrb[0].mxu0
  %3436 = vmatprep.mubr.bf16.mxu0 %v2802
  %3437 = vmatmul.mubr.bf16.gmra.mrb[0].mxu0 %v2801
  %v3438 = vpop.f32.mrb[0].mxu0
  %v3439 = vadd.f32 %v3310, %v3438
  %v3440 = vpop.f32.mrb[0].mxu0
  %v3441 = vpop.f32.mrb[0].mxu0
  %v3442 = vadd.f32 %v3313, %v3441
  %v3443 = vpop.f32.mrb[0].mxu0
  %3444 = vmatprep.mubr.bf16.mxu0 %v2816
  %3445 = vmatmul.mubr.bf16.gmra.mrb[0].mxu0 %v2815
  %v3446 = vpop.f32.mrb[0].mxu0
  %v3447 = vadd.f32 %v3318, %v3446
  %v3448 = vpop.f32.mrb[0].mxu0
  %v3449 = vpop.f32.mrb[0].mxu0
  %v3450 = vadd.f32 %v3321, %v3449
  %v3451 = vpop.f32.mrb[0].mxu0
  %3452 = vmatprep.mubr.bf16.mxu0 %v2830
  %3453 = vmatmul.mubr.bf16.gmra.mrb[0].mxu0 %v2829
  %v3454 = vpop.f32.mrb[0].mxu0
  %v3455 = vadd.f32 %v3326, %v3454
  %v3456 = vpop.f32.mrb[0].mxu0
  %v3457 = vpop.f32.mrb[0].mxu0
  %v3458 = vadd.f32 %v3329, %v3457
  %v3459 = vpop.f32.mrb[0].mxu0
  %3460 = vmatprep.mubr.bf16.mxu0 %v2844
  %3461 = vmatmul.mubr.bf16.gmra.mrb[0].mxu0 %v2843
  %v3462 = vpop.f32.mrb[0].mxu0
  %v3463 = vadd.f32 %v3334, %v3462
  %v3464 = vpop.f32.mrb[0].mxu0
  %v3465 = vpop.f32.mrb[0].mxu0
  %v3466 = vadd.f32 %v3337, %v3465
  %v3467 = vpop.f32.mrb[0].mxu0
  %3468 = vmatprep.mubr.bf16.mxu0 %v2858
  %3469 = vmatmul.mubr.bf16.gmra.mrb[0].mxu0 %v2857
  %v3470 = vpop.f32.mrb[0].mxu0
  %v3471 = vadd.f32 %v3342, %v3470
  %v3472 = vpop.f32.mrb[0].mxu0
  %v3473 = vpop.f32.mrb[0].mxu0
  %v3474 = vadd.f32 %v3345, %v3473
  %v3475 = vpop.f32.mrb[0].mxu0
  %3476 = vmatprep.mubr.bf16.mxu0 %v2872
  %3477 = vmatmul.mubr.bf16.gmra.mrb[0].mxu0 %v2871
  %v3478 = vpop.f32.mrb[0].mxu0
  %v3479 = vadd.f32 %v3350, %v3478
  %v3480 = vpop.f32.mrb[0].mxu0
  %v3481 = vpop.f32.mrb[0].mxu0
  %v3482 = vadd.f32 %v3353, %v3481
  %v3483 = vpop.f32.mrb[0].mxu0
  %3484 = vmatprep.mubr.bf16.mxu0 %v2886
  %3485 = vmatmul.mubr.bf16.gmra.mrb[0].mxu0 %v2885
  %v3486 = vpop.f32.mrb[0].mxu0
  %v3487 = vadd.f32 %v3358, %v3486
  %v3488 = vpop.f32.mrb[0].mxu0
  %v3489 = vpop.f32.mrb[0].mxu0
  %v3490 = vadd.f32 %v3361, %v3489
  %v3491 = vpop.f32.mrb[0].mxu0
  %3492 = vmatprep.mubr.bf16.mxu0 %v2900
  %3493 = vmatmul.mubr.bf16.gmra.mrb[0].mxu0 %v2899
  %v3494 = vpop.f32.mrb[0].mxu0
  %v3495 = vadd.f32 %v3366, %v3494
  %v3496 = vpop.f32.mrb[0].mxu0
  %v3497 = vpop.f32.mrb[0].mxu0
  %v3498 = vadd.f32 %v3369, %v3497
  %v3499 = vpop.f32.mrb[0].mxu0
  %3500 = vmatprep.mubr.bf16.mxu0 %v2914
  %3501 = vmatmul.mubr.bf16.gmra.mrb[0].mxu0 %v2913
  %v3502 = vpop.f32.mrb[0].mxu0
  %v3503 = vadd.f32 %v3374, %v3502
  %v3504 = vpop.f32.mrb[0].mxu0
  %v3505 = vpop.f32.mrb[0].mxu0
  %v3506 = vadd.f32 %v3377, %v3505
  %v3507 = vpop.f32.mrb[0].mxu0
  %3508 = vmatprep.mubr.bf16.mxu0 %v2928
  %3509 = vmatmul.mubr.bf16.gmra.mrb[0].mxu0 %v2927
  %v3510 = vpop.f32.mrb[0].mxu0
  %v3511 = vadd.f32 %v3382, %v3510
  %v3512 = vpop.f32.mrb[0].mxu0
  %v3513 = vpop.f32.mrb[0].mxu0
  %v3514 = vadd.f32 %v3385, %v3513
  %v3515 = vpop.f32.mrb[0].mxu0
  %3516 = vdwg.mxu0
  %3517 = vmatprep.subr.bf16.mxu0 0
  %3518 = vmatpush1.bf16.msra.mxu0 %v1229
  %3519 = vmatprep.subr.bf16.mxu0 0
  %3520 = vmatpush1.bf16.msra.mxu0 %v1230
  %3521 = vmatprep.subr.bf16.mxu0 0
  %3522 = vmatpush1.bf16.msra.mxu0 %v1231
  %3523 = vmatprep.subr.bf16.mxu0 0
  %3524 = vmatpush1.bf16.msra.mxu0 %v1232
  %3525 = vmatprep.subr.bf16.mxu0 0
  %3526 = vmatpush1.bf16.msra.mxu0 %v1233
  %3527 = vmatprep.subr.bf16.mxu0 0
  %3528 = vmatpush1.bf16.msra.mxu0 %v1234
  %3529 = vmatprep.subr.bf16.mxu0 0
  %3530 = vmatpush1.bf16.msra.mxu0 %v1235
  %3531 = vmatprep.subr.bf16.mxu0 0
  %3532 = vmatpush1.bf16.msra.mxu0 %v1236
  %3533 = vmatprep.subr.bf16.mxu0 0
  %3534 = vmatpush1.bf16.msra.mxu0 %v1237
  %3535 = vmatprep.subr.bf16.mxu0 0
  %3536 = vmatpush1.bf16.msra.mxu0 %v1238
  %3537 = vmatprep.subr.bf16.mxu0 0
  %3538 = vmatpush1.bf16.msra.mxu0 %v1239
  %3539 = vmatprep.subr.bf16.mxu0 0
  %3540 = vmatpush1.bf16.msra.mxu0 %v1240
  %3541 = vmatprep.subr.bf16.mxu0 0
  %3542 = vmatpush1.bf16.msra.mxu0 %v1443
  %3543 = vmatprep.subr.bf16.mxu0 0
  %3544 = vmatpush1.bf16.msra.mxu0 %v1444
  %3545 = vmatprep.subr.bf16.mxu0 0
  %3546 = vmatpush1.bf16.msra.mxu0 %v1445
  %3547 = vmatprep.subr.bf16.mxu0 0
  %3548 = vmatpush1.bf16.msra.mxu0 %v1446
  %3549 = vmatprep.mubr.bf16.mxu0 %v2776
  %3550 = vmatmul.mubr.bf16.gmra.mrb[0].mxu0 %v2775
  %v3551 = vpop.f32.mrb[0].mxu0
  %v3552 = vadd.f32 %v3423, %v3551
  %v3553 = vpop.f32.mrb[0].mxu0
  %v3554 = vpop.f32.mrb[0].mxu0
  %v3555 = vadd.f32 %v3426, %v3554
  %v3556 = vpop.f32.mrb[0].mxu0
  %3557 = vmatprep.mubr.bf16.mxu0 %v2790
  %3558 = vmatmul.mubr.bf16.gmra.mrb[0].mxu0 %v2789
  %v3559 = vpop.f32.mrb[0].mxu0
  %v3560 = vadd.f32 %v3431, %v3559
  %v3561 = vpop.f32.mrb[0].mxu0
  %v3562 = vpop.f32.mrb[0].mxu0
  %v3563 = vadd.f32 %v3434, %v3562
  %v3564 = vpop.f32.mrb[0].mxu0
  %3565 = vmatprep.mubr.bf16.mxu0 %v2804
  %3566 = vmatmul.mubr.bf16.gmra.mrb[0].mxu0 %v2803
  %v3567 = vpop.f32.mrb[0].mxu0
  %v3568 = vadd.f32 %v3439, %v3567
  %v3569 = vpop.f32.mrb[0].mxu0
  %v3570 = vpop.f32.mrb[0].mxu0
  %v3571 = vadd.f32 %v3442, %v3570
  %v3572 = vpop.f32.mrb[0].mxu0
  %3573 = vmatprep.mubr.bf16.mxu0 %v2818
  %3574 = vmatmul.mubr.bf16.gmra.mrb[0].mxu0 %v2817
  %v3575 = vpop.f32.mrb[0].mxu0
  %v3576 = vadd.f32 %v3447, %v3575
  %v3577 = vpop.f32.mrb[0].mxu0
  %v3578 = vpop.f32.mrb[0].mxu0
  %v3579 = vadd.f32 %v3450, %v3578
  %v3580 = vpop.f32.mrb[0].mxu0
  %3581 = vmatprep.mubr.bf16.mxu0 %v2832
  %3582 = vmatmul.mubr.bf16.gmra.mrb[0].mxu0 %v2831
  %v3583 = vpop.f32.mrb[0].mxu0
  %v3584 = vadd.f32 %v3455, %v3583
  %v3585 = vpop.f32.mrb[0].mxu0
  %v3586 = vpop.f32.mrb[0].mxu0
  %v3587 = vadd.f32 %v3458, %v3586
  %v3588 = vpop.f32.mrb[0].mxu0
  %3589 = vmatprep.mubr.bf16.mxu0 %v2846
  %3590 = vmatmul.mubr.bf16.gmra.mrb[0].mxu0 %v2845
  %v3591 = vpop.f32.mrb[0].mxu0
  %v3592 = vadd.f32 %v3463, %v3591
  %v3593 = vpop.f32.mrb[0].mxu0
  %v3594 = vpop.f32.mrb[0].mxu0
  %v3595 = vadd.f32 %v3466, %v3594
  %v3596 = vpop.f32.mrb[0].mxu0
  %3597 = vmatprep.mubr.bf16.mxu0 %v2860
  %3598 = vmatmul.mubr.bf16.gmra.mrb[0].mxu0 %v2859
  %v3599 = vpop.f32.mrb[0].mxu0
  %v3600 = vadd.f32 %v3471, %v3599
  %v3601 = vpop.f32.mrb[0].mxu0
  %v3602 = vpop.f32.mrb[0].mxu0
  %v3603 = vadd.f32 %v3474, %v3602
  %v3604 = vpop.f32.mrb[0].mxu0
  %3605 = vmatprep.mubr.bf16.mxu0 %v2874
  %3606 = vmatmul.mubr.bf16.gmra.mrb[0].mxu0 %v2873
  %v3607 = vpop.f32.mrb[0].mxu0
  %v3608 = vadd.f32 %v3479, %v3607
  %v3609 = vpop.f32.mrb[0].mxu0
  %v3610 = vpop.f32.mrb[0].mxu0
  %v3611 = vadd.f32 %v3482, %v3610
  %v3612 = vpop.f32.mrb[0].mxu0
  %3613 = vmatprep.mubr.bf16.mxu0 %v2888
  %3614 = vmatmul.mubr.bf16.gmra.mrb[0].mxu0 %v2887
  %v3615 = vpop.f32.mrb[0].mxu0
  %v3616 = vadd.f32 %v3487, %v3615
  %v3617 = vpop.f32.mrb[0].mxu0
  %v3618 = vpop.f32.mrb[0].mxu0
  %v3619 = vadd.f32 %v3490, %v3618
  %v3620 = vpop.f32.mrb[0].mxu0
  %3621 = vmatprep.mubr.bf16.mxu0 %v2902
  %3622 = vmatmul.mubr.bf16.gmra.mrb[0].mxu0 %v2901
  %v3623 = vpop.f32.mrb[0].mxu0
  %v3624 = vadd.f32 %v3495, %v3623
  %v3625 = vpop.f32.mrb[0].mxu0
  %v3626 = vpop.f32.mrb[0].mxu0
  %v3627 = vadd.f32 %v3498, %v3626
  %v3628 = vpop.f32.mrb[0].mxu0
  %3629 = vmatprep.mubr.bf16.mxu0 %v2916
  %3630 = vmatmul.mubr.bf16.gmra.mrb[0].mxu0 %v2915
  %v3631 = vpop.f32.mrb[0].mxu0
  %v3632 = vadd.f32 %v3503, %v3631
  %v3633 = vpop.f32.mrb[0].mxu0
  %v3634 = vpop.f32.mrb[0].mxu0
  %v3635 = vadd.f32 %v3506, %v3634
  %v3636 = vpop.f32.mrb[0].mxu0
  %3637 = vmatprep.mubr.bf16.mxu0 %v2930
  %3638 = vmatmul.mubr.bf16.gmra.mrb[0].mxu0 %v2929
  %v3639 = vpop.f32.mrb[0].mxu0
  %v3640 = vadd.f32 %v3511, %v3639
  %v3641 = vpop.f32.mrb[0].mxu0
  %v3642 = vpop.f32.mrb[0].mxu0
  %v3643 = vadd.f32 %v3514, %v3642
  %v3644 = vpop.f32.mrb[0].mxu0
  %3645 = vdwg.mxu0
  %3646 = vmatprep.subr.bf16.mxu0 0
  %3647 = vmatpush1.bf16.msra.mxu0 %v1447
  %3648 = vmatprep.subr.bf16.mxu0 0
  %3649 = vmatpush1.bf16.msra.mxu0 %v1448
  %3650 = vmatprep.subr.bf16.mxu0 0
  %3651 = vmatpush1.bf16.msra.mxu0 %v1449
  %3652 = vmatprep.subr.bf16.mxu0 0
  %3653 = vmatpush1.bf16.msra.mxu0 %v1450
  %3654 = vmatprep.subr.bf16.mxu0 0
  %3655 = vmatpush1.bf16.msra.mxu0 %v1451
  %3656 = vmatprep.subr.bf16.mxu0 0
  %3657 = vmatpush1.bf16.msra.mxu0 %v1452
  %3658 = vmatprep.subr.bf16.mxu0 0
  %3659 = vmatpush1.bf16.msra.mxu0 %v1453
  %3660 = vmatprep.subr.bf16.mxu0 0
  %3661 = vmatpush1.bf16.msra.mxu0 %v1454
  %3662 = vmatprep.subr.bf16.mxu0 0
  %3663 = vmatpush1.bf16.msra.mxu0 %v1657
  %3664 = vmatprep.subr.bf16.mxu0 0
  %3665 = vmatpush1.bf16.msra.mxu0 %v1658
  %3666 = vmatprep.subr.bf16.mxu0 0
  %3667 = vmatpush1.bf16.msra.mxu0 %v1659
  %3668 = vmatprep.subr.bf16.mxu0 0
  %3669 = vmatpush1.bf16.msra.mxu0 %v1660
  %3670 = vmatprep.subr.bf16.mxu0 0
  %3671 = vmatpush1.bf16.msra.mxu0 %v1661
  %3672 = vmatprep.subr.bf16.mxu0 0
  %3673 = vmatpush1.bf16.msra.mxu0 %v1662
  %3674 = vmatprep.subr.bf16.mxu0 0
  %3675 = vmatpush1.bf16.msra.mxu0 %v1663
  %3676 = vmatprep.subr.bf16.mxu0 0
  %3677 = vmatpush1.bf16.msra.mxu0 %v1664
  %3678 = vmatprep.mubr.bf16.mxu0 %v2778
  %3679 = vmatmul.mubr.bf16.gmra.mrb[0].mxu0 %v2777
  %v3680 = vpop.f32.mrb[0].mxu0
  %v3681 = vadd.f32 %v3552, %v3680
  %v3682 = vpop.f32.mrb[0].mxu0
  %v3683 = vpop.f32.mrb[0].mxu0
  %v3684 = vadd.f32 %v3555, %v3683
  %v3685 = vpop.f32.mrb[0].mxu0
  %3686 = vmatprep.mubr.bf16.mxu0 %v2792
  %3687 = vmatmul.mubr.bf16.gmra.mrb[0].mxu0 %v2791
  %v3688 = vpop.f32.mrb[0].mxu0
  %v3689 = vadd.f32 %v3560, %v3688
  %v3690 = vpop.f32.mrb[0].mxu0
  %v3691 = vpop.f32.mrb[0].mxu0
  %v3692 = vadd.f32 %v3563, %v3691
  %v3693 = vpop.f32.mrb[0].mxu0
  %3694 = vmatprep.mubr.bf16.mxu0 %v2806
  %3695 = vmatmul.mubr.bf16.gmra.mrb[0].mxu0 %v2805
  %v3696 = vpop.f32.mrb[0].mxu0
  %v3697 = vadd.f32 %v3568, %v3696
  %v3698 = vpop.f32.mrb[0].mxu0
  %v3699 = vpop.f32.mrb[0].mxu0
  %v3700 = vadd.f32 %v3571, %v3699
  %v3701 = vpop.f32.mrb[0].mxu0
  %3702 = vmatprep.mubr.bf16.mxu0 %v2820
  %3703 = vmatmul.mubr.bf16.gmra.mrb[0].mxu0 %v2819
  %v3704 = vpop.f32.mrb[0].mxu0
  %v3705 = vadd.f32 %v3576, %v3704
  %v3706 = vpop.f32.mrb[0].mxu0
  %v3707 = vpop.f32.mrb[0].mxu0
  %v3708 = vadd.f32 %v3579, %v3707
  %v3709 = vpop.f32.mrb[0].mxu0
  %3710 = vmatprep.mubr.bf16.mxu0 %v2834
  %3711 = vmatmul.mubr.bf16.gmra.mrb[0].mxu0 %v2833
  %v3712 = vpop.f32.mrb[0].mxu0
  %v3713 = vadd.f32 %v3584, %v3712
  %v3714 = vpop.f32.mrb[0].mxu0
  %v3715 = vpop.f32.mrb[0].mxu0
  %v3716 = vadd.f32 %v3587, %v3715
  %v3717 = vpop.f32.mrb[0].mxu0
  %3718 = vmatprep.mubr.bf16.mxu0 %v2848
  %3719 = vmatmul.mubr.bf16.gmra.mrb[0].mxu0 %v2847
  %v3720 = vpop.f32.mrb[0].mxu0
  %v3721 = vadd.f32 %v3592, %v3720
  %v3722 = vpop.f32.mrb[0].mxu0
  %v3723 = vpop.f32.mrb[0].mxu0
  %v3724 = vadd.f32 %v3595, %v3723
  %v3725 = vpop.f32.mrb[0].mxu0
  %3726 = vmatprep.mubr.bf16.mxu0 %v2862
  %3727 = vmatmul.mubr.bf16.gmra.mrb[0].mxu0 %v2861
  %v3728 = vpop.f32.mrb[0].mxu0
  %v3729 = vadd.f32 %v3600, %v3728
  %v3730 = vpop.f32.mrb[0].mxu0
  %v3731 = vpop.f32.mrb[0].mxu0
  %v3732 = vadd.f32 %v3603, %v3731
  %v3733 = vpop.f32.mrb[0].mxu0
  %3734 = vmatprep.mubr.bf16.mxu0 %v2876
  %3735 = vmatmul.mubr.bf16.gmra.mrb[0].mxu0 %v2875
  %v3736 = vpop.f32.mrb[0].mxu0
  %v3737 = vadd.f32 %v3608, %v3736
  %v3738 = vpop.f32.mrb[0].mxu0
  %v3739 = vpop.f32.mrb[0].mxu0
  %v3740 = vadd.f32 %v3611, %v3739
  %v3741 = vpop.f32.mrb[0].mxu0
  %3742 = vmatprep.mubr.bf16.mxu0 %v2890
  %3743 = vmatmul.mubr.bf16.gmra.mrb[0].mxu0 %v2889
  %v3744 = vpop.f32.mrb[0].mxu0
  %v3745 = vadd.f32 %v3616, %v3744
  %v3746 = vpop.f32.mrb[0].mxu0
  %v3747 = vpop.f32.mrb[0].mxu0
  %v3748 = vadd.f32 %v3619, %v3747
  %v3749 = vpop.f32.mrb[0].mxu0
  %3750 = vmatprep.mubr.bf16.mxu0 %v2904
  %3751 = vmatmul.mubr.bf16.gmra.mrb[0].mxu0 %v2903
  %v3752 = vpop.f32.mrb[0].mxu0
  %v3753 = vadd.f32 %v3624, %v3752
  %v3754 = vpop.f32.mrb[0].mxu0
  %v3755 = vpop.f32.mrb[0].mxu0
  %v3756 = vadd.f32 %v3627, %v3755
  %v3757 = vpop.f32.mrb[0].mxu0
  %3758 = vmatprep.mubr.bf16.mxu0 %v2918
  %3759 = vmatmul.mubr.bf16.gmra.mrb[0].mxu0 %v2917
  %v3760 = vpop.f32.mrb[0].mxu0
  %v3761 = vadd.f32 %v3632, %v3760
  %v3762 = vpop.f32.mrb[0].mxu0
  %v3763 = vpop.f32.mrb[0].mxu0
  %v3764 = vadd.f32 %v3635, %v3763
  %v3765 = vpop.f32.mrb[0].mxu0
  %3766 = vmatprep.mubr.bf16.mxu0 %v2932
  %3767 = vmatmul.mubr.bf16.gmra.mrb[0].mxu0 %v2931
  %v3768 = vpop.f32.mrb[0].mxu0
  %v3769 = vadd.f32 %v3640, %v3768
  %v3770 = vpop.f32.mrb[0].mxu0
  %v3771 = vpop.f32.mrb[0].mxu0
  %v3772 = vadd.f32 %v3643, %v3771
  %v3773 = vpop.f32.mrb[0].mxu0
  %3774 = vdwg.mxu0
  %3775 = vmatprep.subr.bf16.mxu0 0
  %3776 = vmatpush1.bf16.msra.mxu0 %v1665
  %3777 = vmatprep.subr.bf16.mxu0 0
  %3778 = vmatpush1.bf16.msra.mxu0 %v1666
  %3779 = vmatprep.subr.bf16.mxu0 0
  %3780 = vmatpush1.bf16.msra.mxu0 %v1667
  %3781 = vmatprep.subr.bf16.mxu0 0
  %3782 = vmatpush1.bf16.msra.mxu0 %v1668
  %3783 = vmatprep.subr.bf16.mxu0 0
  %3784 = vmatpush1.bf16.msra.mxu0 %v1871
  %3785 = vmatprep.subr.bf16.mxu0 0
  %3786 = vmatpush1.bf16.msra.mxu0 %v1872
  %3787 = vmatprep.subr.bf16.mxu0 0
  %3788 = vmatpush1.bf16.msra.mxu0 %v1873
  %3789 = vmatprep.subr.bf16.mxu0 0
  %3790 = vmatpush1.bf16.msra.mxu0 %v1874
  %3791 = vmatprep.subr.bf16.mxu0 0
  %3792 = vmatpush1.bf16.msra.mxu0 %v1875
  %3793 = vmatprep.subr.bf16.mxu0 0
  %3794 = vmatpush1.bf16.msra.mxu0 %v1876
  %3795 = vmatprep.subr.bf16.mxu0 0
  %3796 = vmatpush1.bf16.msra.mxu0 %v1877
  %3797 = vmatprep.subr.bf16.mxu0 0
  %3798 = vmatpush1.bf16.msra.mxu0 %v1878
  %3799 = vmatprep.subr.bf16.mxu0 0
  %3800 = vmatpush1.bf16.msra.mxu0 %v1879
  %3801 = vmatprep.subr.bf16.mxu0 0
  %3802 = vmatpush1.bf16.msra.mxu0 %v1880
  %3803 = vmatprep.subr.bf16.mxu0 0
  %3804 = vmatpush1.bf16.msra.mxu0 %v1881
  %3805 = vmatprep.subr.bf16.mxu0 0
  %3806 = vmatpush1.bf16.msra.mxu0 %v1882
  %3807 = vmatprep.mubr.bf16.mxu0 %v2780
  %3808 = vmatmul.mubr.bf16.gmra.mrb[0].mxu0 %v2779
  %v3809 = vpop.f32.mrb[0].mxu0
  %v3810 = vadd.f32 %v3681, %v3809
  %v3811 = vpop.f32.mrb[0].mxu0
  %v3812 = vpop.f32.mrb[0].mxu0
  %v3813 = vadd.f32 %v3684, %v3812
  %v3814 = vpop.f32.mrb[0].mxu0
  %3815 = vmatprep.mubr.bf16.mxu0 %v2794
  %3816 = vmatmul.mubr.bf16.gmra.mrb[0].mxu0 %v2793
  %v3817 = vpop.f32.mrb[0].mxu0
  %v3818 = vadd.f32 %v3689, %v3817
  %v3819 = vpop.f32.mrb[0].mxu0
  %v3820 = vpop.f32.mrb[0].mxu0
  %v3821 = vadd.f32 %v3692, %v3820
  %v3822 = vpop.f32.mrb[0].mxu0
  %3823 = vmatprep.mubr.bf16.mxu0 %v2808
  %3824 = vmatmul.mubr.bf16.gmra.mrb[0].mxu0 %v2807
  %v3825 = vpop.f32.mrb[0].mxu0
  %v3826 = vadd.f32 %v3697, %v3825
  %v3827 = vpop.f32.mrb[0].mxu0
  %v3828 = vpop.f32.mrb[0].mxu0
  %v3829 = vadd.f32 %v3700, %v3828
  %v3830 = vpop.f32.mrb[0].mxu0
  %3831 = vmatprep.mubr.bf16.mxu0 %v2822
  %3832 = vmatmul.mubr.bf16.gmra.mrb[0].mxu0 %v2821
  %v3833 = vpop.f32.mrb[0].mxu0
  %v3834 = vadd.f32 %v3705, %v3833
  %v3835 = vpop.f32.mrb[0].mxu0
  %v3836 = vpop.f32.mrb[0].mxu0
  %v3837 = vadd.f32 %v3708, %v3836
  %v3838 = vpop.f32.mrb[0].mxu0
  %3839 = vmatprep.mubr.bf16.mxu0 %v2836
  %3840 = vmatmul.mubr.bf16.gmra.mrb[0].mxu0 %v2835
  %v3841 = vpop.f32.mrb[0].mxu0
  %v3842 = vadd.f32 %v3713, %v3841
  %v3843 = vpop.f32.mrb[0].mxu0
  %v3844 = vpop.f32.mrb[0].mxu0
  %v3845 = vadd.f32 %v3716, %v3844
  %v3846 = vpop.f32.mrb[0].mxu0
  %3847 = vmatprep.mubr.bf16.mxu0 %v2850
  %3848 = vmatmul.mubr.bf16.gmra.mrb[0].mxu0 %v2849
  %v3849 = vpop.f32.mrb[0].mxu0
  %v3850 = vadd.f32 %v3721, %v3849
  %v3851 = vpop.f32.mrb[0].mxu0
  %v3852 = vpop.f32.mrb[0].mxu0
  %v3853 = vadd.f32 %v3724, %v3852
  %v3854 = vpop.f32.mrb[0].mxu0
  %3855 = vmatprep.mubr.bf16.mxu0 %v2864
  %3856 = vmatmul.mubr.bf16.gmra.mrb[0].mxu0 %v2863
  %v3857 = vpop.f32.mrb[0].mxu0
  %v3858 = vadd.f32 %v3729, %v3857
  %v3859 = vpop.f32.mrb[0].mxu0
  %v3860 = vpop.f32.mrb[0].mxu0
  %v3861 = vadd.f32 %v3732, %v3860
  %v3862 = vpop.f32.mrb[0].mxu0
  %3863 = vmatprep.mubr.bf16.mxu0 %v2878
  %3864 = vmatmul.mubr.bf16.gmra.mrb[0].mxu0 %v2877
  %v3865 = vpop.f32.mrb[0].mxu0
  %v3866 = vadd.f32 %v3737, %v3865
  %v3867 = vpop.f32.mrb[0].mxu0
  %v3868 = vpop.f32.mrb[0].mxu0
  %v3869 = vadd.f32 %v3740, %v3868
  %v3870 = vpop.f32.mrb[0].mxu0
  %3871 = vmatprep.mubr.bf16.mxu0 %v2892
  %3872 = vmatmul.mubr.bf16.gmra.mrb[0].mxu0 %v2891
  %v3873 = vpop.f32.mrb[0].mxu0
  %v3874 = vadd.f32 %v3745, %v3873
  %v3875 = vpop.f32.mrb[0].mxu0
  %v3876 = vpop.f32.mrb[0].mxu0
  %v3877 = vadd.f32 %v3748, %v3876
  %v3878 = vpop.f32.mrb[0].mxu0
  %3879 = vmatprep.mubr.bf16.mxu0 %v2906
  %3880 = vmatmul.mubr.bf16.gmra.mrb[0].mxu0 %v2905
  %v3881 = vpop.f32.mrb[0].mxu0
  %v3882 = vadd.f32 %v3753, %v3881
  %v3883 = vpop.f32.mrb[0].mxu0
  %v3884 = vpop.f32.mrb[0].mxu0
  %v3885 = vadd.f32 %v3756, %v3884
  %v3886 = vpop.f32.mrb[0].mxu0
  %3887 = vmatprep.mubr.bf16.mxu0 %v2920
  %3888 = vmatmul.mubr.bf16.gmra.mrb[0].mxu0 %v2919
  %v3889 = vpop.f32.mrb[0].mxu0
  %v3890 = vadd.f32 %v3761, %v3889
  %v3891 = vpop.f32.mrb[0].mxu0
  %v3892 = vpop.f32.mrb[0].mxu0
  %v3893 = vadd.f32 %v3764, %v3892
  %v3894 = vpop.f32.mrb[0].mxu0
  %3895 = vmatprep.mubr.bf16.mxu0 %v2934
  %3896 = vmatmul.mubr.bf16.gmra.mrb[0].mxu0 %v2933
  %v3897 = vpop.f32.mrb[0].mxu0
  %v3898 = vadd.f32 %v3769, %v3897
  %v3899 = vpop.f32.mrb[0].mxu0
  %v3900 = vpop.f32.mrb[0].mxu0
  %v3901 = vadd.f32 %v3772, %v3900
  %v3902 = vpop.f32.mrb[0].mxu0
  %3903 = vdwg.mxu0
  %3904 = vmatprep.subr.bf16.mxu0 0
  %3905 = vmatpush1.bf16.msra.mxu0 %v2085
  %3906 = vmatprep.subr.bf16.mxu0 0
  %3907 = vmatpush1.bf16.msra.mxu0 %v2086
  %3908 = vmatprep.subr.bf16.mxu0 0
  %3909 = vmatpush1.bf16.msra.mxu0 %v2087
  %3910 = vmatprep.subr.bf16.mxu0 0
  %3911 = vmatpush1.bf16.msra.mxu0 %v2088
  %3912 = vmatprep.subr.bf16.mxu0 0
  %3913 = vmatpush1.bf16.msra.mxu0 %v2089
  %3914 = vmatprep.subr.bf16.mxu0 0
  %3915 = vmatpush1.bf16.msra.mxu0 %v2090
  %3916 = vmatprep.subr.bf16.mxu0 0
  %3917 = vmatpush1.bf16.msra.mxu0 %v2091
  %3918 = vmatprep.subr.bf16.mxu0 0
  %3919 = vmatpush1.bf16.msra.mxu0 %v2092
  %3920 = vmatprep.subr.bf16.mxu0 0
  %3921 = vmatpush1.bf16.msra.mxu0 %v2093
  %3922 = vmatprep.subr.bf16.mxu0 0
  %3923 = vmatpush1.bf16.msra.mxu0 %v2094
  %3924 = vmatprep.subr.bf16.mxu0 0
  %3925 = vmatpush1.bf16.msra.mxu0 %v2095
  %3926 = vmatprep.subr.bf16.mxu0 0
  %3927 = vmatpush1.bf16.msra.mxu0 %v2096
  %3928 = vmatprep.subr.bf16.mxu0 0
  %3929 = vmatpush1.bf16.msra.mxu0 0
  %3930 = vmatprep.subr.bf16.mxu0 0
  %3931 = vmatpush1.bf16.msra.mxu0 0
  %3932 = vmatprep.subr.bf16.mxu0 0
  %3933 = vmatpush1.bf16.msra.mxu0 0
  %3934 = vmatprep.subr.bf16.mxu0 0
  %3935 = vmatpush1.bf16.msra.mxu0 0
  %3936 = vmatprep.mubr.bf16.mxu0 %v3095
  %3937 = vmatmul.mubr.bf16.gmra.mrb[0].mxu0 %v2781
  %v3938 = vpop.f32.mrb[0].mxu0
  %v3939 = vadd.f32 %v3810, %v3938
  %v3940 = vpop.f32.mrb[0].mxu0
  %v3941 = vpop.f32.mrb[0].mxu0
  %v3942 = vadd.f32 %v3813, %v3941
  %v3943 = vpop.f32.mrb[0].mxu0
  %3944 = vmatprep.mubr.bf16.mxu0 %v3098
  %3945 = vmatmul.mubr.bf16.gmra.mrb[0].mxu0 %v2795
  %v3946 = vpop.f32.mrb[0].mxu0
  %v3947 = vadd.f32 %v3818, %v3946
  %v3948 = vpop.f32.mrb[0].mxu0
  %v3949 = vpop.f32.mrb[0].mxu0
  %v3950 = vadd.f32 %v3821, %v3949
  %v3951 = vpop.f32.mrb[0].mxu0
  %3952 = vmatprep.mubr.bf16.mxu0 %v3101
  %3953 = vmatmul.mubr.bf16.gmra.mrb[0].mxu0 %v2809
  %v3954 = vpop.f32.mrb[0].mxu0
  %v3955 = vadd.f32 %v3826, %v3954
  %v3956 = vpop.f32.mrb[0].mxu0
  %v3957 = vpop.f32.mrb[0].mxu0
  %v3958 = vadd.f32 %v3829, %v3957
  %v3959 = vpop.f32.mrb[0].mxu0
  %3960 = vmatprep.mubr.bf16.mxu0 %v3104
  %3961 = vmatmul.mubr.bf16.gmra.mrb[0].mxu0 %v2823
  %v3962 = vpop.f32.mrb[0].mxu0
  %v3963 = vadd.f32 %v3834, %v3962
  %v3964 = vpop.f32.mrb[0].mxu0
  %v3965 = vpop.f32.mrb[0].mxu0
  %v3966 = vadd.f32 %v3837, %v3965
  %v3967 = vpop.f32.mrb[0].mxu0
  %3968 = vmatprep.mubr.bf16.mxu0 %v3107
  %3969 = vmatmul.mubr.bf16.gmra.mrb[0].mxu0 %v2837
  %v3970 = vpop.f32.mrb[0].mxu0
  %v3971 = vadd.f32 %v3842, %v3970
  %v3972 = vpop.f32.mrb[0].mxu0
  %v3973 = vpop.f32.mrb[0].mxu0
  %v3974 = vadd.f32 %v3845, %v3973
  %v3975 = vpop.f32.mrb[0].mxu0
  %3976 = vmatprep.mubr.bf16.mxu0 %v3110
  %3977 = vmatmul.mubr.bf16.gmra.mrb[0].mxu0 %v2851
  %v3978 = vpop.f32.mrb[0].mxu0
  %v3979 = vadd.f32 %v3850, %v3978
  %v3980 = vpop.f32.mrb[0].mxu0
  %v3981 = vpop.f32.mrb[0].mxu0
  %v3982 = vadd.f32 %v3853, %v3981
  %v3983 = vpop.f32.mrb[0].mxu0
  %3984 = vmatprep.mubr.bf16.mxu0 %v3113
  %3985 = vmatmul.mubr.bf16.gmra.mrb[0].mxu0 %v2865
  %v3986 = vpop.f32.mrb[0].mxu0
  %v3987 = vadd.f32 %v3858, %v3986
  %v3988 = vpop.f32.mrb[0].mxu0
  %v3989 = vpop.f32.mrb[0].mxu0
  %v3990 = vadd.f32 %v3861, %v3989
  %v3991 = vpop.f32.mrb[0].mxu0
  %3992 = vmatprep.mubr.bf16.mxu0 %v3116
  %3993 = vmatmul.mubr.bf16.gmra.mrb[0].mxu0 %v2879
  %v3994 = vpop.f32.mrb[0].mxu0
  %v3995 = vadd.f32 %v3866, %v3994
  %v3996 = vpop.f32.mrb[0].mxu0
  %v3997 = vpop.f32.mrb[0].mxu0
  %v3998 = vadd.f32 %v3869, %v3997
  %v3999 = vpop.f32.mrb[0].mxu0
  %4000 = vmatprep.mubr.bf16.mxu0 %v3119
  %4001 = vmatmul.mubr.bf16.gmra.mrb[0].mxu0 %v2893
  %v4002 = vpop.f32.mrb[0].mxu0
  %v4003 = vadd.f32 %v3874, %v4002
  %v4004 = vpop.f32.mrb[0].mxu0
  %v4005 = vpop.f32.mrb[0].mxu0
  %v4006 = vadd.f32 %v3877, %v4005
  %v4007 = vpop.f32.mrb[0].mxu0
  %4008 = vmatprep.mubr.bf16.mxu0 %v3122
  %4009 = vmatmul.mubr.bf16.gmra.mrb[0].mxu0 %v2907
  %v4010 = vpop.f32.mrb[0].mxu0
  %v4011 = vadd.f32 %v3882, %v4010
  %v4012 = vpop.f32.mrb[0].mxu0
  %v4013 = vpop.f32.mrb[0].mxu0
  %v4014 = vadd.f32 %v3885, %v4013
  %v4015 = vpop.f32.mrb[0].mxu0
  %4016 = vmatprep.mubr.bf16.mxu0 %v3125
  %4017 = vmatmul.mubr.bf16.gmra.mrb[0].mxu0 %v2921
  %v4018 = vpop.f32.mrb[0].mxu0
  %v4019 = vadd.f32 %v3890, %v4018
  %v4020 = vpop.f32.mrb[0].mxu0
  %v4021 = vpop.f32.mrb[0].mxu0
  %v4022 = vadd.f32 %v3893, %v4021
  %v4023 = vpop.f32.mrb[0].mxu0
  %4024 = vmatprep.mubr.bf16.mxu0 %v3128
  %4025 = vmatmul.mubr.bf16.gmra.mrb[0].mxu0 %v2935
  %v4026 = vpop.f32.mrb[0].mxu0
  %v4027 = vadd.f32 %v3898, %v4026
  %v4028 = vpop.f32.mrb[0].mxu0
  %v4029 = vpop.f32.mrb[0].mxu0
  %v4030 = vadd.f32 %v3901, %v4029
  %v4031 = vpop.f32.mrb[0].mxu0
  %4032 = vdwg.mxu0
  %vm4033 = vcmask 203776
  %4034 = vst.msk [vmem:[%s3] sm:$0xff] %vm4033, %v3939
  %4035 = vst.msk [vmem:[%s3 + $0x8] sm:$0xff] %vm4033, %v3942
  %4036 = vst.msk [vmem:[%s3 + $0x10] sm:$0xff] %vm4033, %v3947
  %4037 = vst.msk [vmem:[%s3 + $0x18] sm:$0xff] %vm4033, %v3950
  %4038 = vst.msk [vmem:[%s3 + $0x20] sm:$0xff] %vm4033, %v3955
  %4039 = vst.msk [vmem:[%s3 + $0x28] sm:$0xff] %vm4033, %v3958
  %4040 = vst.msk [vmem:[%s3 + $0x30] sm:$0xff] %vm4033, %v3963
  %4041 = vst.msk [vmem:[%s3 + $0x38] sm:$0xff] %vm4033, %v3966
  %4042 = vst.msk [vmem:[%s3 + $0x40] sm:$0xff] %vm4033, %v3971
  %4043 = vst.msk [vmem:[%s3 + $0x48] sm:$0xff] %vm4033, %v3974
  %4044 = vst.msk [vmem:[%s3 + $0x50] sm:$0xff] %vm4033, %v3979
  %4045 = vst.msk [vmem:[%s3 + $0x58] sm:$0xff] %vm4033, %v3982
  %4046 = vst.msk [vmem:[%s3 + $0x60] sm:$0xff] %vm4033, %v3987
  %4047 = vst.msk [vmem:[%s3 + $0x68] sm:$0xff] %vm4033, %v3990
  %4048 = vst.msk [vmem:[%s3 + $0x70] sm:$0xff] %vm4033, %v3995
  %4049 = vst.msk [vmem:[%s3 + $0x78] sm:$0xff] %vm4033, %v3998
  %4050 = vst.msk [vmem:[%s3 + $0x80] sm:$0xff] %vm4033, %v4003
  %4051 = vst.msk [vmem:[%s3 + $0x88] sm:$0xff] %vm4033, %v4006
  %4052 = vst.msk [vmem:[%s3 + $0x90] sm:$0xff] %vm4033, %v4011
  %4053 = vst.msk [vmem:[%s3 + $0x98] sm:$0xff] %vm4033, %v4014
  %4054 = vst.msk [vmem:[%s3 + $0xa0] sm:$0xff] %vm4033, %v4019
  %4055 = vst.msk [vmem:[%s3 + $0xa8] sm:$0xff] %vm4033, %v4022
  %4056 = vst.msk [vmem:[%s3 + $0xb0] sm:$0xff] %vm4033, %v4027
  %4057 = vst.msk [vmem:[%s3 + $0xb8] sm:$0xff] %vm4033, %v4030
  // Predicated region
  $region14: #{relu_conv2d.1} parent=0 // pred_check
    _
  $region15: #{relu_conv2d.1} parent=0 // pred_check_branch
    %4059 = sbr.rel (0) target = $region17
  $region16: #{relu_conv2d.1} parent=0 // pred_region
    _
  $region17: #{relu_conv2d.1} parent=0 // pred_fallthru
    _
  // Predicated region
  $region18: #{relu_conv2d.1} parent=0 // pred_check
    _
  $region19: #{relu_conv2d.1} parent=0 // pred_check_branch
    %4061 = sbr.rel (0) target = $region21
  $region20: #{relu_conv2d.1} parent=0 // pred_region
    _
  $region21: #{relu_conv2d.1} parent=0 // pred_fallthru
    _

</llo_original>
